<compile_context>
chip_gen: v5e
topology: v5e:2x2
jax: 0.10.0
libtpu: 0.0.40
codegen_flags: <defaults>
</compile_context>

<pallas_src>
import functools

import jax
import jax.numpy as jnp
from jax.experimental import pallas as pl
from jax.experimental.pallas import tpu as pltpu

BF16 = jnp.bfloat16
F32 = jnp.float32
LANE = 128


def _round_up(v, m):
    return (v + m - 1) // m * m


def _m_tiling(m, cap=256):
    """Pick (Mp, TM, n_blocks): rows padded to a multiple of 16, tiles <= cap
    (keeps the f32 accumulator well under the 64-vreg file; >1 block lets the
    'parallel' grid axis shard across v7x's two TensorCores)."""
    m16 = _round_up(max(m, 1), 16)
    if m16 <= cap:
        return m16, m16, 1
    n = -(-m16 // cap)
    tm = _round_up(-(-m16 // n), 16)
    return tm * n, tm, n


# --------------------------------------------------------------------------
# Pallas kernel 1: tiled, lane-dense matmul + bias + activation
# (hot path of every conv / conv-transpose layer).
# Operands bf16, accumulate f32, epilogue in f32, store in out dtype.
# --------------------------------------------------------------------------
def _mm_bias_act_kernel(x_ref, w_ref, b_ref, o_ref, *, activation):
    acc = jnp.dot(x_ref[...], w_ref[...], preferred_element_type=jnp.float32)
    acc = acc + b_ref[...]                       # (1, Np) broadcasts over rows
    if activation == "relu":
        acc = jnp.maximum(acc, 0.0)
    elif activation == "sigmoid":
        acc = jax.nn.sigmoid(acc)
    o_ref[...] = acc.astype(o_ref.dtype)


def matmul_bias_act(x2d, wpad, brow, activation="none", out_dtype=BF16):
    """x2d:(M, Kp) bf16 (K already lane-padded by the caller) @ wpad:(Kp, Np)
    + brow:(1, Np), fused activation. Returns (M, Np) in out_dtype."""
    M, Kp = x2d.shape
    Kp2, Np = wpad.shape
    assert Kp == Kp2 and Kp % LANE == 0 and Np % LANE == 0
    Mp, TM, n_blocks = _m_tiling(M)
    if Mp != M:
        x2d = jnp.pad(x2d, ((0, Mp - M), (0, 0)))

    cost = pl.CostEstimate(
        flops=2 * Mp * Kp * Np,
        transcendentals=Mp * Np if activation == "sigmoid" else 0,
        bytes_accessed=(Mp * Kp * x2d.dtype.itemsize + Kp * Np * 2 + Np * 4
                        + Mp * Np * jnp.dtype(out_dtype).itemsize),
    )
    out = pl.pallas_call(
        functools.partial(_mm_bias_act_kernel, activation=activation),
        out_shape=jax.ShapeDtypeStruct((Mp, Np), out_dtype),
        grid=(n_blocks,),
        in_specs=[
            pl.BlockSpec((TM, Kp), lambda i: (i, 0)),
            pl.BlockSpec((Kp, Np), lambda i: (0, 0)),
            pl.BlockSpec((1, Np), lambda i: (0, 0)),
        ],
        out_specs=pl.BlockSpec((TM, Np), lambda i: (i, 0)),
        compiler_params=pltpu.CompilerParams(dimension_semantics=("parallel",)),
        cost_estimate=cost,
    )(x2d, wpad, brow)
    return out[:M]


# --------------------------------------------------------------------------
# Pallas kernel 2: fused head
#   enc4-as-matmul (+ReLU, 1x1 avg-pool == identity) -> fc1 ->
#   merged [fc_mu | fc_log_var] -> reparameterize -> fc2 ->
#   dec1-as-matmul (+ReLU)
# All feature widths are padded to 128 lanes; padded lanes carry exact zeros
# through the whole chain (zero weight rows/cols, zero eps).
# --------------------------------------------------------------------------
def _head_kernel(h_ref, we4_ref, be4_ref, w1_ref, b1_ref, wml_ref, bml_ref,
                 eps_ref, w2_ref, b2_ref, wd1_ref, bd1_ref, mulv_ref, d1_ref):
    f32, bf16 = jnp.float32, jnp.bfloat16
    # enc4 (4x4 / stride 2 / pad 0 conv on a 4x4 map == matmul) + ReLU.
    x4 = jnp.dot(h_ref[...], we4_ref[...], preferred_element_type=f32) + be4_ref[...]
    x4 = jnp.maximum(x4, 0.0)
    hidden = jnp.dot(x4.astype(bf16), w1_ref[...], preferred_element_type=f32) + b1_ref[...]
    # fc_mu / fc_log_var merged into one 256-wide dot (mu: lanes 0..127,
    # log_var: lanes 128..255) -> a single MXU pass instead of two 128-wide ones.
    mulv = jnp.dot(hidden.astype(bf16), wml_ref[...], preferred_element_type=f32) + bml_ref[...]
    mulv_ref[...] = mulv
    mu = mulv[:, :LANE]
    lv = mulv[:, LANE:]
    # reparameterize; padded lanes: mu = 0, lv = 0 -> exp = 1, eps = 0 -> z = 0.
    z = mu + eps_ref[...] * jnp.exp(0.5 * lv)
    d = jnp.dot(z.astype(bf16), w2_ref[...], preferred_element_type=f32) + b2_ref[...]
    # dec1 = ConvTranspose2d(64, 8*init, k=4, s=1, p=0) on a 1x1 map == matmul
    # onto (kh, kw, oc) columns, fused ReLU.
    d1 = jnp.dot(d.astype(bf16), wd1_ref[...], preferred_element_type=f32) + bd1_ref[...]
    d1_ref[...] = jnp.maximum(d1, 0.0).astype(d1_ref.dtype)


def fused_head(head, h3, eps):
    """h3: (B, 16*C3) bf16 (enc3 output, NHWC-flattened); eps: (B, latent)."""
    KHd, KWd, OCd, latent = head["meta"]
    B = h3.shape[0]
    Bp = _round_up(max(B, 1), 8)
    K4p = head["we4"].shape[0]
    assert h3.shape[1] <= K4p
    h = jnp.pad(h3, ((0, Bp - B), (0, K4p - h3.shape[1])))
    eps_p = jnp.pad(eps.astype(F32), ((0, Bp - B), (0, LANE - latent)))

    vmem = pl.BlockSpec(memory_space=pltpu.MemorySpace.VMEM)
    mulv, d1 = pl.pallas_call(
        _head_kernel,
        out_shape=(jax.ShapeDtypeStruct((Bp, 2 * LANE), F32),
                   jax.ShapeDtypeStruct((Bp, head["wd1"].shape[1]), BF16)),
        in_specs=[vmem] * 12,
        out_specs=(vmem, vmem),
    )(h, head["we4"], head["be4"], head["w1"], head["b1"], head["wml"],
      head["bml"], eps_p, head["w2"], head["b2"], head["wd1"], head["bd1"])

    mu = mulv[:B, :latent]
    log_var = mulv[:B, LANE:LANE + latent]
    d1 = d1[:B, :KHd * KWd * OCd].reshape(B, KHd, KWd, OCd)       # NHWC
    return mu, log_var, d1


# --------------------------------------------------------------------------
# Conv2d (NHWC) = im2col (bf16, K-pad folded into the concat) + Pallas matmul.
# --------------------------------------------------------------------------
def conv2d_layer(x, layer, activation="relu"):
    KH, KW, IC, OC, stride, padding = layer["meta"]
    N, H, W, C = x.shape
    assert C == IC
    OH = (H + 2 * padding - KH) // stride + 1
    OW = (W + 2 * padding - KW) // stride + 1
    xp = x if padding == 0 else jnp.pad(
        x, ((0, 0), (padding, padding), (padding, padding), (0, 0)))
    cols = [xp[:, kh:kh + stride * OH:stride, kw:kw + stride * OW:stride, :]
            for kh in range(KH) for kw in range(KW)]
    K = KH * KW * IC
    Kp = layer["w"].shape[0]
    if Kp > K:
        cols.append(jnp.zeros((N, OH, OW, Kp - K), x.dtype))
    patches = jnp.concatenate(cols, axis=-1).reshape(N * OH * OW, Kp)
    out = matmul_bias_act(patches, layer["w"], layer["b"], activation, BF16)
    return out[:, :OC].reshape(N, OH, OW, OC)


# --------------------------------------------------------------------------
# ConvTranspose2d (NHWC), kernel=4, stride=2, padding=1, via 4-phase
# decomposition: each output parity (oh%2, ow%2) only uses a 2x2 subset of the
# 4x4 kernel, so ONE lane-dense matmul with K = 4*C (no structural zeros)
# produces all four phases; interleave afterwards (layout glue).
# --------------------------------------------------------------------------
def conv_transpose2d_layer(x, layer, activation, out_dtype):
    IC, OC = layer["meta"]
    N, H, W, C = x.shape
    assert C == IC
    xp = jnp.pad(x, ((0, 0), (1, 1), (1, 1), (0, 0)))              # (N, H+2, W+2, C)
    cols = [xp[:, dh:dh + H + 1, dw:dw + W + 1, :] for dh in (0, 1) for dw in (0, 1)]
    K = 4 * IC
    Kp = layer["w"].shape[0]
    if Kp > K:
        cols.append(jnp.zeros((N, H + 1, W + 1, Kp - K), x.dtype))
    patches = jnp.concatenate(cols, axis=-1).reshape(N * (H + 1) * (W + 1), Kp)
    out = matmul_bias_act(patches, layer["w"], layer["b"], activation, out_dtype)

    big = out[:, :4 * OC].reshape(N, H + 1, W + 1, 4, OC)
    # interleave phases: out[:, 2j+ph, 2i+pw, :] = big[:, j+ph, i+pw, 2*ph+pw, :]
    rows = []
    for ph in (0, 1):
        cells = [big[:, ph:ph + H, pw:pw + W, 2 * ph + pw, :] for pw in (0, 1)]
        rows.append(jnp.stack(cells, axis=3))                      # (N, H, W, 2, OC)
    out = jnp.stack(rows, axis=2)                                  # (N, H, 2, W, 2, OC)
    return out.reshape(N, 2 * H, 2 * W, OC)


# --------------------------------------------------------------------------
# One-time weight preprocessing (hoisted out of the jitted forward).
# --------------------------------------------------------------------------
def prepare_params(p):
    prep = {}

    def conv_prep(name, stride, padding):
        w = p[name + "_w"]                                  # (OC, IC, KH, KW)
        OC, IC, KH, KW = w.shape
        K = KH * KW * IC
        Kp, Np = _round_up(K, LANE), _round_up(OC, LANE)
        wmat = jnp.transpose(w, (2, 3, 1, 0)).reshape(K, OC)   # rows = (kh, kw, ic)
        return dict(
            w=jnp.pad(wmat.astype(BF16), ((0, Kp - K), (0, Np - OC))),
            b=jnp.pad(p[name + "_b"].astype(F32).reshape(1, OC), ((0, 0), (0, Np - OC))),
            meta=(KH, KW, IC, OC, stride, padding))

    prep["enc1"] = conv_prep("enc1", 2, 1)
    prep["enc2"] = conv_prep("enc2", 2, 1)
    prep["enc3"] = conv_prep("enc3", 2, 1)

    def convT_prep(name):
        w = p[name + "_w"]                                  # (IC, OC, 4, 4)
        IC, OC, KH, KW = w.shape
        assert KH == 4 and KW == 4
        # output parity (ph, pw) uses kernel taps kh = 3 - ph - 2*dh, kw = 3 - pw - 2*dw
        wmats = []
        for ph in (0, 1):
            for pw in (0, 1):
                sub = w[:, :, (3 - ph, 1 - ph), :][:, :, :, (3 - pw, 1 - pw)]  # (IC,OC,2,2)
                wmats.append(jnp.transpose(sub, (2, 3, 0, 1)).reshape(4 * IC, OC))
        w_all = jnp.concatenate(wmats, axis=1)              # (4*IC, 4*OC), zero-free
        b_all = jnp.tile(p[name + "_b"].astype(F32), 4).reshape(1, 4 * OC)
        K, N = 4 * IC, 4 * OC
        Kp, Np = _round_up(K, LANE), _round_up(N, LANE)
        return dict(w=jnp.pad(w_all.astype(BF16), ((0, Kp - K), (0, Np - N))),
                    b=jnp.pad(b_all, ((0, 0), (0, Np - N))),
                    meta=(IC, OC))

    prep["dec2"] = convT_prep("dec2")
    prep["dec3"] = convT_prep("dec3")
    prep["dec4"] = convT_prep("dec4")

    # -------- fused head --------
    latent = p["fc_mu_w"].shape[1]
    assert latent <= LANE
    OC4, IC3, K4h, K4w = p["enc4_w"].shape
    K4 = K4h * K4w * IC3
    K4p, N4p = _round_up(K4, LANE), _round_up(OC4, LANE)
    w4 = jnp.transpose(p["enc4_w"], (2, 3, 1, 0)).reshape(K4, OC4)

    f1_in, f1_out = p["fc1_w"].shape
    F1p = _round_up(f1_out, LANE)
    f2_in, f2_out = p["fc2_w"].shape
    F2p = _round_up(f2_out, LANE)

    wmu = jnp.pad(p["fc_mu_w"].astype(BF16), ((0, F1p - f1_out), (0, LANE - latent)))
    wlv = jnp.pad(p["fc_log_var_w"].astype(BF16), ((0, F1p - f1_out), (0, LANE - latent)))
    bmu = jnp.pad(p["fc_mu_b"].astype(F32), (0, LANE - latent))
    blv = jnp.pad(p["fc_log_var_b"].astype(F32), (0, LANE - latent))

    ICd, OCd, KHd, KWd = p["dec1_w"].shape
    Nd1 = KHd * KWd * OCd
    Nd1p = _round_up(Nd1, LANE)
    wd1 = jnp.transpose(p["dec1_w"], (0, 2, 3, 1)).reshape(ICd, Nd1)  # cols = (kh,kw,oc)
    bd1 = jnp.tile(p["dec1_b"].astype(F32), KHd * KWd).reshape(1, Nd1)

    prep["head"] = dict(
        we4=jnp.pad(w4.astype(BF16), ((0, K4p - K4), (0, N4p - OC4))),
        be4=jnp.pad(p["enc4_b"].astype(F32).reshape(1, OC4), ((0, 0), (0, N4p - OC4))),
        w1=jnp.pad(p["fc1_w"].astype(BF16), ((0, N4p - f1_in), (0, F1p - f1_out))),
        b1=jnp.pad(p["fc1_b"].astype(F32).reshape(1, f1_out), ((0, 0), (0, F1p - f1_out))),
        wml=jnp.concatenate([wmu, wlv], axis=1),             # (F1p, 256): [mu | log_var]
        bml=jnp.concatenate([bmu, blv]).reshape(1, 2 * LANE),
        w2=jnp.pad(p["fc2_w"].astype(BF16), ((0, LANE - f2_in), (0, F2p - f2_out))),
        b2=jnp.pad(p["fc2_b"].astype(F32).reshape(1, f2_out), ((0, 0), (0, F2p - f2_out))),
        wd1=jnp.pad(wd1.astype(BF16), ((0, F2p - ICd), (0, Nd1p - Nd1))),
        bd1=jnp.pad(bd1, ((0, 0), (0, Nd1p - Nd1))),
        meta=(KHd, KWd, OCd, latent))
    return prep


# --------------------------------------------------------------------------
# Deterministic parameter init (PyTorch-style uniform(-1/sqrt(fan_in), ...)).
# --------------------------------------------------------------------------
def _uniform(key, shape, fan_in):
    bound = 1.0 / jnp.sqrt(float(fan_in))
    return jax.random.uniform(key, shape, jnp.float32, -bound, bound)


def init_params(key, kernel_size=4, init_channels=8, image_channels=3, latent_dim=3):
    ks = kernel_size
    p = {}
    keys = iter(jax.random.split(key, 32))

    def conv(name, ic, oc):
        fan = ic * ks * ks
        p[name + "_w"] = _uniform(next(keys), (oc, ic, ks, ks), fan)
        p[name + "_b"] = _uniform(next(keys), (oc,), fan)

    def convT(name, ic, oc):
        fan = oc * ks * ks      # PyTorch ConvTranspose2d fan-in uses weight.size(1)*k*k
        p[name + "_w"] = _uniform(next(keys), (ic, oc, ks, ks), fan)
        p[name + "_b"] = _uniform(next(keys), (oc,), fan)

    def linear(name, fin, fout):
        p[name + "_w"] = _uniform(next(keys), (fin, fout), fin)   # stored as (in, out)
        p[name + "_b"] = _uniform(next(keys), (fout,), fin)

    conv("enc1", image_channels, init_channels)
    conv("enc2", init_channels, init_channels * 2)
    conv("enc3", init_channels * 2, init_channels * 4)
    conv("enc4", init_channels * 4, 64)
    linear("fc1", 64, 128)
    linear("fc_mu", 128, latent_dim)
    linear("fc_log_var", 128, latent_dim)
    linear("fc2", latent_dim, 64)
    convT("dec1", 64, init_channels * 8)
    convT("dec2", init_channels * 8, init_channels * 4)
    convT("dec3", init_channels * 4, init_channels * 2)
    convT("dec4", init_channels * 2, image_channels)
    return p


# --------------------------------------------------------------------------
# Forward pass (mirrors VAE.forward). NHWC internally, NCHW at the API edges.
# --------------------------------------------------------------------------
def vae_forward(prep, x, eps):
    B = x.shape[0]
    h = jnp.transpose(x, (0, 2, 3, 1)).astype(BF16)            # NCHW -> NHWC once, bf16
    h = conv2d_layer(h, prep["enc1"], "relu")                  # (B, 16, 16,  C)
    h = conv2d_layer(h, prep["enc2"], "relu")                  # (B,  8,  8, 2C)
    h = conv2d_layer(h, prep["enc3"], "relu")                  # (B,  4,  4, 4C)
    # TODO(synk): non-32x32 inputs would need a generic enc4 conv + adaptive
    # average pool path; for 32x32 images enc4 is exactly one matmul and the
    # 1x1 pool is the identity, both folded into the fused head below.
    assert h.shape[1] == 4 and h.shape[2] == 4, "fused head assumes 32x32 inputs"
    h3 = h.reshape(B, h.shape[1] * h.shape[2] * h.shape[3])
    mu, log_var, d = fused_head(prep["head"], h3, eps)          # d: (B, 4, 4, 8C) bf16
    d = conv_transpose2d_layer(d, prep["dec2"], "relu", BF16)   # (B,  8,  8, 4C)
    d = conv_transpose2d_layer(d, prep["dec3"], "relu", BF16)   # (B, 16, 16, 2C)
    d = conv_transpose2d_layer(d, prep["dec4"], "sigmoid", F32) # (B, 32, 32, img_c)
    reconstruction = jnp.transpose(d, (0, 3, 1, 2))             # NHWC -> NCHW once
    return reconstruction, mu, log_var


if __name__ == "__main__":
    key = jax.random.PRNGKey(0)
    k_x, k_p, k_eps = jax.random.split(key, 3)

    batch, image_channels, latent_dim = 2, 3, 3
    # 32x32 images: 32 -> 16 -> 8 -> 4 -> 1 through the encoder convs.
    x = jax.random.normal(k_x, (batch, image_channels, 32, 32), jnp.float32)
    params = init_params(k_p, kernel_size=4, init_channels=8,
                         image_channels=image_channels, latent_dim=latent_dim)
    # eps supplied as an input for determinism (torch.randn_like in the spec).
    eps = jax.random.normal(k_eps, (batch, latent_dim), jnp.float32)

    # One-time weight preprocessing, hoisted out of the per-call forward; the
    # prepared tensors are closed over by the jitted forward as constants.
    prep = prepare_params(params)
    fwd = jax.jit(functools.partial(vae_forward, prep))

    recon, mu, log_var = fwd(x, eps)
    jax.block_until_ready((recon, mu, log_var))

    assert recon.shape == (batch, image_channels, 32, 32), recon.shape
    assert mu.shape == (batch, latent_dim) and log_var.shape == (batch, latent_dim)
    assert bool(jnp.all(jnp.isfinite(recon)))
    assert bool(jnp.all((recon >= 0.0) & (recon <= 1.0)))   # sigmoid output
    print("KERNEL_OK")
</pallas_src>

<mosaic_0001>
module attributes {stable_mosaic.version = 11 : i64} {
  func.func @_mm_bias_act_kernel(%arg0: i32, %arg1: memref<256x128xbf16, #tpu.memory_space<vmem>>, %arg2: memref<128x128xbf16, #tpu.memory_space<vmem>>, %arg3: memref<1x128xf32, #tpu.memory_space<vmem>>, %arg4: memref<256x128xbf16, #tpu.memory_space<vmem>>) attributes {dimension_semantics = [#tpu.dimension_semantics<parallel>], iteration_bounds = array<i64: 2>, scalar_prefetch = 0 : i64, scratch_operands = 0 : i64, tpu.core_type = #tpu.core_type<tc>, window_params = [{transform_indices = @transform_0, window_bounds = array<i64: 256, 128>}, {pipeline_mode = #tpu.pipeline_mode<synchronous>, transform_indices = @transform_1, window_bounds = array<i64: 128, 128>}, {pipeline_mode = #tpu.pipeline_mode<synchronous>, transform_indices = @transform_2, window_bounds = array<i64: 1, 128>}, {transform_indices = @transform_3, window_bounds = array<i64: 256, 128>}]} {
    %c0 = arith.constant 0 : index
    %c0_0 = arith.constant 0 : index
    %0 = vector.load %arg1[%c0, %c0_0] : memref<256x128xbf16, #tpu.memory_space<vmem>>, vector<256x128xbf16>
    %c0_1 = arith.constant 0 : index
    %c0_2 = arith.constant 0 : index
    %1 = vector.load %arg2[%c0_1, %c0_2] : memref<128x128xbf16, #tpu.memory_space<vmem>>, vector<128x128xbf16>
    %cst = arith.constant dense<0.000000e+00> : vector<256x128xf32>
    %2 = tpu.matmul %0, %1, %cst {dimension_numbers = #tpu.dot_dimension_numbers<[1], [0], [0], [1], [0, 0, 1, 1], [], []>} : vector<256x128xbf16>, vector<128x128xbf16>, vector<256x128xf32> -> vector<256x128xf32>
    %c0_3 = arith.constant 0 : index
    %c0_4 = arith.constant 0 : index
    %3 = vector.load %arg3[%c0_3, %c0_4] : memref<1x128xf32, #tpu.memory_space<vmem>>, vector<1x128xf32>
    %4 = vector.broadcast %3 : vector<1x128xf32> to vector<256x128xf32>
    %5 = arith.addf %2, %4 : vector<256x128xf32>
    %cst_5 = arith.constant 0.000000e+00 : f32
    %6 = vector.broadcast %cst_5 : f32 to vector<256x128xf32>
    %7 = arith.maximumf %5, %6 : vector<256x128xf32>
    %8 = arith.truncf %7 : vector<256x128xf32> to vector<256x128xbf16>
    %c0_6 = arith.constant 0 : index
    %c0_7 = arith.constant 0 : index
    %9 = vector.load %arg4[%c0_6, %c0_7] : memref<256x128xbf16, #tpu.memory_space<vmem>>, vector<256x128xbf16>
    tpu.vector_store %arg4[%c0_6, %c0_7], %8 {strides = array<i32>} : memref<256x128xbf16, #tpu.memory_space<vmem>>, vector<256x128xbf16>,
    return
  }
  func.func @transform_0(%arg0: i32) -> (i32, i32) {
    %c0_i32 = arith.constant 0 : i32
    %c0_i32_0 = arith.constant 0 : i32
    return %arg0, %c0_i32 : i32, i32
  }
  func.func @transform_1(%arg0: i32) -> (i32, i32) {
    %c0_i32 = arith.constant 0 : i32
    %c0_i32_0 = arith.constant 0 : i32
    %c0_i32_1 = arith.constant 0 : i32
    return %c0_i32, %c0_i32_0 : i32, i32
  }
  func.func @transform_2(%arg0: i32) -> (i32, i32) {
    %c0_i32 = arith.constant 0 : i32
    %c0_i32_0 = arith.constant 0 : i32
    %c0_i32_1 = arith.constant 0 : i32
    return %c0_i32, %c0_i32_0 : i32, i32
  }
  func.func @transform_3(%arg0: i32) -> (i32, i32) {
    %c0_i32 = arith.constant 0 : i32
    %c0_i32_0 = arith.constant 0 : i32
    return %arg0, %c0_i32 : i32, i32
  }
}

module attributes {stable_mosaic.version = 11 : i64} {
  func.func @_mm_bias_act_kernel(%arg0: i32, %arg1: memref<128x128xbf16, #tpu.memory_space<vmem>>, %arg2: memref<128x128xbf16, #tpu.memory_space<vmem>>, %arg3: memref<1x128xf32, #tpu.memory_space<vmem>>, %arg4: memref<128x128xbf16, #tpu.memory_space<vmem>>) attributes {dimension_semantics = [#tpu.dimension_semantics<parallel>], iteration_bounds = array<i64: 1>, scalar_prefetch = 0 : i64, scratch_operands = 0 : i64, tpu.core_type = #tpu.core_type<tc>, window_params = [{transform_indices = @transform_0, window_bounds = array<i64: 128, 128>}, {pipeline_mode = #tpu.pipeline_mode<synchronous>, transform_indices = @transform_1, window_bounds = array<i64: 128, 128>}, {pipeline_mode = #tpu.pipeline_mode<synchronous>, transform_indices = @transform_2, window_bounds = array<i64: 1, 128>}, {transform_indices = @transform_3, window_bounds = array<i64: 128, 128>}]} {
    %c0 = arith.constant 0 : index
    %c0_0 = arith.constant 0 : index
    %0 = vector.load %arg1[%c0, %c0_0] : memref<128x128xbf16, #tpu.memory_space<vmem>>, vector<128x128xbf16>
    %c0_1 = arith.constant 0 : index
    %c0_2 = arith.constant 0 : index
    %1 = vector.load %arg2[%c0_1, %c0_2] : memref<128x128xbf16, #tpu.memory_space<vmem>>, vector<128x128xbf16>
    %cst = arith.constant dense<0.000000e+00> : vector<128x128xf32>
    %2 = tpu.matmul %0, %1, %cst {dimension_numbers = #tpu.dot_dimension_numbers<[1], [0], [0], [1], [0, 0, 1, 1], [], []>} : vector<128x128xbf16>, vector<128x128xbf16>, vector<128x128xf32> -> vector<128x128xf32>
    %c0_3 = arith.constant 0 : index
    %c0_4 = arith.constant 0 : index
    %3 = vector.load %arg3[%c0_3, %c0_4] : memref<1x128xf32, #tpu.memory_space<vmem>>, vector<1x128xf32>
    %4 = vector.broadcast %3 : vector<1x128xf32> to vector<128x128xf32>
    %5 = arith.addf %2, %4 : vector<128x128xf32>
    %cst_5 = arith.constant 0.000000e+00 : f32
    %6 = vector.broadcast %cst_5 : f32 to vector<128x128xf32>
    %7 = arith.maximumf %5, %6 : vector<128x128xf32>
    %8 = arith.truncf %7 : vector<128x128xf32> to vector<128x128xbf16>
    %c0_6 = arith.constant 0 : index
    %c0_7 = arith.constant 0 : index
    %9 = vector.load %arg4[%c0_6, %c0_7] : memref<128x128xbf16, #tpu.memory_space<vmem>>, vector<128x128xbf16>
    tpu.vector_store %arg4[%c0_6, %c0_7], %8 {strides = array<i32>} : memref<128x128xbf16, #tpu.memory_space<vmem>>, vector<128x128xbf16>,
    return
  }
  func.func @transform_0(%arg0: i32) -> (i32, i32) {
    %c0_i32 = arith.constant 0 : i32
    %c0_i32_0 = arith.constant 0 : i32
    return %arg0, %c0_i32 : i32, i32
  }
  func.func @transform_1(%arg0: i32) -> (i32, i32) {
    %c0_i32 = arith.constant 0 : i32
    %c0_i32_0 = arith.constant 0 : i32
    %c0_i32_1 = arith.constant 0 : i32
    return %c0_i32, %c0_i32_0 : i32, i32
  }
  func.func @transform_2(%arg0: i32) -> (i32, i32) {
    %c0_i32 = arith.constant 0 : i32
    %c0_i32_0 = arith.constant 0 : i32
    %c0_i32_1 = arith.constant 0 : i32
    return %c0_i32, %c0_i32_0 : i32, i32
  }
  func.func @transform_3(%arg0: i32) -> (i32, i32) {
    %c0_i32 = arith.constant 0 : i32
    %c0_i32_0 = arith.constant 0 : i32
    return %arg0, %c0_i32 : i32, i32
  }
}

module attributes {stable_mosaic.version = 11 : i64} {
  func.func @_head_kernel(%arg0: memref<8x512xbf16, #tpu.memory_space<vmem>>, %arg1: memref<512x128xbf16, #tpu.memory_space<vmem>>, %arg2: memref<1x128xf32, #tpu.memory_space<vmem>>, %arg3: memref<128x128xbf16, #tpu.memory_space<vmem>>, %arg4: memref<1x128xf32, #tpu.memory_space<vmem>>, %arg5: memref<128x256xbf16, #tpu.memory_space<vmem>>, %arg6: memref<1x256xf32, #tpu.memory_space<vmem>>, %arg7: memref<8x128xf32, #tpu.memory_space<vmem>>, %arg8: memref<128x128xbf16, #tpu.memory_space<vmem>>, %arg9: memref<1x128xf32, #tpu.memory_space<vmem>>, %arg10: memref<128x1024xbf16, #tpu.memory_space<vmem>>, %arg11: memref<1x1024xf32, #tpu.memory_space<vmem>>, %arg12: memref<8x256xf32, #tpu.memory_space<vmem>>, %arg13: memref<8x1024xbf16, #tpu.memory_space<vmem>>) attributes {dimension_semantics = [], scalar_prefetch = 0 : i64, scratch_operands = 0 : i64, tpu.core_type = #tpu.core_type<tc>} {
    %c0 = arith.constant 0 : index
    %c0_0 = arith.constant 0 : index
    %0 = vector.load %arg0[%c0, %c0_0] : memref<8x512xbf16, #tpu.memory_space<vmem>>, vector<8x512xbf16>
    %c0_1 = arith.constant 0 : index
    %c0_2 = arith.constant 0 : index
    %1 = vector.load %arg1[%c0_1, %c0_2] : memref<512x128xbf16, #tpu.memory_space<vmem>>, vector<512x128xbf16>
    %cst = arith.constant dense<0.000000e+00> : vector<8x128xf32>
    %2 = tpu.matmul %0, %1, %cst {dimension_numbers = #tpu.dot_dimension_numbers<[1], [0], [0], [1], [0, 0, 1, 1], [], []>} : vector<8x512xbf16>, vector<512x128xbf16>, vector<8x128xf32> -> vector<8x128xf32>
    %c0_3 = arith.constant 0 : index
    %c0_4 = arith.constant 0 : index
    %3 = vector.load %arg2[%c0_3, %c0_4] : memref<1x128xf32, #tpu.memory_space<vmem>>, vector<1x128xf32>
    %4 = vector.broadcast %3 : vector<1x128xf32> to vector<8x128xf32>
    %5 = arith.addf %2, %4 : vector<8x128xf32>
    %cst_5 = arith.constant 0.000000e+00 : f32
    %6 = vector.broadcast %cst_5 : f32 to vector<8x128xf32>
    %7 = arith.maximumf %5, %6 : vector<8x128xf32>
    %8 = arith.truncf %7 : vector<8x128xf32> to vector<8x128xbf16>
    %c0_6 = arith.constant 0 : index
    %c0_7 = arith.constant 0 : index
    %9 = vector.load %arg3[%c0_6, %c0_7] : memref<128x128xbf16, #tpu.memory_space<vmem>>, vector<128x128xbf16>
    %cst_8 = arith.constant dense<0.000000e+00> : vector<8x128xf32>
    %10 = tpu.matmul %8, %9, %cst_8 {dimension_numbers = #tpu.dot_dimension_numbers<[1], [0], [0], [1], [0, 0, 1, 1], [], []>} : vector<8x128xbf16>, vector<128x128xbf16>, vector<8x128xf32> -> vector<8x128xf32>
    %c0_9 = arith.constant 0 : index
    %c0_10 = arith.constant 0 : index
    %11 = vector.load %arg4[%c0_9, %c0_10] : memref<1x128xf32, #tpu.memory_space<vmem>>, vector<1x128xf32>
    %12 = vector.broadcast %11 : vector<1x128xf32> to vector<8x128xf32>
    %13 = arith.addf %10, %12 : vector<8x128xf32>
    %14 = arith.truncf %13 : vector<8x128xf32> to vector<8x128xbf16>
    %c0_11 = arith.constant 0 : index
    %c0_12 = arith.constant 0 : index
    %15 = vector.load %arg5[%c0_11, %c0_12] : memref<128x256xbf16, #tpu.memory_space<vmem>>, vector<128x256xbf16>
    %cst_13 = arith.constant dense<0.000000e+00> : vector<8x256xf32>
    %16 = tpu.matmul %14, %15, %cst_13 {dimension_numbers = #tpu.dot_dimension_numbers<[1], [0], [0], [1], [0, 0, 1, 1], [], []>} : vector<8x128xbf16>, vector<128x256xbf16>, vector<8x256xf32> -> vector<8x256xf32>
    %c0_14 = arith.constant 0 : index
    %c0_15 = arith.constant 0 : index
    %17 = vector.load %arg6[%c0_14, %c0_15] : memref<1x256xf32, #tpu.memory_space<vmem>>, vector<1x256xf32>
    %18 = vector.broadcast %17 : vector<1x256xf32> to vector<8x256xf32>
    %19 = arith.addf %16, %18 : vector<8x256xf32>
    %c0_16 = arith.constant 0 : index
    %c0_17 = arith.constant 0 : index
    %20 = vector.load %arg12[%c0_16, %c0_17] : memref<8x256xf32, #tpu.memory_space<vmem>>, vector<8x256xf32>
    tpu.vector_store %arg12[%c0_16, %c0_17], %19 {strides = array<i32>} : memref<8x256xf32, #tpu.memory_space<vmem>>, vector<8x256xf32>,
    %21 = vector.extract_strided_slice %19 {offsets = [0, 0], sizes = [8, 128], strides = [1, 1]} : vector<8x256xf32> to vector<8x128xf32>
    %22 = vector.extract_strided_slice %19 {offsets = [0, 128], sizes = [8, 128], strides = [1, 1]} : vector<8x256xf32> to vector<8x128xf32>
    %c0_18 = arith.constant 0 : index
    %c0_19 = arith.constant 0 : index
    %23 = vector.load %arg7[%c0_18, %c0_19] : memref<8x128xf32, #tpu.memory_space<vmem>>, vector<8x128xf32>
    %cst_20 = arith.constant 5.000000e-01 : f32
    %24 = vector.broadcast %cst_20 : f32 to vector<8x128xf32>
    %25 = arith.mulf %24, %22 : vector<8x128xf32>
    %26 = math.exp %25 : vector<8x128xf32>
    %27 = arith.mulf %23, %26 : vector<8x128xf32>
    %28 = arith.addf %21, %27 : vector<8x128xf32>
    %29 = arith.truncf %28 : vector<8x128xf32> to vector<8x128xbf16>
    %c0_21 = arith.constant 0 : index
    %c0_22 = arith.constant 0 : index
    %30 = vector.load %arg8[%c0_21, %c0_22] : memref<128x128xbf16, #tpu.memory_space<vmem>>, vector<128x128xbf16>
    %cst_23 = arith.constant dense<0.000000e+00> : vector<8x128xf32>
    %31 = tpu.matmul %29, %30, %cst_23 {dimension_numbers = #tpu.dot_dimension_numbers<[1], [0], [0], [1], [0, 0, 1, 1], [], []>} : vector<8x128xbf16>, vector<128x128xbf16>, vector<8x128xf32> -> vector<8x128xf32>
    %c0_24 = arith.constant 0 : index
    %c0_25 = arith.constant 0 : index
    %32 = vector.load %arg9[%c0_24, %c0_25] : memref<1x128xf32, #tpu.memory_space<vmem>>, vector<1x128xf32>
    %33 = vector.broadcast %32 : vector<1x128xf32> to vector<8x128xf32>
    %34 = arith.addf %31, %33 : vector<8x128xf32>
    %35 = arith.truncf %34 : vector<8x128xf32> to vector<8x128xbf16>
    %c0_26 = arith.constant 0 : index
    %c0_27 = arith.constant 0 : index
    %36 = vector.load %arg10[%c0_26, %c0_27] : memref<128x1024xbf16, #tpu.memory_space<vmem>>, vector<128x1024xbf16>
    %cst_28 = arith.constant dense<0.000000e+00> : vector<8x1024xf32>
    %37 = tpu.matmul %35, %36, %cst_28 {dimension_numbers = #tpu.dot_dimension_numbers<[1], [0], [0], [1], [0, 0, 1, 1], [], []>} : vector<8x128xbf16>, vector<128x1024xbf16>, vector<8x1024xf32> -> vector<8x1024xf32>
    %c0_29 = arith.constant 0 : index
    %c0_30 = arith.constant 0 : index
    %38 = vector.load %arg11[%c0_29, %c0_30] : memref<1x1024xf32, #tpu.memory_space<vmem>>, vector<1x1024xf32>
    %39 = vector.broadcast %38 : vector<1x1024xf32> to vector<8x1024xf32>
    %40 = arith.addf %37, %39 : vector<8x1024xf32>
    %cst_31 = arith.constant 0.000000e+00 : f32
    %41 = vector.broadcast %cst_31 : f32 to vector<8x1024xf32>
    %42 = arith.maximumf %40, %41 : vector<8x1024xf32>
    %43 = arith.truncf %42 : vector<8x1024xf32> to vector<8x1024xbf16>
    %c0_32 = arith.constant 0 : index
    %c0_33 = arith.constant 0 : index
    %44 = vector.load %arg13[%c0_32, %c0_33] : memref<8x1024xbf16, #tpu.memory_space<vmem>>, vector<8x1024xbf16>
    tpu.vector_store %arg13[%c0_32, %c0_33], %43 {strides = array<i32>} : memref<8x1024xbf16, #tpu.memory_space<vmem>>, vector<8x1024xbf16>,
    return
  }
}

module attributes {stable_mosaic.version = 11 : i64} {
  func.func @_mm_bias_act_kernel(%arg0: i32, %arg1: memref<32x256xbf16, #tpu.memory_space<vmem>>, %arg2: memref<256x128xbf16, #tpu.memory_space<vmem>>, %arg3: memref<1x128xf32, #tpu.memory_space<vmem>>, %arg4: memref<32x128xbf16, #tpu.memory_space<vmem>>) attributes {dimension_semantics = [#tpu.dimension_semantics<parallel>], iteration_bounds = array<i64: 1>, scalar_prefetch = 0 : i64, scratch_operands = 0 : i64, tpu.core_type = #tpu.core_type<tc>, window_params = [{transform_indices = @transform_0, window_bounds = array<i64: 32, 256>}, {pipeline_mode = #tpu.pipeline_mode<synchronous>, transform_indices = @transform_1, window_bounds = array<i64: 256, 128>}, {pipeline_mode = #tpu.pipeline_mode<synchronous>, transform_indices = @transform_2, window_bounds = array<i64: 1, 128>}, {transform_indices = @transform_3, window_bounds = array<i64: 32, 128>}]} {
    %c0 = arith.constant 0 : index
    %c0_0 = arith.constant 0 : index
    %0 = vector.load %arg1[%c0, %c0_0] : memref<32x256xbf16, #tpu.memory_space<vmem>>, vector<32x256xbf16>
    %c0_1 = arith.constant 0 : index
    %c0_2 = arith.constant 0 : index
    %1 = vector.load %arg2[%c0_1, %c0_2] : memref<256x128xbf16, #tpu.memory_space<vmem>>, vector<256x128xbf16>
    %cst = arith.constant dense<0.000000e+00> : vector<32x128xf32>
    %2 = tpu.matmul %0, %1, %cst {dimension_numbers = #tpu.dot_dimension_numbers<[1], [0], [0], [1], [0, 0, 1, 1], [], []>} : vector<32x256xbf16>, vector<256x128xbf16>, vector<32x128xf32> -> vector<32x128xf32>
    %c0_3 = arith.constant 0 : index
    %c0_4 = arith.constant 0 : index
    %3 = vector.load %arg3[%c0_3, %c0_4] : memref<1x128xf32, #tpu.memory_space<vmem>>, vector<1x128xf32>
    %4 = vector.broadcast %3 : vector<1x128xf32> to vector<32x128xf32>
    %5 = arith.addf %2, %4 : vector<32x128xf32>
    %cst_5 = arith.constant 0.000000e+00 : f32
    %6 = vector.broadcast %cst_5 : f32 to vector<32x128xf32>
    %7 = arith.maximumf %5, %6 : vector<32x128xf32>
    %8 = arith.truncf %7 : vector<32x128xf32> to vector<32x128xbf16>
    %c0_6 = arith.constant 0 : index
    %c0_7 = arith.constant 0 : index
    %9 = vector.load %arg4[%c0_6, %c0_7] : memref<32x128xbf16, #tpu.memory_space<vmem>>, vector<32x128xbf16>
    tpu.vector_store %arg4[%c0_6, %c0_7], %8 {strides = array<i32>} : memref<32x128xbf16, #tpu.memory_space<vmem>>, vector<32x128xbf16>,
    return
  }
  func.func @transform_0(%arg0: i32) -> (i32, i32) {
    %c0_i32 = arith.constant 0 : i32
    %c0_i32_0 = arith.constant 0 : i32
    return %arg0, %c0_i32 : i32, i32
  }
  func.func @transform_1(%arg0: i32) -> (i32, i32) {
    %c0_i32 = arith.constant 0 : i32
    %c0_i32_0 = arith.constant 0 : i32
    %c0_i32_1 = arith.constant 0 : i32
    return %c0_i32, %c0_i32_0 : i32, i32
  }
  func.func @transform_2(%arg0: i32) -> (i32, i32) {
    %c0_i32 = arith.constant 0 : i32
    %c0_i32_0 = arith.constant 0 : i32
    %c0_i32_1 = arith.constant 0 : i32
    return %c0_i32, %c0_i32_0 : i32, i32
  }
  func.func @transform_3(%arg0: i32) -> (i32, i32) {
    %c0_i32 = arith.constant 0 : i32
    %c0_i32_0 = arith.constant 0 : i32
    return %arg0, %c0_i32 : i32, i32
  }
}

module attributes {stable_mosaic.version = 11 : i64} {
  func.func @_mm_bias_act_kernel(%arg0: i32, %arg1: memref<64x256xbf16, #tpu.memory_space<vmem>>, %arg2: memref<256x128xbf16, #tpu.memory_space<vmem>>, %arg3: memref<1x128xf32, #tpu.memory_space<vmem>>, %arg4: memref<64x128xbf16, #tpu.memory_space<vmem>>) attributes {dimension_semantics = [#tpu.dimension_semantics<parallel>], iteration_bounds = array<i64: 1>, scalar_prefetch = 0 : i64, scratch_operands = 0 : i64, tpu.core_type = #tpu.core_type<tc>, window_params = [{transform_indices = @transform_0, window_bounds = array<i64: 64, 256>}, {pipeline_mode = #tpu.pipeline_mode<synchronous>, transform_indices = @transform_1, window_bounds = array<i64: 256, 128>}, {pipeline_mode = #tpu.pipeline_mode<synchronous>, transform_indices = @transform_2, window_bounds = array<i64: 1, 128>}, {transform_indices = @transform_3, window_bounds = array<i64: 64, 128>}]} {
    %c0 = arith.constant 0 : index
    %c0_0 = arith.constant 0 : index
    %0 = vector.load %arg1[%c0, %c0_0] : memref<64x256xbf16, #tpu.memory_space<vmem>>, vector<64x256xbf16>
    %c0_1 = arith.constant 0 : index
    %c0_2 = arith.constant 0 : index
    %1 = vector.load %arg2[%c0_1, %c0_2] : memref<256x128xbf16, #tpu.memory_space<vmem>>, vector<256x128xbf16>
    %cst = arith.constant dense<0.000000e+00> : vector<64x128xf32>
    %2 = tpu.matmul %0, %1, %cst {dimension_numbers = #tpu.dot_dimension_numbers<[1], [0], [0], [1], [0, 0, 1, 1], [], []>} : vector<64x256xbf16>, vector<256x128xbf16>, vector<64x128xf32> -> vector<64x128xf32>
    %c0_3 = arith.constant 0 : index
    %c0_4 = arith.constant 0 : index
    %3 = vector.load %arg3[%c0_3, %c0_4] : memref<1x128xf32, #tpu.memory_space<vmem>>, vector<1x128xf32>
    %4 = vector.broadcast %3 : vector<1x128xf32> to vector<64x128xf32>
    %5 = arith.addf %2, %4 : vector<64x128xf32>
    %cst_5 = arith.constant 0.000000e+00 : f32
    %6 = vector.broadcast %cst_5 : f32 to vector<64x128xf32>
    %7 = arith.maximumf %5, %6 : vector<64x128xf32>
    %8 = arith.truncf %7 : vector<64x128xf32> to vector<64x128xbf16>
    %c0_6 = arith.constant 0 : index
    %c0_7 = arith.constant 0 : index
    %9 = vector.load %arg4[%c0_6, %c0_7] : memref<64x128xbf16, #tpu.memory_space<vmem>>, vector<64x128xbf16>
    tpu.vector_store %arg4[%c0_6, %c0_7], %8 {strides = array<i32>} : memref<64x128xbf16, #tpu.memory_space<vmem>>, vector<64x128xbf16>,
    return
  }
  func.func @transform_0(%arg0: i32) -> (i32, i32) {
    %c0_i32 = arith.constant 0 : i32
    %c0_i32_0 = arith.constant 0 : i32
    return %arg0, %c0_i32 : i32, i32
  }
  func.func @transform_1(%arg0: i32) -> (i32, i32) {
    %c0_i32 = arith.constant 0 : i32
    %c0_i32_0 = arith.constant 0 : i32
    %c0_i32_1 = arith.constant 0 : i32
    return %c0_i32, %c0_i32_0 : i32, i32
  }
  func.func @transform_2(%arg0: i32) -> (i32, i32) {
    %c0_i32 = arith.constant 0 : i32
    %c0_i32_0 = arith.constant 0 : i32
    %c0_i32_1 = arith.constant 0 : i32
    return %c0_i32, %c0_i32_0 : i32, i32
  }
  func.func @transform_3(%arg0: i32) -> (i32, i32) {
    %c0_i32 = arith.constant 0 : i32
    %c0_i32_0 = arith.constant 0 : i32
    return %arg0, %c0_i32 : i32, i32
  }
}

module attributes {stable_mosaic.version = 11 : i64} {
  func.func @_mm_bias_act_kernel(%arg0: i32, %arg1: memref<176x128xbf16, #tpu.memory_space<vmem>>, %arg2: memref<128x128xbf16, #tpu.memory_space<vmem>>, %arg3: memref<1x128xf32, #tpu.memory_space<vmem>>, %arg4: memref<176x128xbf16, #tpu.memory_space<vmem>>) attributes {dimension_semantics = [#tpu.dimension_semantics<parallel>], iteration_bounds = array<i64: 1>, scalar_prefetch = 0 : i64, scratch_operands = 0 : i64, tpu.core_type = #tpu.core_type<tc>, window_params = [{transform_indices = @transform_0, window_bounds = array<i64: 176, 128>}, {pipeline_mode = #tpu.pipeline_mode<synchronous>, transform_indices = @transform_1, window_bounds = array<i64: 128, 128>}, {pipeline_mode = #tpu.pipeline_mode<synchronous>, transform_indices = @transform_2, window_bounds = array<i64: 1, 128>}, {transform_indices = @transform_3, window_bounds = array<i64: 176, 128>}]} {
    %c0 = arith.constant 0 : index
    %c0_0 = arith.constant 0 : index
    %0 = vector.load %arg1[%c0, %c0_0] : memref<176x128xbf16, #tpu.memory_space<vmem>>, vector<176x128xbf16>
    %c0_1 = arith.constant 0 : index
    %c0_2 = arith.constant 0 : index
    %1 = vector.load %arg2[%c0_1, %c0_2] : memref<128x128xbf16, #tpu.memory_space<vmem>>, vector<128x128xbf16>
    %cst = arith.constant dense<0.000000e+00> : vector<176x128xf32>
    %2 = tpu.matmul %0, %1, %cst {dimension_numbers = #tpu.dot_dimension_numbers<[1], [0], [0], [1], [0, 0, 1, 1], [], []>} : vector<176x128xbf16>, vector<128x128xbf16>, vector<176x128xf32> -> vector<176x128xf32>
    %c0_3 = arith.constant 0 : index
    %c0_4 = arith.constant 0 : index
    %3 = vector.load %arg3[%c0_3, %c0_4] : memref<1x128xf32, #tpu.memory_space<vmem>>, vector<1x128xf32>
    %4 = vector.broadcast %3 : vector<1x128xf32> to vector<176x128xf32>
    %5 = arith.addf %2, %4 : vector<176x128xf32>
    %cst_5 = arith.constant 0.000000e+00 : f32
    %6 = vector.broadcast %cst_5 : f32 to vector<176x128xf32>
    %7 = arith.maximumf %5, %6 : vector<176x128xf32>
    %8 = arith.truncf %7 : vector<176x128xf32> to vector<176x128xbf16>
    %c0_6 = arith.constant 0 : index
    %c0_7 = arith.constant 0 : index
    %9 = vector.load %arg4[%c0_6, %c0_7] : memref<176x128xbf16, #tpu.memory_space<vmem>>, vector<176x128xbf16>
    tpu.vector_store %arg4[%c0_6, %c0_7], %8 {strides = array<i32>} : memref<176x128xbf16, #tpu.memory_space<vmem>>, vector<176x128xbf16>,
    return
  }
  func.func @transform_0(%arg0: i32) -> (i32, i32) {
    %c0_i32 = arith.constant 0 : i32
    %c0_i32_0 = arith.constant 0 : i32
    return %arg0, %c0_i32 : i32, i32
  }
  func.func @transform_1(%arg0: i32) -> (i32, i32) {
    %c0_i32 = arith.constant 0 : i32
    %c0_i32_0 = arith.constant 0 : i32
    %c0_i32_1 = arith.constant 0 : i32
    return %c0_i32, %c0_i32_0 : i32, i32
  }
  func.func @transform_2(%arg0: i32) -> (i32, i32) {
    %c0_i32 = arith.constant 0 : i32
    %c0_i32_0 = arith.constant 0 : i32
    %c0_i32_1 = arith.constant 0 : i32
    return %c0_i32, %c0_i32_0 : i32, i32
  }
  func.func @transform_3(%arg0: i32) -> (i32, i32) {
    %c0_i32 = arith.constant 0 : i32
    %c0_i32_0 = arith.constant 0 : i32
    return %arg0, %c0_i32 : i32, i32
  }
}

module attributes {stable_mosaic.version = 11 : i64} {
  func.func @_mm_bias_act_kernel(%arg0: i32, %arg1: memref<208x128xbf16, #tpu.memory_space<vmem>>, %arg2: memref<128x128xbf16, #tpu.memory_space<vmem>>, %arg3: memref<1x128xf32, #tpu.memory_space<vmem>>, %arg4: memref<208x128xf32, #tpu.memory_space<vmem>>) attributes {dimension_semantics = [#tpu.dimension_semantics<parallel>], iteration_bounds = array<i64: 3>, scalar_prefetch = 0 : i64, scratch_operands = 0 : i64, tpu.core_type = #tpu.core_type<tc>, window_params = [{transform_indices = @transform_0, window_bounds = array<i64: 208, 128>}, {pipeline_mode = #tpu.pipeline_mode<synchronous>, transform_indices = @transform_1, window_bounds = array<i64: 128, 128>}, {pipeline_mode = #tpu.pipeline_mode<synchronous>, transform_indices = @transform_2, window_bounds = array<i64: 1, 128>}, {transform_indices = @transform_3, window_bounds = array<i64: 208, 128>}]} {
    %c0 = arith.constant 0 : index
    %c0_0 = arith.constant 0 : index
    %0 = vector.load %arg1[%c0, %c0_0] : memref<208x128xbf16, #tpu.memory_space<vmem>>, vector<208x128xbf16>
    %c0_1 = arith.constant 0 : index
    %c0_2 = arith.constant 0 : index
    %1 = vector.load %arg2[%c0_1, %c0_2] : memref<128x128xbf16, #tpu.memory_space<vmem>>, vector<128x128xbf16>
    %cst = arith.constant dense<0.000000e+00> : vector<208x128xf32>
    %2 = tpu.matmul %0, %1, %cst {dimension_numbers = #tpu.dot_dimension_numbers<[1], [0], [0], [1], [0, 0, 1, 1], [], []>} : vector<208x128xbf16>, vector<128x128xbf16>, vector<208x128xf32> -> vector<208x128xf32>
    %c0_3 = arith.constant 0 : index
    %c0_4 = arith.constant 0 : index
    %3 = vector.load %arg3[%c0_3, %c0_4] : memref<1x128xf32, #tpu.memory_space<vmem>>, vector<1x128xf32>
    %4 = vector.broadcast %3 : vector<1x128xf32> to vector<208x128xf32>
    %5 = arith.addf %2, %4 : vector<208x128xf32>
    %6 = arith.negf %5 : vector<208x128xf32>
    %7 = math.exp %6 : vector<208x128xf32>
    %cst_5 = arith.constant 1.000000e+00 : f32
    %8 = vector.broadcast %cst_5 : f32 to vector<208x128xf32>
    %9 = arith.addf %8, %7 : vector<208x128xf32>
    %10 = arith.divf %8, %9 : vector<208x128xf32>
    %c0_6 = arith.constant 0 : index
    %c0_7 = arith.constant 0 : index
    %11 = vector.load %arg4[%c0_6, %c0_7] : memref<208x128xf32, #tpu.memory_space<vmem>>, vector<208x128xf32>
    tpu.vector_store %arg4[%c0_6, %c0_7], %10 {strides = array<i32>} : memref<208x128xf32, #tpu.memory_space<vmem>>, vector<208x128xf32>,
    return
  }
  func.func @transform_0(%arg0: i32) -> (i32, i32) {
    %c0_i32 = arith.constant 0 : i32
    %c0_i32_0 = arith.constant 0 : i32
    return %arg0, %c0_i32 : i32, i32
  }
  func.func @transform_1(%arg0: i32) -> (i32, i32) {
    %c0_i32 = arith.constant 0 : i32
    %c0_i32_0 = arith.constant 0 : i32
    %c0_i32_1 = arith.constant 0 : i32
    return %c0_i32, %c0_i32_0 : i32, i32
  }
  func.func @transform_2(%arg0: i32) -> (i32, i32) {
    %c0_i32 = arith.constant 0 : i32
    %c0_i32_0 = arith.constant 0 : i32
    %c0_i32_1 = arith.constant 0 : i32
    return %c0_i32, %c0_i32_0 : i32, i32
  }
  func.func @transform_3(%arg0: i32) -> (i32, i32) {
    %c0_i32 = arith.constant 0 : i32
    %c0_i32_0 = arith.constant 0 : i32
    return %arg0, %c0_i32 : i32, i32
  }
}

</mosaic_0001>

<llo_original>
// kernel: vae_forward.7
$region0: #{vae_forward.7}
  #allocation0 [shape = 'u32[]', space=smem, size = 0x4, offset = 0x4, fixed_abs, tag = 'smem constant byte address 0x4 - core index']
  #allocation1 [shape = 'u32[72,128]{1,0:T(1,128)}', space=vmem, size = 0x9000, scoped, tag = 'internal scratch']
  %s0 = inlined_call_operand.vmem [shape: bf16[512,128], index: 0, kind: input, shape index: {}]
  %s1 = inlined_call_operand.vmem [shape: bf16[128,128], index: 1, kind: input, shape index: {}]
  %s2 = inlined_call_operand.vmem [shape: f32[1,128], index: 2, kind: input, shape index: {}]
  %s3 = inlined_call_operand.vmem [shape: bf16[512,128], index: 3, kind: output, shape index: {}]
  %s4 = sld [smem:[#allocation0]]
  $region45: #{vae_forward.7} parent=0
    _
  %s6 = ssub.s32 1, %s4
  %s7 = scalar_select 0, %s6, %s4
  loop: start=0, step=1, limit=4
  $region2: #{vae_forward.7} parent=0 // loop_pre_header
    _
  $region3: #{vae_forward.7} parent=0 // loop_header
    %s9 = sphi 0, %s13
    %p10 = scmp.ge.s32.totalorder %s9, 4
    %s19 = sphi 0, %s21
    %s22 = sphi 0, %s19
    %s23 = sphi 0, %s22
    %s39 = sphi 0, %s23
    %s43 = sphi 0, %s43
    %s45 = sphi 0, %s43
    %s46 = sphi 0, %s45
    %s60 = sphi 0, %s46
    %s64 = sphi 0, %s64
    %s66 = sphi 0, %s64
    %s67 = sphi 0, %s66
    %s81 = sphi 0, %s67
    %s87 = sphi 0, %s89
    %s90 = sphi 0, %s87
    %s91 = sphi 0, %s90
    %s107 = sphi 0, %s91
  $region4: #{vae_forward.7} parent=0 // loop_header_branch
    %12 = sbr.rel (%p10) target = $region8
  $region5: #{vae_forward.7} parent=0 // loop_body
    %s14 = ssub.s32 %s9, 1
    %s15 = ssub.s32 %s9, 2
    %s16 = sadd.s32 %s9, 1
    %s17 = ssub.s32 %s9, %s16
    %p18 = scmp.eq.s32.totalorder %s17, 0
    %s20 = sadd.s32 %s19, 1
    %s21 = scalar_select %p18, %s19, %s20
    %p24 = pneg %p18
    %p25 = scmp.eq.s32.totalorder %s9, 1
    %p26 = por %p24, %p25
    %p27 = scmp.ne.s32.totalorder %s19, %s22
    %p28 = scmp.eq.s32.totalorder %s9, 0
    %p29 = por %p27, %p28
    %p30 = scmp.ne.s32.totalorder %s19, %s22
    %p31 = scmp.eq.s32.totalorder %s14, 1
    %p32 = por %p30, %p31
    %p33 = scmp.ne.s32.totalorder %s22, %s23
    %p34 = scmp.eq.s32.totalorder %s14, 0
    %p35 = por %p33, %p34
    %p36 = scmp.ne.s32.totalorder %s22, %s23
    %p37 = scmp.eq.s32.totalorder %s15, 1
    %p38 = por %p36, %p37
    %p40 = scmp.ne.s32.totalorder %s23, %s39
    %p41 = scmp.eq.s32.totalorder %s15, 0
    %p42 = por %p40, %p41
    %s44 = sadd.s32 %s43, 1
    %p47 = scmp.eq.s32.totalorder %s9, 1
    %p48 = scmp.ne.s32.totalorder %s43, %s45
    %p49 = scmp.eq.s32.totalorder %s9, 0
    %p50 = por %p48, %p49
    %p51 = scmp.ne.s32.totalorder %s43, %s45
    %p52 = scmp.eq.s32.totalorder %s14, 1
    %p53 = por %p51, %p52
    %p54 = scmp.ne.s32.totalorder %s45, %s46
    %p55 = scmp.eq.s32.totalorder %s14, 0
    %p56 = por %p54, %p55
    %p57 = scmp.ne.s32.totalorder %s45, %s46
    %p58 = scmp.eq.s32.totalorder %s15, 1
    %p59 = por %p57, %p58
    %p61 = scmp.ne.s32.totalorder %s46, %s60
    %p62 = scmp.eq.s32.totalorder %s15, 0
    %p63 = por %p61, %p62
    %s65 = sadd.s32 %s64, 1
    %p68 = scmp.eq.s32.totalorder %s9, 1
    %p69 = scmp.ne.s32.totalorder %s64, %s66
    %p70 = scmp.eq.s32.totalorder %s9, 0
    %p71 = por %p69, %p70
    %p72 = scmp.ne.s32.totalorder %s64, %s66
    %p73 = scmp.eq.s32.totalorder %s14, 1
    %p74 = por %p72, %p73
    %p75 = scmp.ne.s32.totalorder %s66, %s67
    %p76 = scmp.eq.s32.totalorder %s14, 0
    %p77 = por %p75, %p76
    %p78 = scmp.ne.s32.totalorder %s66, %s67
    %p79 = scmp.eq.s32.totalorder %s15, 1
    %p80 = por %p78, %p79
    %p82 = scmp.ne.s32.totalorder %s67, %s81
    %p83 = scmp.eq.s32.totalorder %s15, 0
    %p84 = por %p82, %p83
    %s85 = ssub.s32 %s9, %s16
    %p86 = scmp.eq.s32.totalorder %s85, 0
    %s88 = sadd.s32 %s87, 1
    %s89 = scalar_select %p86, %s87, %s88
    %p92 = pneg %p86
    %p93 = scmp.eq.s32.totalorder %s9, 1
    %p94 = por %p92, %p93
    %p95 = scmp.ne.s32.totalorder %s87, %s90
    %p96 = scmp.eq.s32.totalorder %s9, 0
    %p97 = por %p95, %p96
    %p98 = scmp.ne.s32.totalorder %s87, %s90
    %p99 = scmp.eq.s32.totalorder %s14, 1
    %p100 = por %p98, %p99
    %p101 = scmp.ne.s32.totalorder %s90, %s91
    %p102 = scmp.eq.s32.totalorder %s14, 0
    %p103 = por %p101, %p102
    %p104 = scmp.ne.s32.totalorder %s90, %s91
    %p105 = scmp.eq.s32.totalorder %s15, 1
    %p106 = por %p104, %p105
    %p108 = scmp.ne.s32.totalorder %s91, %s107
    %p109 = scmp.eq.s32.totalorder %s15, 0
    %p110 = por %p108, %p109
    %p111 = scmp.le.s32.totalorder 1, %s9
    %p112 = scmp.lt.s32.totalorder %s9, 3
    %p113 = pnand %p111, %p112
    %p114 = pneg %p113
    // Predicated region
    $region9: #{vae_forward.7} parent=5 // pred_check
      _
    $region10: #{vae_forward.7} parent=5 // pred_check_branch
      %116 = sbr.rel (%p113) target = $region12
    $region11: #{vae_forward.7} parent=5 // pred_region
      %s117 = ssub.s32 %s9, 1
      // Predicated region
      $region13: #{vae_forward.7} parent=11 // pred_check
        %p118 = pneg %p56
      $region14: #{vae_forward.7} parent=11 // pred_check_branch
        %120 = sbr.rel (%p118) target = $region16
      $region15: #{vae_forward.7} parent=11 // pred_region
        _
      $region16: #{vae_forward.7} parent=11 // pred_fallthru
        _
      // Predicated region
      $region17: #{vae_forward.7} parent=11 // pred_check
        %p121 = pneg %p77
      $region18: #{vae_forward.7} parent=11 // pred_check_branch
        %123 = sbr.rel (%p121) target = $region20
      $region19: #{vae_forward.7} parent=11 // pred_region
        _
      $region20: #{vae_forward.7} parent=11 // pred_fallthru
        _
    $region12: #{vae_forward.7} parent=5 // pred_fallthru
      _
    %p124 = scmp.lt.s32.totalorder %s9, 2
    // Predicated region
    $region21: #{vae_forward.7} parent=5 // pred_check
      %p125 = pneg %p124
    $region22: #{vae_forward.7} parent=5 // pred_check_branch
      %127 = sbr.rel (%p125) target = $region24
    $region23: #{vae_forward.7} parent=5 // pred_region
      // Predicated region
      $region25: #{vae_forward.7} parent=23 // pred_check
        %p128 = pneg %p29
      $region26: #{vae_forward.7} parent=23 // pred_check_branch
        %130 = sbr.rel (%p128) target = $region28
      $region27: #{vae_forward.7} parent=23 // pred_region
        %s131 = smul.u32 32, %s9
        %p132 = scmp.lt.s32.totalorder %s131, 63
        %s133 = scalar_select %p132, %s131, 63
        %s134 = smul.addr %s133, 4
        %s135 = scalar_lea.vmem %s0, %s134
        %s136 = smul.u32 32, %s9
      $region28: #{vae_forward.7} parent=23 // pred_fallthru
        _
    $region24: #{vae_forward.7} parent=5 // pred_fallthru
      _
    %p137 = scmp.le.s32.totalorder 1, %s9
    %p138 = scmp.lt.s32.totalorder %s9, 3
    %p139 = pnand %p137, %p138
    %p140 = pneg %p139
    // Predicated region
    $region29: #{vae_forward.7} parent=5 // pred_check
      _
    $region30: #{vae_forward.7} parent=5 // pred_check_branch
      %142 = sbr.rel (%p139) target = $region32
    $region31: #{vae_forward.7} parent=5 // pred_region
      %s143 = ssub.s32 %s9, 1
      %s144 = smul.u32 32, %s14
      %p145 = scmp.lt.s32.totalorder %s144, 63
      %s146 = scalar_select %p145, %s144, 63
      %s147 = smul.addr %s146, 4
      %s148 = scalar_lea.vmem %s0, %s147
      %p149 = pneg %p35
      %p150 = pneg %p32
      %p151 = pneg %p56
      %p152 = pneg %p53
      %p153 = pneg %p77
      %p154 = pneg %p74
      %p155 = pneg %p103
      %p156 = pneg %p100
      %s157 = smul.u32 32, %s14
      %p158 = scmp.lt.s32.totalorder %s157, 63
      %s159 = scalar_select %p158, %s157, 63
      %s160 = smul.addr %s159, 4
      %s161 = scalar_lea.vmem %s3, %s160
      %s162 = smul.u32 32, %s14
      %p163 = scmp.lt.s32.totalorder %s162, 63
      %s164 = scalar_select %p163, %s162, 63
      %s165 = smul.addr %s164, 4
      %s166 = scalar_lea.vmem %s0, %s165
      %s167 = smul.u32 32, %s14
      %s168 = smul.u32 32, %s14
      %p169 = scmp.lt.s32.totalorder %s168, 63
      %s170 = scalar_select %p169, %s168, 63
      %s171 = smul.addr %s170, 4
      %s172 = scalar_lea.vmem %s3, %s171
      %s173 = smul.u32 32, %s14
      %v174 = vld [vmem:[%s166] sm:$0xf]
      %v175 = vld [vmem:[%s166 + $0x4] sm:$0xf]
      %v176 = vld [vmem:[%s166 + $0x8] sm:$0xf]
      %v177 = vld [vmem:[%s166 + $0xc] sm:$0xf]
      %v178 = vld [vmem:[%s166 + $0x10] sm:$0xf]
      %v179 = vld [vmem:[%s166 + $0x14] sm:$0xf]
      %v180 = vld [vmem:[%s166 + $0x18] sm:$0xf]
      %v181 = vld [vmem:[%s166 + $0x1c] sm:$0xf]
      %v182 = vld [vmem:[%s166 + $0x20] sm:$0xf]
      %v183 = vld [vmem:[%s166 + $0x24] sm:$0xf]
      %v184 = vld [vmem:[%s166 + $0x28] sm:$0xf]
      %v185 = vld [vmem:[%s166 + $0x2c] sm:$0xf]
      %v186 = vld [vmem:[%s166 + $0x30] sm:$0xf]
      %v187 = vld [vmem:[%s166 + $0x34] sm:$0xf]
      %v188 = vld [vmem:[%s166 + $0x38] sm:$0xf]
      %v189 = vld [vmem:[%s166 + $0x3c] sm:$0xf]
      %v190 = vld [vmem:[%s166 + $0x40] sm:$0xf]
      %v191 = vld [vmem:[%s166 + $0x44] sm:$0xf]
      %v192 = vld [vmem:[%s166 + $0x48] sm:$0xf]
      %v193 = vld [vmem:[%s166 + $0x4c] sm:$0xf]
      %v194 = vld [vmem:[%s166 + $0x50] sm:$0xf]
      %v195 = vld [vmem:[%s166 + $0x54] sm:$0xf]
      %v196 = vld [vmem:[%s166 + $0x58] sm:$0xf]
      %v197 = vld [vmem:[%s166 + $0x5c] sm:$0xf]
      %v198 = vld [vmem:[%s166 + $0x60] sm:$0xf]
      %v199 = vld [vmem:[%s166 + $0x64] sm:$0xf]
      %v200 = vld [vmem:[%s166 + $0x68] sm:$0xf]
      %v201 = vld [vmem:[%s166 + $0x6c] sm:$0xf]
      %v202 = vld [vmem:[%s166 + $0x70] sm:$0xf]
      %v203 = vld [vmem:[%s166 + $0x74] sm:$0xf]
      %v204 = vld [vmem:[%s166 + $0x78] sm:$0xf]
      %v205 = vld [vmem:[%s166 + $0x7c] sm:$0xf]
      %v206 = vld [vmem:[%s1] sm:$0xf]
      %v207 = vld [vmem:[%s1 + $0x4] sm:$0xf]
      %v208 = vld [vmem:[%s1 + $0x8] sm:$0xf]
      %v209 = vld [vmem:[%s1 + $0xc] sm:$0xf]
      %v210 = vld [vmem:[%s1 + $0x10] sm:$0xf]
      %v211 = vld [vmem:[%s1 + $0x14] sm:$0xf]
      %v212 = vld [vmem:[%s1 + $0x18] sm:$0xf]
      %v213 = vld [vmem:[%s1 + $0x1c] sm:$0xf]
      %v214 = vld [vmem:[%s1 + $0x20] sm:$0xf]
      %v215 = vld [vmem:[%s1 + $0x24] sm:$0xf]
      %v216 = vld [vmem:[%s1 + $0x28] sm:$0xf]
      %v217 = vld [vmem:[%s1 + $0x2c] sm:$0xf]
      %v218 = vld [vmem:[%s1 + $0x30] sm:$0xf]
      %v219 = vld [vmem:[%s1 + $0x34] sm:$0xf]
      %v220 = vld [vmem:[%s1 + $0x38] sm:$0xf]
      %v221 = vld [vmem:[%s1 + $0x3c] sm:$0xf]
      %v222 = vld [vmem:[%s2] sm:$0x1]
      %v224 = vperm.slane %v222, 0
      %v258 = vunpack.c.l.b16 %v174
      %v259 = vunpack.c.l.b16 %v175
      %v260 = vunpack.c.l.b16 %v176
      %v261 = vunpack.c.l.b16 %v177
      %v262 = vunpack.c.l.b16 %v178
      %v263 = vunpack.c.l.b16 %v179
      %v264 = vunpack.c.l.b16 %v180
      %v265 = vunpack.c.l.b16 %v181
      %v266 = vunpack.c.l.b16 %v182
      %v267 = vunpack.c.l.b16 %v183
      %v268 = vunpack.c.l.b16 %v184
      %v269 = vunpack.c.l.b16 %v185
      %v270 = vunpack.c.l.b16 %v186
      %v271 = vunpack.c.l.b16 %v187
      %v272 = vunpack.c.l.b16 %v188
      %v273 = vunpack.c.l.b16 %v189
      %v274 = vunpack.c.l.b16 %v190
      %v275 = vunpack.c.l.b16 %v191
      %v276 = vunpack.c.l.b16 %v192
      %v277 = vunpack.c.l.b16 %v193
      %v278 = vunpack.c.l.b16 %v194
      %v279 = vunpack.c.l.b16 %v195
      %v280 = vunpack.c.l.b16 %v196
      %v281 = vunpack.c.l.b16 %v197
      %v282 = vunpack.c.l.b16 %v198
      %v283 = vunpack.c.l.b16 %v199
      %v284 = vunpack.c.l.b16 %v200
      %v285 = vunpack.c.l.b16 %v201
      %v286 = vunpack.c.l.b16 %v202
      %v287 = vunpack.c.l.b16 %v203
      %v288 = vunpack.c.l.b16 %v204
      %v289 = vunpack.c.l.b16 %v205
      %v290 = vpack.c.b16 %v259, %v258
      %v291 = vpack.c.b16 %v261, %v260
      %v292 = vpack.c.b16 %v263, %v262
      %v293 = vpack.c.b16 %v265, %v264
      %v294 = vpack.c.b16 %v267, %v266
      %v295 = vpack.c.b16 %v269, %v268
      %v296 = vpack.c.b16 %v271, %v270
      %v297 = vpack.c.b16 %v273, %v272
      %v298 = vpack.c.b16 %v275, %v274
      %v299 = vpack.c.b16 %v277, %v276
      %v300 = vpack.c.b16 %v279, %v278
      %v301 = vpack.c.b16 %v281, %v280
      %v302 = vpack.c.b16 %v283, %v282
      %v303 = vpack.c.b16 %v285, %v284
      %v304 = vpack.c.b16 %v287, %v286
      %v305 = vpack.c.b16 %v289, %v288
      %v338 = vunpack.c.l.b16 %v206
      %v339 = vunpack.c.l.b16 %v207
      %v340 = vunpack.c.l.b16 %v208
      %v341 = vunpack.c.l.b16 %v209
      %v342 = vunpack.c.l.b16 %v210
      %v343 = vunpack.c.l.b16 %v211
      %v344 = vunpack.c.l.b16 %v212
      %v345 = vunpack.c.l.b16 %v213
      %v346 = vunpack.c.l.b16 %v214
      %v347 = vunpack.c.l.b16 %v215
      %v348 = vunpack.c.l.b16 %v216
      %v349 = vunpack.c.l.b16 %v217
      %v350 = vunpack.c.l.b16 %v218
      %v351 = vunpack.c.l.b16 %v219
      %v352 = vunpack.c.l.b16 %v220
      %v353 = vunpack.c.l.b16 %v221
      %v354 = vpack.c.b16 %v339, %v338
      %v355 = vpack.c.b16 %v341, %v340
      %v356 = vpack.c.b16 %v343, %v342
      %v357 = vpack.c.b16 %v345, %v344
      %v358 = vpack.c.b16 %v347, %v346
      %v359 = vpack.c.b16 %v349, %v348
      %v360 = vpack.c.b16 %v351, %v350
      %v361 = vpack.c.b16 %v353, %v352
      %370 = vmatpush.bf16.msra.mxu0 %v361
      %371 = vmatpush.bf16.msra.mxu0 %v360
      %372 = vmatpush.bf16.msra.mxu0 %v359
      %373 = vmatpush.bf16.msra.mxu0 %v358
      %374 = vmatpush.bf16.msra.mxu0 %v357
      %375 = vmatpush.bf16.msra.mxu0 %v356
      %376 = vmatpush.bf16.msra.mxu0 %v355
      %377 = vmatpush.bf16.msra.mxu0 %v354
      %378 = vmatmul.bf16.gmra.mxu0 %v290
      %v379 = vpop.f32.mrf.mxu0
      %v380 = vadd.f32 %v224, %v379
      %v381 = vpop.f32.mrf.mxu0
      %v382 = vadd.f32 %v224, %v381
      %383 = vmatmul.bf16.gmra.mxu0 %v291
      %v384 = vpop.f32.mrf.mxu0
      %v385 = vadd.f32 %v224, %v384
      %v386 = vpop.f32.mrf.mxu0
      %v387 = vadd.f32 %v224, %v386
      %388 = vmatmul.bf16.gmra.mxu0 %v292
      %v389 = vpop.f32.mrf.mxu0
      %v390 = vadd.f32 %v224, %v389
      %v391 = vpop.f32.mrf.mxu0
      %v392 = vadd.f32 %v224, %v391
      %393 = vmatmul.bf16.gmra.mxu0 %v293
      %v394 = vpop.f32.mrf.mxu0
      %v395 = vadd.f32 %v224, %v394
      %v396 = vpop.f32.mrf.mxu0
      %v397 = vadd.f32 %v224, %v396
      %398 = vmatmul.bf16.gmra.mxu0 %v294
      %v399 = vpop.f32.mrf.mxu0
      %v400 = vadd.f32 %v224, %v399
      %v401 = vpop.f32.mrf.mxu0
      %v402 = vadd.f32 %v224, %v401
      %403 = vmatmul.bf16.gmra.mxu0 %v295
      %v404 = vpop.f32.mrf.mxu0
      %v405 = vadd.f32 %v224, %v404
      %v406 = vpop.f32.mrf.mxu0
      %v407 = vadd.f32 %v224, %v406
      %408 = vmatmul.bf16.gmra.mxu0 %v296
      %v409 = vpop.f32.mrf.mxu0
      %v410 = vadd.f32 %v224, %v409
      %v411 = vpop.f32.mrf.mxu0
      %v412 = vadd.f32 %v224, %v411
      %413 = vmatmul.bf16.gmra.mxu0 %v297
      %v414 = vpop.f32.mrf.mxu0
      %v415 = vadd.f32 %v224, %v414
      %v416 = vpop.f32.mrf.mxu0
      %v417 = vadd.f32 %v224, %v416
      %418 = vmatmul.bf16.gmra.mxu0 %v298
      %v419 = vpop.f32.mrf.mxu0
      %v420 = vadd.f32 %v224, %v419
      %v421 = vpop.f32.mrf.mxu0
      %v422 = vadd.f32 %v224, %v421
      %423 = vmatmul.bf16.gmra.mxu0 %v299
      %v424 = vpop.f32.mrf.mxu0
      %v425 = vadd.f32 %v224, %v424
      %v426 = vpop.f32.mrf.mxu0
      %v427 = vadd.f32 %v224, %v426
      %428 = vmatmul.bf16.gmra.mxu0 %v300
      %v429 = vpop.f32.mrf.mxu0
      %v430 = vadd.f32 %v224, %v429
      %v431 = vpop.f32.mrf.mxu0
      %v432 = vadd.f32 %v224, %v431
      %433 = vmatmul.bf16.gmra.mxu0 %v301
      %v434 = vpop.f32.mrf.mxu0
      %v435 = vadd.f32 %v224, %v434
      %v436 = vpop.f32.mrf.mxu0
      %v437 = vadd.f32 %v224, %v436
      %438 = vmatmul.bf16.gmra.mxu0 %v302
      %v439 = vpop.f32.mrf.mxu0
      %v440 = vadd.f32 %v224, %v439
      %v441 = vpop.f32.mrf.mxu0
      %v442 = vadd.f32 %v224, %v441
      %443 = vmatmul.bf16.gmra.mxu0 %v303
      %v444 = vpop.f32.mrf.mxu0
      %v445 = vadd.f32 %v224, %v444
      %v446 = vpop.f32.mrf.mxu0
      %v447 = vadd.f32 %v224, %v446
      %448 = vmatmul.bf16.gmra.mxu0 %v304
      %v449 = vpop.f32.mrf.mxu0
      %v450 = vadd.f32 %v224, %v449
      %v451 = vpop.f32.mrf.mxu0
      %v452 = vadd.f32 %v224, %v451
      %453 = vmatmul.bf16.gmra.mxu0 %v305
      %v454 = vpop.f32.mrf.mxu0
      %v455 = vadd.f32 %v224, %v454
      %v456 = vpop.f32.mrf.mxu0
      %v457 = vadd.f32 %v224, %v456
      %458 = vdwg.mxu0
      %v459 = vmax.f32 %v380, 0.0
      %v460 = vmax.f32 %v382, 0.0
      %v461 = vmax.f32 %v385, 0.0
      %v462 = vmax.f32 %v387, 0.0
      %v463 = vmax.f32 %v390, 0.0
      %v464 = vmax.f32 %v392, 0.0
      %v465 = vmax.f32 %v395, 0.0
      %v466 = vmax.f32 %v397, 0.0
      %v467 = vmax.f32 %v400, 0.0
      %v468 = vmax.f32 %v402, 0.0
      %v469 = vmax.f32 %v405, 0.0
      %v470 = vmax.f32 %v407, 0.0
      %v471 = vmax.f32 %v410, 0.0
      %v472 = vmax.f32 %v412, 0.0
      %v473 = vmax.f32 %v415, 0.0
      %v474 = vmax.f32 %v417, 0.0
      %v475 = vmax.f32 %v420, 0.0
      %v476 = vmax.f32 %v422, 0.0
      %v477 = vmax.f32 %v425, 0.0
      %v478 = vmax.f32 %v427, 0.0
      %v479 = vmax.f32 %v430, 0.0
      %v480 = vmax.f32 %v432, 0.0
      %v481 = vmax.f32 %v435, 0.0
      %v482 = vmax.f32 %v437, 0.0
      %v483 = vmax.f32 %v440, 0.0
      %v484 = vmax.f32 %v442, 0.0
      %v485 = vmax.f32 %v445, 0.0
      %v486 = vmax.f32 %v447, 0.0
      %v487 = vmax.f32 %v450, 0.0
      %v488 = vmax.f32 %v452, 0.0
      %v489 = vmax.f32 %v455, 0.0
      %v490 = vmax.f32 %v457, 0.0
      %v491 = vpack.c.bf16 %v459, %v459
      %v492 = vpack.c.bf16 %v460, %v460
      %v493 = vpack.c.bf16 %v461, %v461
      %v494 = vpack.c.bf16 %v462, %v462
      %v495 = vpack.c.bf16 %v463, %v463
      %v496 = vpack.c.bf16 %v464, %v464
      %v497 = vpack.c.bf16 %v465, %v465
      %v498 = vpack.c.bf16 %v466, %v466
      %v499 = vpack.c.bf16 %v467, %v467
      %v500 = vpack.c.bf16 %v468, %v468
      %v501 = vpack.c.bf16 %v469, %v469
      %v502 = vpack.c.bf16 %v470, %v470
      %v503 = vpack.c.bf16 %v471, %v471
      %v504 = vpack.c.bf16 %v472, %v472
      %v505 = vpack.c.bf16 %v473, %v473
      %v506 = vpack.c.bf16 %v474, %v474
      %v507 = vpack.c.bf16 %v475, %v475
      %v508 = vpack.c.bf16 %v476, %v476
      %v509 = vpack.c.bf16 %v477, %v477
      %v510 = vpack.c.bf16 %v478, %v478
      %v511 = vpack.c.bf16 %v479, %v479
      %v512 = vpack.c.bf16 %v480, %v480
      %v513 = vpack.c.bf16 %v481, %v481
      %v514 = vpack.c.bf16 %v482, %v482
      %v515 = vpack.c.bf16 %v483, %v483
      %v516 = vpack.c.bf16 %v484, %v484
      %v517 = vpack.c.bf16 %v485, %v485
      %v518 = vpack.c.bf16 %v486, %v486
      %v519 = vpack.c.bf16 %v487, %v487
      %v520 = vpack.c.bf16 %v488, %v488
      %v521 = vpack.c.bf16 %v489, %v489
      %v522 = vpack.c.bf16 %v490, %v490
      %523 = vst [vmem:[%s172] sm:$0xf] %v491
      %524 = vst [vmem:[%s172 + $0x4] sm:$0xf] %v492
      %525 = vst [vmem:[%s172 + $0x8] sm:$0xf] %v493
      %526 = vst [vmem:[%s172 + $0xc] sm:$0xf] %v494
      %527 = vst [vmem:[%s172 + $0x10] sm:$0xf] %v495
      %528 = vst [vmem:[%s172 + $0x14] sm:$0xf] %v496
      %529 = vst [vmem:[%s172 + $0x18] sm:$0xf] %v497
      %530 = vst [vmem:[%s172 + $0x1c] sm:$0xf] %v498
      %531 = vst [vmem:[%s172 + $0x20] sm:$0xf] %v499
      %532 = vst [vmem:[%s172 + $0x24] sm:$0xf] %v500
      %533 = vst [vmem:[%s172 + $0x28] sm:$0xf] %v501
      %534 = vst [vmem:[%s172 + $0x2c] sm:$0xf] %v502
      %535 = vst [vmem:[%s172 + $0x30] sm:$0xf] %v503
      %536 = vst [vmem:[%s172 + $0x34] sm:$0xf] %v504
      %537 = vst [vmem:[%s172 + $0x38] sm:$0xf] %v505
      %538 = vst [vmem:[%s172 + $0x3c] sm:$0xf] %v506
      %539 = vst [vmem:[%s172 + $0x40] sm:$0xf] %v507
      %540 = vst [vmem:[%s172 + $0x44] sm:$0xf] %v508
      %541 = vst [vmem:[%s172 + $0x48] sm:$0xf] %v509
      %542 = vst [vmem:[%s172 + $0x4c] sm:$0xf] %v510
      %543 = vst [vmem:[%s172 + $0x50] sm:$0xf] %v511
      %544 = vst [vmem:[%s172 + $0x54] sm:$0xf] %v512
      %545 = vst [vmem:[%s172 + $0x58] sm:$0xf] %v513
      %546 = vst [vmem:[%s172 + $0x5c] sm:$0xf] %v514
      %547 = vst [vmem:[%s172 + $0x60] sm:$0xf] %v515
      %548 = vst [vmem:[%s172 + $0x64] sm:$0xf] %v516
      %549 = vst [vmem:[%s172 + $0x68] sm:$0xf] %v517
      %550 = vst [vmem:[%s172 + $0x6c] sm:$0xf] %v518
      %551 = vst [vmem:[%s172 + $0x70] sm:$0xf] %v519
      %552 = vst [vmem:[%s172 + $0x74] sm:$0xf] %v520
      %553 = vst [vmem:[%s172 + $0x78] sm:$0xf] %v521
      %554 = vst [vmem:[%s172 + $0x7c] sm:$0xf] %v522
      %s555 = smul.u32 32, %s14
      %p556 = scmp.lt.s32.totalorder %s555, 63
      %s557 = scalar_select %p556, %s555, 63
      %s558 = smul.addr %s557, 4
      %s559 = scalar_lea.vmem %s3, %s558
      // Predicated region
      $region33: #{vae_forward.7} parent=31 // pred_check
        %p560 = pneg %p100
      $region34: #{vae_forward.7} parent=31 // pred_check_branch
        %562 = sbr.rel (%p560) target = $region36
      $region35: #{vae_forward.7} parent=31 // pred_region
        %s563 = smul.u32 32, %s14
      $region36: #{vae_forward.7} parent=31 // pred_fallthru
        _
    $region32: #{vae_forward.7} parent=5 // pred_fallthru
      _
    %p564 = scmp.le.s32.totalorder 2, %s9
    // Predicated region
    $region37: #{vae_forward.7} parent=5 // pred_check
      %p565 = pneg %p564
    $region38: #{vae_forward.7} parent=5 // pred_check_branch
      %567 = sbr.rel (%p565) target = $region40
    $region39: #{vae_forward.7} parent=5 // pred_region
      %s568 = ssub.s32 %s9, 2
      // Predicated region
      $region41: #{vae_forward.7} parent=39 // pred_check
        %p569 = pneg %p106
      $region42: #{vae_forward.7} parent=39 // pred_check_branch
        %571 = sbr.rel (%p569) target = $region44
      $region43: #{vae_forward.7} parent=39 // pred_region
        %s572 = smul.u32 32, %s15
        %p573 = scmp.lt.s32.totalorder %s572, 63
        %s574 = scalar_select %p573, %s572, 63
        %s575 = smul.addr %s574, 4
        %s576 = scalar_lea.vmem %s3, %s575
      $region44: #{vae_forward.7} parent=39 // pred_fallthru
        _
    $region40: #{vae_forward.7} parent=5 // pred_fallthru
      _
  $region6: #{vae_forward.7} parent=0 // loop_footer
    %s13 = sadd.s32 1, %s9
  $region7: #{vae_forward.7} parent=0 // loop_footer_branch
    %8 = sbr.rel target = $region3
  $region8: #{vae_forward.7} parent=0 // loop_exit
    _

// kernel: vae_forward.8
$region0: #{vae_forward.8}
  #allocation0 [shape = 'u32[]', space=smem, size = 0x4, offset = 0x4, fixed_abs, tag = 'smem constant byte address 0x4 - core index']
  #allocation1 [shape = 'u32[72,128]{1,0:T(1,128)}', space=vmem, size = 0x9000, scoped, tag = 'internal scratch']
  %s0 = inlined_call_operand.vmem [shape: bf16[128,128], index: 0, kind: input, shape index: {}]
  %s1 = inlined_call_operand.vmem [shape: bf16[128,128], index: 1, kind: input, shape index: {}]
  %s2 = inlined_call_operand.vmem [shape: f32[1,128], index: 2, kind: input, shape index: {}]
  %s3 = inlined_call_operand.vmem [shape: bf16[128,128], index: 3, kind: output, shape index: {}]
  %s4 = sld [smem:[#allocation0]]
  $region22: #{vae_forward.8} parent=0
    _
  %s6 = ssub.s32 1, %s4
  %s7 = scalar_select 0, %s6, %s4
  // Predicated region
  $region2: #{vae_forward.8} parent=0 // pred_check
    _
  $region3: #{vae_forward.8} parent=0 // pred_check_branch
    %9 = sbr.rel (0) target = $region5
  $region4: #{vae_forward.8} parent=0 // pred_region
    _
  $region5: #{vae_forward.8} parent=0 // pred_fallthru
    _
  // Predicated region
  $region6: #{vae_forward.8} parent=0 // pred_check
    _
  $region7: #{vae_forward.8} parent=0 // pred_check_branch
    %11 = sbr.rel (0) target = $region9
  $region8: #{vae_forward.8} parent=0 // pred_region
    _
  $region9: #{vae_forward.8} parent=0 // pred_fallthru
    _
  // Predicated region
  $region10: #{vae_forward.8} parent=0 // pred_check
    _
  $region11: #{vae_forward.8} parent=0 // pred_check_branch
    %13 = sbr.rel (0) target = $region13
  $region12: #{vae_forward.8} parent=0 // pred_region
    _
  $region13: #{vae_forward.8} parent=0 // pred_fallthru
    _
  %v14 = vld [vmem:[%s0] sm:$0xf]
  %v15 = vld [vmem:[%s0 + $0x4] sm:$0xf]
  %v16 = vld [vmem:[%s0 + $0x8] sm:$0xf]
  %v17 = vld [vmem:[%s0 + $0xc] sm:$0xf]
  %v18 = vld [vmem:[%s0 + $0x10] sm:$0xf]
  %v19 = vld [vmem:[%s0 + $0x14] sm:$0xf]
  %v20 = vld [vmem:[%s0 + $0x18] sm:$0xf]
  %v21 = vld [vmem:[%s0 + $0x1c] sm:$0xf]
  %v22 = vld [vmem:[%s0 + $0x20] sm:$0xf]
  %v23 = vld [vmem:[%s0 + $0x24] sm:$0xf]
  %v24 = vld [vmem:[%s0 + $0x28] sm:$0xf]
  %v25 = vld [vmem:[%s0 + $0x2c] sm:$0xf]
  %v26 = vld [vmem:[%s0 + $0x30] sm:$0xf]
  %v27 = vld [vmem:[%s0 + $0x34] sm:$0xf]
  %v28 = vld [vmem:[%s0 + $0x38] sm:$0xf]
  %v29 = vld [vmem:[%s0 + $0x3c] sm:$0xf]
  %v30 = vld [vmem:[%s1] sm:$0xf]
  %v31 = vld [vmem:[%s1 + $0x4] sm:$0xf]
  %v32 = vld [vmem:[%s1 + $0x8] sm:$0xf]
  %v33 = vld [vmem:[%s1 + $0xc] sm:$0xf]
  %v34 = vld [vmem:[%s1 + $0x10] sm:$0xf]
  %v35 = vld [vmem:[%s1 + $0x14] sm:$0xf]
  %v36 = vld [vmem:[%s1 + $0x18] sm:$0xf]
  %v37 = vld [vmem:[%s1 + $0x1c] sm:$0xf]
  %v38 = vld [vmem:[%s1 + $0x20] sm:$0xf]
  %v39 = vld [vmem:[%s1 + $0x24] sm:$0xf]
  %v40 = vld [vmem:[%s1 + $0x28] sm:$0xf]
  %v41 = vld [vmem:[%s1 + $0x2c] sm:$0xf]
  %v42 = vld [vmem:[%s1 + $0x30] sm:$0xf]
  %v43 = vld [vmem:[%s1 + $0x34] sm:$0xf]
  %v44 = vld [vmem:[%s1 + $0x38] sm:$0xf]
  %v45 = vld [vmem:[%s1 + $0x3c] sm:$0xf]
  %v46 = vld [vmem:[%s2] sm:$0x1]
  %v48 = vperm.slane %v46, 0
  %v66 = vunpack.c.l.b16 %v14
  %v67 = vunpack.c.l.b16 %v15
  %v68 = vunpack.c.l.b16 %v16
  %v69 = vunpack.c.l.b16 %v17
  %v70 = vunpack.c.l.b16 %v18
  %v71 = vunpack.c.l.b16 %v19
  %v72 = vunpack.c.l.b16 %v20
  %v73 = vunpack.c.l.b16 %v21
  %v74 = vunpack.c.l.b16 %v22
  %v75 = vunpack.c.l.b16 %v23
  %v76 = vunpack.c.l.b16 %v24
  %v77 = vunpack.c.l.b16 %v25
  %v78 = vunpack.c.l.b16 %v26
  %v79 = vunpack.c.l.b16 %v27
  %v80 = vunpack.c.l.b16 %v28
  %v81 = vunpack.c.l.b16 %v29
  %v82 = vpack.c.b16 %v67, %v66
  %v83 = vpack.c.b16 %v69, %v68
  %v84 = vpack.c.b16 %v71, %v70
  %v85 = vpack.c.b16 %v73, %v72
  %v86 = vpack.c.b16 %v75, %v74
  %v87 = vpack.c.b16 %v77, %v76
  %v88 = vpack.c.b16 %v79, %v78
  %v89 = vpack.c.b16 %v81, %v80
  %v114 = vunpack.c.l.b16 %v30
  %v115 = vunpack.c.l.b16 %v31
  %v116 = vunpack.c.l.b16 %v32
  %v117 = vunpack.c.l.b16 %v33
  %v118 = vunpack.c.l.b16 %v34
  %v119 = vunpack.c.l.b16 %v35
  %v120 = vunpack.c.l.b16 %v36
  %v121 = vunpack.c.l.b16 %v37
  %v122 = vunpack.c.l.b16 %v38
  %v123 = vunpack.c.l.b16 %v39
  %v124 = vunpack.c.l.b16 %v40
  %v125 = vunpack.c.l.b16 %v41
  %v126 = vunpack.c.l.b16 %v42
  %v127 = vunpack.c.l.b16 %v43
  %v128 = vunpack.c.l.b16 %v44
  %v129 = vunpack.c.l.b16 %v45
  %v130 = vpack.c.b16 %v115, %v114
  %v131 = vpack.c.b16 %v117, %v116
  %v132 = vpack.c.b16 %v119, %v118
  %v133 = vpack.c.b16 %v121, %v120
  %v134 = vpack.c.b16 %v123, %v122
  %v135 = vpack.c.b16 %v125, %v124
  %v136 = vpack.c.b16 %v127, %v126
  %v137 = vpack.c.b16 %v129, %v128
  %146 = vmatpush.bf16.msra.mxu0 %v137
  %147 = vmatpush.bf16.msra.mxu0 %v136
  %148 = vmatpush.bf16.msra.mxu0 %v135
  %149 = vmatpush.bf16.msra.mxu0 %v134
  %150 = vmatpush.bf16.msra.mxu0 %v133
  %151 = vmatpush.bf16.msra.mxu0 %v132
  %152 = vmatpush.bf16.msra.mxu0 %v131
  %153 = vmatpush.bf16.msra.mxu0 %v130
  %154 = vmatmul.bf16.gmra.mxu0 %v82
  %v155 = vpop.f32.mrf.mxu0
  %v156 = vadd.f32 %v48, %v155
  %v157 = vpop.f32.mrf.mxu0
  %v158 = vadd.f32 %v48, %v157
  %159 = vmatmul.bf16.gmra.mxu0 %v83
  %v160 = vpop.f32.mrf.mxu0
  %v161 = vadd.f32 %v48, %v160
  %v162 = vpop.f32.mrf.mxu0
  %v163 = vadd.f32 %v48, %v162
  %164 = vmatmul.bf16.gmra.mxu0 %v84
  %v165 = vpop.f32.mrf.mxu0
  %v166 = vadd.f32 %v48, %v165
  %v167 = vpop.f32.mrf.mxu0
  %v168 = vadd.f32 %v48, %v167
  %169 = vmatmul.bf16.gmra.mxu0 %v85
  %v170 = vpop.f32.mrf.mxu0
  %v171 = vadd.f32 %v48, %v170
  %v172 = vpop.f32.mrf.mxu0
  %v173 = vadd.f32 %v48, %v172
  %174 = vmatmul.bf16.gmra.mxu0 %v86
  %v175 = vpop.f32.mrf.mxu0
  %v176 = vadd.f32 %v48, %v175
  %v177 = vpop.f32.mrf.mxu0
  %v178 = vadd.f32 %v48, %v177
  %179 = vmatmul.bf16.gmra.mxu0 %v87
  %v180 = vpop.f32.mrf.mxu0
  %v181 = vadd.f32 %v48, %v180
  %v182 = vpop.f32.mrf.mxu0
  %v183 = vadd.f32 %v48, %v182
  %184 = vmatmul.bf16.gmra.mxu0 %v88
  %v185 = vpop.f32.mrf.mxu0
  %v186 = vadd.f32 %v48, %v185
  %v187 = vpop.f32.mrf.mxu0
  %v188 = vadd.f32 %v48, %v187
  %189 = vmatmul.bf16.gmra.mxu0 %v89
  %v190 = vpop.f32.mrf.mxu0
  %v191 = vadd.f32 %v48, %v190
  %v192 = vpop.f32.mrf.mxu0
  %v193 = vadd.f32 %v48, %v192
  %194 = vdwg.mxu0
  %v195 = vmax.f32 %v156, 0.0
  %v196 = vmax.f32 %v158, 0.0
  %v197 = vmax.f32 %v161, 0.0
  %v198 = vmax.f32 %v163, 0.0
  %v199 = vmax.f32 %v166, 0.0
  %v200 = vmax.f32 %v168, 0.0
  %v201 = vmax.f32 %v171, 0.0
  %v202 = vmax.f32 %v173, 0.0
  %v203 = vmax.f32 %v176, 0.0
  %v204 = vmax.f32 %v178, 0.0
  %v205 = vmax.f32 %v181, 0.0
  %v206 = vmax.f32 %v183, 0.0
  %v207 = vmax.f32 %v186, 0.0
  %v208 = vmax.f32 %v188, 0.0
  %v209 = vmax.f32 %v191, 0.0
  %v210 = vmax.f32 %v193, 0.0
  %v211 = vpack.c.bf16 %v195, %v195
  %v212 = vpack.c.bf16 %v196, %v196
  %v213 = vpack.c.bf16 %v197, %v197
  %v214 = vpack.c.bf16 %v198, %v198
  %v215 = vpack.c.bf16 %v199, %v199
  %v216 = vpack.c.bf16 %v200, %v200
  %v217 = vpack.c.bf16 %v201, %v201
  %v218 = vpack.c.bf16 %v202, %v202
  %v219 = vpack.c.bf16 %v203, %v203
  %v220 = vpack.c.bf16 %v204, %v204
  %v221 = vpack.c.bf16 %v205, %v205
  %v222 = vpack.c.bf16 %v206, %v206
  %v223 = vpack.c.bf16 %v207, %v207
  %v224 = vpack.c.bf16 %v208, %v208
  %v225 = vpack.c.bf16 %v209, %v209
  %v226 = vpack.c.bf16 %v210, %v210
  %227 = vst [vmem:[%s3] sm:$0xf] %v211
  %228 = vst [vmem:[%s3 + $0x4] sm:$0xf] %v212
  %229 = vst [vmem:[%s3 + $0x8] sm:$0xf] %v213
  %230 = vst [vmem:[%s3 + $0xc] sm:$0xf] %v214
  %231 = vst [vmem:[%s3 + $0x10] sm:$0xf] %v215
  %232 = vst [vmem:[%s3 + $0x14] sm:$0xf] %v216
  %233 = vst [vmem:[%s3 + $0x18] sm:$0xf] %v217
  %234 = vst [vmem:[%s3 + $0x1c] sm:$0xf] %v218
  %235 = vst [vmem:[%s3 + $0x20] sm:$0xf] %v219
  %236 = vst [vmem:[%s3 + $0x24] sm:$0xf] %v220
  %237 = vst [vmem:[%s3 + $0x28] sm:$0xf] %v221
  %238 = vst [vmem:[%s3 + $0x2c] sm:$0xf] %v222
  %239 = vst [vmem:[%s3 + $0x30] sm:$0xf] %v223
  %240 = vst [vmem:[%s3 + $0x34] sm:$0xf] %v224
  %241 = vst [vmem:[%s3 + $0x38] sm:$0xf] %v225
  %242 = vst [vmem:[%s3 + $0x3c] sm:$0xf] %v226
  // Predicated region
  $region14: #{vae_forward.8} parent=0 // pred_check
    _
  $region15: #{vae_forward.8} parent=0 // pred_check_branch
    %244 = sbr.rel (0) target = $region17
  $region16: #{vae_forward.8} parent=0 // pred_region
    _
  $region17: #{vae_forward.8} parent=0 // pred_fallthru
    _
  // Predicated region
  $region18: #{vae_forward.8} parent=0 // pred_check
    _
  $region19: #{vae_forward.8} parent=0 // pred_check_branch
    %246 = sbr.rel (0) target = $region21
  $region20: #{vae_forward.8} parent=0 // pred_region
    _
  $region21: #{vae_forward.8} parent=0 // pred_fallthru
    _

// kernel: vae_forward.9
$region0: #{vae_forward.9}
  #allocation0 [shape = 'u32[]', space=smem, size = 0x4, offset = 0x4, fixed_abs, tag = 'smem constant byte address 0x4 - core index']
  #allocation1 [shape = 'u32[72,128]{1,0:T(1,128)}', space=vmem, size = 0x9000, scoped, tag = 'internal scratch']
  %s0 = inlined_call_operand.vmem [shape: bf16[32,256], index: 0, kind: input, shape index: {}]
  %s1 = inlined_call_operand.vmem [shape: bf16[256,128], index: 1, kind: input, shape index: {}]
  %s2 = inlined_call_operand.vmem [shape: f32[1,128], index: 2, kind: input, shape index: {}]
  %s3 = inlined_call_operand.vmem [shape: bf16[32,128], index: 3, kind: output, shape index: {}]
  %s4 = sld [smem:[#allocation0]]
  $region22: #{vae_forward.9} parent=0
    _
  %s6 = ssub.s32 1, %s4
  %s7 = scalar_select 0, %s6, %s4
  // Predicated region
  $region2: #{vae_forward.9} parent=0 // pred_check
    _
  $region3: #{vae_forward.9} parent=0 // pred_check_branch
    %9 = sbr.rel (0) target = $region5
  $region4: #{vae_forward.9} parent=0 // pred_region
    _
  $region5: #{vae_forward.9} parent=0 // pred_fallthru
    _
  // Predicated region
  $region6: #{vae_forward.9} parent=0 // pred_check
    _
  $region7: #{vae_forward.9} parent=0 // pred_check_branch
    %11 = sbr.rel (0) target = $region9
  $region8: #{vae_forward.9} parent=0 // pred_region
    _
  $region9: #{vae_forward.9} parent=0 // pred_fallthru
    _
  // Predicated region
  $region10: #{vae_forward.9} parent=0 // pred_check
    _
  $region11: #{vae_forward.9} parent=0 // pred_check_branch
    %13 = sbr.rel (0) target = $region13
  $region12: #{vae_forward.9} parent=0 // pred_region
    _
  $region13: #{vae_forward.9} parent=0 // pred_fallthru
    _
  %v14 = vld [vmem:[%s0] sm:$0xff]
  %v15 = vld [vmem:[%s0 + $0x8] sm:$0xff]
  %v16 = vld [vmem:[%s0 + $0x10] sm:$0xff]
  %v17 = vld [vmem:[%s0 + $0x18] sm:$0xff]
  %v18 = vld [vmem:[%s1] sm:$0xf]
  %v19 = vld [vmem:[%s1 + $0x4] sm:$0xf]
  %v20 = vld [vmem:[%s1 + $0x8] sm:$0xf]
  %v21 = vld [vmem:[%s1 + $0xc] sm:$0xf]
  %v22 = vld [vmem:[%s1 + $0x10] sm:$0xf]
  %v23 = vld [vmem:[%s1 + $0x14] sm:$0xf]
  %v24 = vld [vmem:[%s1 + $0x18] sm:$0xf]
  %v25 = vld [vmem:[%s1 + $0x1c] sm:$0xf]
  %v26 = vld [vmem:[%s1 + $0x20] sm:$0xf]
  %v27 = vld [vmem:[%s1 + $0x24] sm:$0xf]
  %v28 = vld [vmem:[%s1 + $0x28] sm:$0xf]
  %v29 = vld [vmem:[%s1 + $0x2c] sm:$0xf]
  %v30 = vld [vmem:[%s1 + $0x30] sm:$0xf]
  %v31 = vld [vmem:[%s1 + $0x34] sm:$0xf]
  %v32 = vld [vmem:[%s1 + $0x38] sm:$0xf]
  %v33 = vld [vmem:[%s1 + $0x3c] sm:$0xf]
  %v34 = vld [vmem:[%s1 + $0x40] sm:$0xf]
  %v35 = vld [vmem:[%s1 + $0x44] sm:$0xf]
  %v36 = vld [vmem:[%s1 + $0x48] sm:$0xf]
  %v37 = vld [vmem:[%s1 + $0x4c] sm:$0xf]
  %v38 = vld [vmem:[%s1 + $0x50] sm:$0xf]
  %v39 = vld [vmem:[%s1 + $0x54] sm:$0xf]
  %v40 = vld [vmem:[%s1 + $0x58] sm:$0xf]
  %v41 = vld [vmem:[%s1 + $0x5c] sm:$0xf]
  %v42 = vld [vmem:[%s1 + $0x60] sm:$0xf]
  %v43 = vld [vmem:[%s1 + $0x64] sm:$0xf]
  %v44 = vld [vmem:[%s1 + $0x68] sm:$0xf]
  %v45 = vld [vmem:[%s1 + $0x6c] sm:$0xf]
  %v46 = vld [vmem:[%s1 + $0x70] sm:$0xf]
  %v47 = vld [vmem:[%s1 + $0x74] sm:$0xf]
  %v48 = vld [vmem:[%s1 + $0x78] sm:$0xf]
  %v49 = vld [vmem:[%s1 + $0x7c] sm:$0xf]
  %v50 = vld [vmem:[%s2] sm:$0x1]
  %v52 = vperm.slane %v50, 0
  %v58 = vunpack.c.l.b16 %v14
  %v59 = vunpack.c.h.b16 %v14
  %v60 = vunpack.c.l.b16 %v15
  %v61 = vunpack.c.h.b16 %v15
  %v62 = vunpack.c.l.b16 %v16
  %v63 = vunpack.c.h.b16 %v16
  %v64 = vunpack.c.l.b16 %v17
  %v65 = vunpack.c.h.b16 %v17
  %v66 = vpack.c.b16 %v60, %v58
  %v67 = vpack.c.b16 %v61, %v59
  %v68 = vpack.c.b16 %v64, %v62
  %v69 = vpack.c.b16 %v65, %v63
  %v106 = vunpack.c.l.b16 %v18
  %v107 = vunpack.c.l.b16 %v19
  %v108 = vunpack.c.l.b16 %v20
  %v109 = vunpack.c.l.b16 %v21
  %v110 = vunpack.c.l.b16 %v22
  %v111 = vunpack.c.l.b16 %v23
  %v112 = vunpack.c.l.b16 %v24
  %v113 = vunpack.c.l.b16 %v25
  %v114 = vunpack.c.l.b16 %v26
  %v115 = vunpack.c.l.b16 %v27
  %v116 = vunpack.c.l.b16 %v28
  %v117 = vunpack.c.l.b16 %v29
  %v118 = vunpack.c.l.b16 %v30
  %v119 = vunpack.c.l.b16 %v31
  %v120 = vunpack.c.l.b16 %v32
  %v121 = vunpack.c.l.b16 %v33
  %v122 = vunpack.c.l.b16 %v34
  %v123 = vunpack.c.l.b16 %v35
  %v124 = vunpack.c.l.b16 %v36
  %v125 = vunpack.c.l.b16 %v37
  %v126 = vunpack.c.l.b16 %v38
  %v127 = vunpack.c.l.b16 %v39
  %v128 = vunpack.c.l.b16 %v40
  %v129 = vunpack.c.l.b16 %v41
  %v130 = vunpack.c.l.b16 %v42
  %v131 = vunpack.c.l.b16 %v43
  %v132 = vunpack.c.l.b16 %v44
  %v133 = vunpack.c.l.b16 %v45
  %v134 = vunpack.c.l.b16 %v46
  %v135 = vunpack.c.l.b16 %v47
  %v136 = vunpack.c.l.b16 %v48
  %v137 = vunpack.c.l.b16 %v49
  %v138 = vpack.c.b16 %v107, %v106
  %v139 = vpack.c.b16 %v109, %v108
  %v140 = vpack.c.b16 %v111, %v110
  %v141 = vpack.c.b16 %v113, %v112
  %v142 = vpack.c.b16 %v115, %v114
  %v143 = vpack.c.b16 %v117, %v116
  %v144 = vpack.c.b16 %v119, %v118
  %v145 = vpack.c.b16 %v121, %v120
  %v146 = vpack.c.b16 %v123, %v122
  %v147 = vpack.c.b16 %v125, %v124
  %v148 = vpack.c.b16 %v127, %v126
  %v149 = vpack.c.b16 %v129, %v128
  %v150 = vpack.c.b16 %v131, %v130
  %v151 = vpack.c.b16 %v133, %v132
  %v152 = vpack.c.b16 %v135, %v134
  %v153 = vpack.c.b16 %v137, %v136
  %170 = vmatpush.bf16.msra.mxu0 %v145
  %171 = vmatpush.bf16.msra.mxu0 %v144
  %172 = vmatpush.bf16.msra.mxu0 %v143
  %173 = vmatpush.bf16.msra.mxu0 %v142
  %174 = vmatpush.bf16.msra.mxu0 %v141
  %175 = vmatpush.bf16.msra.mxu0 %v140
  %176 = vmatpush.bf16.msra.mxu0 %v139
  %177 = vmatpush.bf16.msra.mxu0 %v138
  %178 = vmatmul.bf16.gmra.mxu0 %v66
  %v179 = vpop.f32.mrf.mxu0
  %v180 = vadd.f32 %v52, %v179
  %v181 = vpop.f32.mrf.mxu0
  %v182 = vadd.f32 %v52, %v181
  %183 = vmatmul.bf16.gmra.mxu0 %v68
  %v184 = vpop.f32.mrf.mxu0
  %v185 = vadd.f32 %v52, %v184
  %v186 = vpop.f32.mrf.mxu0
  %v187 = vadd.f32 %v52, %v186
  %188 = vdwg.mxu0
  %189 = vmatpush.bf16.msra.mxu0 %v153
  %190 = vmatpush.bf16.msra.mxu0 %v152
  %191 = vmatpush.bf16.msra.mxu0 %v151
  %192 = vmatpush.bf16.msra.mxu0 %v150
  %193 = vmatpush.bf16.msra.mxu0 %v149
  %194 = vmatpush.bf16.msra.mxu0 %v148
  %195 = vmatpush.bf16.msra.mxu0 %v147
  %196 = vmatpush.bf16.msra.mxu0 %v146
  %197 = vmatmul.bf16.gmra.mxu0 %v67
  %v198 = vpop.f32.mrf.mxu0
  %v199 = vadd.f32 %v180, %v198
  %v200 = vpop.f32.mrf.mxu0
  %v201 = vadd.f32 %v182, %v200
  %202 = vmatmul.bf16.gmra.mxu0 %v69
  %v203 = vpop.f32.mrf.mxu0
  %v204 = vadd.f32 %v185, %v203
  %v205 = vpop.f32.mrf.mxu0
  %v206 = vadd.f32 %v187, %v205
  %207 = vdwg.mxu0
  %v208 = vmax.f32 %v199, 0.0
  %v209 = vmax.f32 %v201, 0.0
  %v210 = vmax.f32 %v204, 0.0
  %v211 = vmax.f32 %v206, 0.0
  %v212 = vpack.c.bf16 %v208, %v208
  %v213 = vpack.c.bf16 %v209, %v209
  %v214 = vpack.c.bf16 %v210, %v210
  %v215 = vpack.c.bf16 %v211, %v211
  %216 = vst [vmem:[%s3] sm:$0xf] %v212
  %217 = vst [vmem:[%s3 + $0x4] sm:$0xf] %v213
  %218 = vst [vmem:[%s3 + $0x8] sm:$0xf] %v214
  %219 = vst [vmem:[%s3 + $0xc] sm:$0xf] %v215
  // Predicated region
  $region14: #{vae_forward.9} parent=0 // pred_check
    _
  $region15: #{vae_forward.9} parent=0 // pred_check_branch
    %221 = sbr.rel (0) target = $region17
  $region16: #{vae_forward.9} parent=0 // pred_region
    _
  $region17: #{vae_forward.9} parent=0 // pred_fallthru
    _
  // Predicated region
  $region18: #{vae_forward.9} parent=0 // pred_check
    _
  $region19: #{vae_forward.9} parent=0 // pred_check_branch
    %223 = sbr.rel (0) target = $region21
  $region20: #{vae_forward.9} parent=0 // pred_region
    _
  $region21: #{vae_forward.9} parent=0 // pred_fallthru
    _

// kernel: vae_forward.10
$region0: #{vae_forward.10}
  #allocation0 [shape = 'u32[]', space=smem, size = 0x4, offset = 0x4, fixed_abs, tag = 'smem constant byte address 0x4 - core index']
  #allocation1 [shape = 'u32[72,128]{1,0:T(1,128)}', space=vmem, size = 0x9000, scoped, tag = 'internal scratch']
  %s0 = inlined_call_operand.vmem [shape: bf16[8,512], index: 0, kind: input, shape index: {}]
  %s1 = inlined_call_operand.vmem [shape: bf16[512,128], index: 1, kind: input, shape index: {}]
  %s2 = inlined_call_operand.vmem [shape: f32[1,128], index: 2, kind: input, shape index: {}]
  %s3 = inlined_call_operand.vmem [shape: bf16[128,128], index: 3, kind: input, shape index: {}]
  %s4 = inlined_call_operand.vmem [shape: f32[1,128], index: 4, kind: input, shape index: {}]
  %s5 = inlined_call_operand.vmem [shape: bf16[128,256], index: 5, kind: input, shape index: {}]
  %s6 = inlined_call_operand.vmem [shape: f32[1,256], index: 6, kind: input, shape index: {}]
  %s7 = inlined_call_operand.vmem [shape: f32[8,128], index: 7, kind: input, shape index: {}]
  %s8 = inlined_call_operand.vmem [shape: bf16[128,128], index: 8, kind: input, shape index: {}]
  %s9 = inlined_call_operand.vmem [shape: f32[1,128], index: 9, kind: input, shape index: {}]
  %s10 = inlined_call_operand.vmem [shape: bf16[128,1024], index: 10, kind: input, shape index: {}]
  %s11 = inlined_call_operand.vmem [shape: f32[1,1024], index: 11, kind: input, shape index: {}]
  %s12 = inlined_call_operand.vmem [shape: f32[8,256], index: 12, kind: output, shape index: {0}]
  %s13 = inlined_call_operand.vmem [shape: bf16[8,1024], index: 13, kind: output, shape index: {1}]
  %14 = xla_tuple %s12, %s13
  %s15 = sld [smem:[#allocation0]]
  $region66: #{vae_forward.10} parent=0
    _
  %s17 = ssub.s32 1, %s15
  %s18 = scalar_select 0, %s17, %s15
  // Predicated region
  $region2: #{vae_forward.10} parent=0 // pred_check
    _
  $region3: #{vae_forward.10} parent=0 // pred_check_branch
    %20 = sbr.rel (0) target = $region5
  $region4: #{vae_forward.10} parent=0 // pred_region
    _
  $region5: #{vae_forward.10} parent=0 // pred_fallthru
    _
  // Predicated region
  $region6: #{vae_forward.10} parent=0 // pred_check
    _
  $region7: #{vae_forward.10} parent=0 // pred_check_branch
    %22 = sbr.rel (0) target = $region9
  $region8: #{vae_forward.10} parent=0 // pred_region
    _
  $region9: #{vae_forward.10} parent=0 // pred_fallthru
    _
  // Predicated region
  $region10: #{vae_forward.10} parent=0 // pred_check
    _
  $region11: #{vae_forward.10} parent=0 // pred_check_branch
    %24 = sbr.rel (0) target = $region13
  $region12: #{vae_forward.10} parent=0 // pred_region
    _
  $region13: #{vae_forward.10} parent=0 // pred_fallthru
    _
  // Predicated region
  $region14: #{vae_forward.10} parent=0 // pred_check
    _
  $region15: #{vae_forward.10} parent=0 // pred_check_branch
    %26 = sbr.rel (0) target = $region17
  $region16: #{vae_forward.10} parent=0 // pred_region
    _
  $region17: #{vae_forward.10} parent=0 // pred_fallthru
    _
  // Predicated region
  $region18: #{vae_forward.10} parent=0 // pred_check
    _
  $region19: #{vae_forward.10} parent=0 // pred_check_branch
    %28 = sbr.rel (0) target = $region21
  $region20: #{vae_forward.10} parent=0 // pred_region
    _
  $region21: #{vae_forward.10} parent=0 // pred_fallthru
    _
  // Predicated region
  $region22: #{vae_forward.10} parent=0 // pred_check
    _
  $region23: #{vae_forward.10} parent=0 // pred_check_branch
    %30 = sbr.rel (0) target = $region25
  $region24: #{vae_forward.10} parent=0 // pred_region
    _
  $region25: #{vae_forward.10} parent=0 // pred_fallthru
    _
  // Predicated region
  $region26: #{vae_forward.10} parent=0 // pred_check
    _
  $region27: #{vae_forward.10} parent=0 // pred_check_branch
    %32 = sbr.rel (0) target = $region29
  $region28: #{vae_forward.10} parent=0 // pred_region
    _
  $region29: #{vae_forward.10} parent=0 // pred_fallthru
    _
  // Predicated region
  $region30: #{vae_forward.10} parent=0 // pred_check
    _
  $region31: #{vae_forward.10} parent=0 // pred_check_branch
    %34 = sbr.rel (0) target = $region33
  $region32: #{vae_forward.10} parent=0 // pred_region
    _
  $region33: #{vae_forward.10} parent=0 // pred_fallthru
    _
  // Predicated region
  $region34: #{vae_forward.10} parent=0 // pred_check
    _
  $region35: #{vae_forward.10} parent=0 // pred_check_branch
    %36 = sbr.rel (0) target = $region37
  $region36: #{vae_forward.10} parent=0 // pred_region
    _
  $region37: #{vae_forward.10} parent=0 // pred_fallthru
    _
  // Predicated region
  $region38: #{vae_forward.10} parent=0 // pred_check
    _
  $region39: #{vae_forward.10} parent=0 // pred_check_branch
    %38 = sbr.rel (0) target = $region41
  $region40: #{vae_forward.10} parent=0 // pred_region
    _
  $region41: #{vae_forward.10} parent=0 // pred_fallthru
    _
  // Predicated region
  $region42: #{vae_forward.10} parent=0 // pred_check
    _
  $region43: #{vae_forward.10} parent=0 // pred_check_branch
    %40 = sbr.rel (0) target = $region45
  $region44: #{vae_forward.10} parent=0 // pred_region
    _
  $region45: #{vae_forward.10} parent=0 // pred_fallthru
    _
  // Predicated region
  $region46: #{vae_forward.10} parent=0 // pred_check
    _
  $region47: #{vae_forward.10} parent=0 // pred_check_branch
    %42 = sbr.rel (0) target = $region49
  $region48: #{vae_forward.10} parent=0 // pred_region
    _
  $region49: #{vae_forward.10} parent=0 // pred_fallthru
    _
  %v43 = vld [vmem:[%s0] sm:$0xff]
  %v44 = vld [vmem:[%s0 + $0x8] sm:$0xff]
  %v45 = vld [vmem:[%s1] sm:$0xf]
  %v46 = vld [vmem:[%s1 + $0x4] sm:$0xf]
  %v47 = vld [vmem:[%s1 + $0x8] sm:$0xf]
  %v48 = vld [vmem:[%s1 + $0xc] sm:$0xf]
  %v49 = vld [vmem:[%s1 + $0x10] sm:$0xf]
  %v50 = vld [vmem:[%s1 + $0x14] sm:$0xf]
  %v51 = vld [vmem:[%s1 + $0x18] sm:$0xf]
  %v52 = vld [vmem:[%s1 + $0x1c] sm:$0xf]
  %v53 = vld [vmem:[%s1 + $0x20] sm:$0xf]
  %v54 = vld [vmem:[%s1 + $0x24] sm:$0xf]
  %v55 = vld [vmem:[%s1 + $0x28] sm:$0xf]
  %v56 = vld [vmem:[%s1 + $0x2c] sm:$0xf]
  %v57 = vld [vmem:[%s1 + $0x30] sm:$0xf]
  %v58 = vld [vmem:[%s1 + $0x34] sm:$0xf]
  %v59 = vld [vmem:[%s1 + $0x38] sm:$0xf]
  %v60 = vld [vmem:[%s1 + $0x3c] sm:$0xf]
  %v61 = vld [vmem:[%s1 + $0x40] sm:$0xf]
  %v62 = vld [vmem:[%s1 + $0x44] sm:$0xf]
  %v63 = vld [vmem:[%s1 + $0x48] sm:$0xf]
  %v64 = vld [vmem:[%s1 + $0x4c] sm:$0xf]
  %v65 = vld [vmem:[%s1 + $0x50] sm:$0xf]
  %v66 = vld [vmem:[%s1 + $0x54] sm:$0xf]
  %v67 = vld [vmem:[%s1 + $0x58] sm:$0xf]
  %v68 = vld [vmem:[%s1 + $0x5c] sm:$0xf]
  %v69 = vld [vmem:[%s1 + $0x60] sm:$0xf]
  %v70 = vld [vmem:[%s1 + $0x64] sm:$0xf]
  %v71 = vld [vmem:[%s1 + $0x68] sm:$0xf]
  %v72 = vld [vmem:[%s1 + $0x6c] sm:$0xf]
  %v73 = vld [vmem:[%s1 + $0x70] sm:$0xf]
  %v74 = vld [vmem:[%s1 + $0x74] sm:$0xf]
  %v75 = vld [vmem:[%s1 + $0x78] sm:$0xf]
  %v76 = vld [vmem:[%s1 + $0x7c] sm:$0xf]
  %v77 = vld [vmem:[%s1 + $0x80] sm:$0xf]
  %v78 = vld [vmem:[%s1 + $0x84] sm:$0xf]
  %v79 = vld [vmem:[%s1 + $0x88] sm:$0xf]
  %v80 = vld [vmem:[%s1 + $0x8c] sm:$0xf]
  %v81 = vld [vmem:[%s1 + $0x90] sm:$0xf]
  %v82 = vld [vmem:[%s1 + $0x94] sm:$0xf]
  %v83 = vld [vmem:[%s1 + $0x98] sm:$0xf]
  %v84 = vld [vmem:[%s1 + $0x9c] sm:$0xf]
  %v85 = vld [vmem:[%s1 + $0xa0] sm:$0xf]
  %v86 = vld [vmem:[%s1 + $0xa4] sm:$0xf]
  %v87 = vld [vmem:[%s1 + $0xa8] sm:$0xf]
  %v88 = vld [vmem:[%s1 + $0xac] sm:$0xf]
  %v89 = vld [vmem:[%s1 + $0xb0] sm:$0xf]
  %v90 = vld [vmem:[%s1 + $0xb4] sm:$0xf]
  %v91 = vld [vmem:[%s1 + $0xb8] sm:$0xf]
  %v92 = vld [vmem:[%s1 + $0xbc] sm:$0xf]
  %v93 = vld [vmem:[%s1 + $0xc0] sm:$0xf]
  %v94 = vld [vmem:[%s1 + $0xc4] sm:$0xf]
  %v95 = vld [vmem:[%s1 + $0xc8] sm:$0xf]
  %v96 = vld [vmem:[%s1 + $0xcc] sm:$0xf]
  %v97 = vld [vmem:[%s1 + $0xd0] sm:$0xf]
  %v98 = vld [vmem:[%s1 + $0xd4] sm:$0xf]
  %v99 = vld [vmem:[%s1 + $0xd8] sm:$0xf]
  %v100 = vld [vmem:[%s1 + $0xdc] sm:$0xf]
  %v101 = vld [vmem:[%s1 + $0xe0] sm:$0xf]
  %v102 = vld [vmem:[%s1 + $0xe4] sm:$0xf]
  %v103 = vld [vmem:[%s1 + $0xe8] sm:$0xf]
  %v104 = vld [vmem:[%s1 + $0xec] sm:$0xf]
  %v105 = vld [vmem:[%s1 + $0xf0] sm:$0xf]
  %v106 = vld [vmem:[%s1 + $0xf4] sm:$0xf]
  %v107 = vld [vmem:[%s1 + $0xf8] sm:$0xf]
  %v108 = vld [vmem:[%s1 + $0xfc] sm:$0xf]
  %v109 = vld [vmem:[%s2] sm:$0x1]
  %v111 = vperm.slane %v109, 0
  %v115 = vunpack.c.l.b16 %v43
  %v116 = vunpack.c.h.b16 %v43
  %v117 = vunpack.c.l.b16 %v44
  %v118 = vunpack.c.h.b16 %v44
  %v119 = vpack.c.b16 %v115, %v115
  %v120 = vpack.c.b16 %v116, %v116
  %v121 = vpack.c.b16 %v117, %v117
  %v122 = vpack.c.b16 %v118, %v118
  %v191 = vunpack.c.l.b16 %v45
  %v192 = vunpack.c.l.b16 %v46
  %v193 = vunpack.c.l.b16 %v47
  %v194 = vunpack.c.l.b16 %v48
  %v195 = vunpack.c.l.b16 %v49
  %v196 = vunpack.c.l.b16 %v50
  %v197 = vunpack.c.l.b16 %v51
  %v198 = vunpack.c.l.b16 %v52
  %v199 = vunpack.c.l.b16 %v53
  %v200 = vunpack.c.l.b16 %v54
  %v201 = vunpack.c.l.b16 %v55
  %v202 = vunpack.c.l.b16 %v56
  %v203 = vunpack.c.l.b16 %v57
  %v204 = vunpack.c.l.b16 %v58
  %v205 = vunpack.c.l.b16 %v59
  %v206 = vunpack.c.l.b16 %v60
  %v207 = vunpack.c.l.b16 %v61
  %v208 = vunpack.c.l.b16 %v62
  %v209 = vunpack.c.l.b16 %v63
  %v210 = vunpack.c.l.b16 %v64
  %v211 = vunpack.c.l.b16 %v65
  %v212 = vunpack.c.l.b16 %v66
  %v213 = vunpack.c.l.b16 %v67
  %v214 = vunpack.c.l.b16 %v68
  %v215 = vunpack.c.l.b16 %v69
  %v216 = vunpack.c.l.b16 %v70
  %v217 = vunpack.c.l.b16 %v71
  %v218 = vunpack.c.l.b16 %v72
  %v219 = vunpack.c.l.b16 %v73
  %v220 = vunpack.c.l.b16 %v74
  %v221 = vunpack.c.l.b16 %v75
  %v222 = vunpack.c.l.b16 %v76
  %v223 = vunpack.c.l.b16 %v77
  %v224 = vunpack.c.l.b16 %v78
  %v225 = vunpack.c.l.b16 %v79
  %v226 = vunpack.c.l.b16 %v80
  %v227 = vunpack.c.l.b16 %v81
  %v228 = vunpack.c.l.b16 %v82
  %v229 = vunpack.c.l.b16 %v83
  %v230 = vunpack.c.l.b16 %v84
  %v231 = vunpack.c.l.b16 %v85
  %v232 = vunpack.c.l.b16 %v86
  %v233 = vunpack.c.l.b16 %v87
  %v234 = vunpack.c.l.b16 %v88
  %v235 = vunpack.c.l.b16 %v89
  %v236 = vunpack.c.l.b16 %v90
  %v237 = vunpack.c.l.b16 %v91
  %v238 = vunpack.c.l.b16 %v92
  %v239 = vunpack.c.l.b16 %v93
  %v240 = vunpack.c.l.b16 %v94
  %v241 = vunpack.c.l.b16 %v95
  %v242 = vunpack.c.l.b16 %v96
  %v243 = vunpack.c.l.b16 %v97
  %v244 = vunpack.c.l.b16 %v98
  %v245 = vunpack.c.l.b16 %v99
  %v246 = vunpack.c.l.b16 %v100
  %v247 = vunpack.c.l.b16 %v101
  %v248 = vunpack.c.l.b16 %v102
  %v249 = vunpack.c.l.b16 %v103
  %v250 = vunpack.c.l.b16 %v104
  %v251 = vunpack.c.l.b16 %v105
  %v252 = vunpack.c.l.b16 %v106
  %v253 = vunpack.c.l.b16 %v107
  %v254 = vunpack.c.l.b16 %v108
  %v255 = vpack.c.b16 %v192, %v191
  %v256 = vpack.c.b16 %v194, %v193
  %v257 = vpack.c.b16 %v196, %v195
  %v258 = vpack.c.b16 %v198, %v197
  %v259 = vpack.c.b16 %v200, %v199
  %v260 = vpack.c.b16 %v202, %v201
  %v261 = vpack.c.b16 %v204, %v203
  %v262 = vpack.c.b16 %v206, %v205
  %v263 = vpack.c.b16 %v208, %v207
  %v264 = vpack.c.b16 %v210, %v209
  %v265 = vpack.c.b16 %v212, %v211
  %v266 = vpack.c.b16 %v214, %v213
  %v267 = vpack.c.b16 %v216, %v215
  %v268 = vpack.c.b16 %v218, %v217
  %v269 = vpack.c.b16 %v220, %v219
  %v270 = vpack.c.b16 %v222, %v221
  %v271 = vpack.c.b16 %v224, %v223
  %v272 = vpack.c.b16 %v226, %v225
  %v273 = vpack.c.b16 %v228, %v227
  %v274 = vpack.c.b16 %v230, %v229
  %v275 = vpack.c.b16 %v232, %v231
  %v276 = vpack.c.b16 %v234, %v233
  %v277 = vpack.c.b16 %v236, %v235
  %v278 = vpack.c.b16 %v238, %v237
  %v279 = vpack.c.b16 %v240, %v239
  %v280 = vpack.c.b16 %v242, %v241
  %v281 = vpack.c.b16 %v244, %v243
  %v282 = vpack.c.b16 %v246, %v245
  %v283 = vpack.c.b16 %v248, %v247
  %v284 = vpack.c.b16 %v250, %v249
  %v285 = vpack.c.b16 %v252, %v251
  %v286 = vpack.c.b16 %v254, %v253
  %319 = vmatpush.bf16.msra.mxu0 %v262
  %320 = vmatpush.bf16.msra.mxu0 %v261
  %321 = vmatpush.bf16.msra.mxu0 %v260
  %322 = vmatpush.bf16.msra.mxu0 %v259
  %323 = vmatpush.bf16.msra.mxu0 %v258
  %324 = vmatpush.bf16.msra.mxu0 %v257
  %325 = vmatpush.bf16.msra.mxu0 %v256
  %326 = vmatpush.bf16.msra.mxu0 %v255
  %327 = vmatmul.bf16.gmra.mxu0 %v119
  %v328 = vpop.f32.mrf.mxu0
  %v329 = vadd.f32 %v111, %v328
  %v330 = vpop.f32.mrf.mxu0
  %331 = vdwg.mxu0
  %332 = vmatpush.bf16.msra.mxu0 %v270
  %333 = vmatpush.bf16.msra.mxu0 %v269
  %334 = vmatpush.bf16.msra.mxu0 %v268
  %335 = vmatpush.bf16.msra.mxu0 %v267
  %336 = vmatpush.bf16.msra.mxu0 %v266
  %337 = vmatpush.bf16.msra.mxu0 %v265
  %338 = vmatpush.bf16.msra.mxu0 %v264
  %339 = vmatpush.bf16.msra.mxu0 %v263
  %340 = vmatmul.bf16.gmra.mxu0 %v120
  %v341 = vpop.f32.mrf.mxu0
  %v342 = vadd.f32 %v329, %v341
  %v343 = vpop.f32.mrf.mxu0
  %344 = vdwg.mxu0
  %345 = vmatpush.bf16.msra.mxu0 %v278
  %346 = vmatpush.bf16.msra.mxu0 %v277
  %347 = vmatpush.bf16.msra.mxu0 %v276
  %348 = vmatpush.bf16.msra.mxu0 %v275
  %349 = vmatpush.bf16.msra.mxu0 %v274
  %350 = vmatpush.bf16.msra.mxu0 %v273
  %351 = vmatpush.bf16.msra.mxu0 %v272
  %352 = vmatpush.bf16.msra.mxu0 %v271
  %353 = vmatmul.bf16.gmra.mxu0 %v121
  %v354 = vpop.f32.mrf.mxu0
  %v355 = vadd.f32 %v342, %v354
  %v356 = vpop.f32.mrf.mxu0
  %357 = vdwg.mxu0
  %358 = vmatpush.bf16.msra.mxu0 %v286
  %359 = vmatpush.bf16.msra.mxu0 %v285
  %360 = vmatpush.bf16.msra.mxu0 %v284
  %361 = vmatpush.bf16.msra.mxu0 %v283
  %362 = vmatpush.bf16.msra.mxu0 %v282
  %363 = vmatpush.bf16.msra.mxu0 %v281
  %364 = vmatpush.bf16.msra.mxu0 %v280
  %365 = vmatpush.bf16.msra.mxu0 %v279
  %366 = vmatmul.bf16.gmra.mxu0 %v122
  %v367 = vpop.f32.mrf.mxu0
  %v368 = vadd.f32 %v355, %v367
  %v369 = vpop.f32.mrf.mxu0
  %370 = vdwg.mxu0
  %v371 = vmax.f32 %v368, 0.0
  %v372 = vpack.c.bf16 %v371, %v371
  %v373 = vld [vmem:[%s3] sm:$0xf]
  %v374 = vld [vmem:[%s3 + $0x4] sm:$0xf]
  %v375 = vld [vmem:[%s3 + $0x8] sm:$0xf]
  %v376 = vld [vmem:[%s3 + $0xc] sm:$0xf]
  %v377 = vld [vmem:[%s3 + $0x10] sm:$0xf]
  %v378 = vld [vmem:[%s3 + $0x14] sm:$0xf]
  %v379 = vld [vmem:[%s3 + $0x18] sm:$0xf]
  %v380 = vld [vmem:[%s3 + $0x1c] sm:$0xf]
  %v381 = vld [vmem:[%s3 + $0x20] sm:$0xf]
  %v382 = vld [vmem:[%s3 + $0x24] sm:$0xf]
  %v383 = vld [vmem:[%s3 + $0x28] sm:$0xf]
  %v384 = vld [vmem:[%s3 + $0x2c] sm:$0xf]
  %v385 = vld [vmem:[%s3 + $0x30] sm:$0xf]
  %v386 = vld [vmem:[%s3 + $0x34] sm:$0xf]
  %v387 = vld [vmem:[%s3 + $0x38] sm:$0xf]
  %v388 = vld [vmem:[%s3 + $0x3c] sm:$0xf]
  %v389 = vld [vmem:[%s4] sm:$0x1]
  %v391 = vperm.slane %v389, 0
  %v409 = vunpack.c.l.b16 %v373
  %v410 = vunpack.c.l.b16 %v374
  %v411 = vunpack.c.l.b16 %v375
  %v412 = vunpack.c.l.b16 %v376
  %v413 = vunpack.c.l.b16 %v377
  %v414 = vunpack.c.l.b16 %v378
  %v415 = vunpack.c.l.b16 %v379
  %v416 = vunpack.c.l.b16 %v380
  %v417 = vunpack.c.l.b16 %v381
  %v418 = vunpack.c.l.b16 %v382
  %v419 = vunpack.c.l.b16 %v383
  %v420 = vunpack.c.l.b16 %v384
  %v421 = vunpack.c.l.b16 %v385
  %v422 = vunpack.c.l.b16 %v386
  %v423 = vunpack.c.l.b16 %v387
  %v424 = vunpack.c.l.b16 %v388
  %v425 = vpack.c.b16 %v410, %v409
  %v426 = vpack.c.b16 %v412, %v411
  %v427 = vpack.c.b16 %v414, %v413
  %v428 = vpack.c.b16 %v416, %v415
  %v429 = vpack.c.b16 %v418, %v417
  %v430 = vpack.c.b16 %v420, %v419
  %v431 = vpack.c.b16 %v422, %v421
  %v432 = vpack.c.b16 %v424, %v423
  %441 = vmatpush.bf16.msra.mxu0 %v432
  %442 = vmatpush.bf16.msra.mxu0 %v431
  %443 = vmatpush.bf16.msra.mxu0 %v430
  %444 = vmatpush.bf16.msra.mxu0 %v429
  %445 = vmatpush.bf16.msra.mxu0 %v428
  %446 = vmatpush.bf16.msra.mxu0 %v427
  %447 = vmatpush.bf16.msra.mxu0 %v426
  %448 = vmatpush.bf16.msra.mxu0 %v425
  %449 = vmatmul.bf16.gmra.mxu0 %v372
  %v450 = vpop.f32.mrf.mxu0
  %v451 = vadd.f32 %v391, %v450
  %v452 = vpop.f32.mrf.mxu0
  %453 = vdwg.mxu0
  %v454 = vpack.c.bf16 %v451, %v451
  %v455 = vld [vmem:[%s5] sm:$0xff]
  %v456 = vld [vmem:[%s5 + $0x8] sm:$0xff]
  %v457 = vld [vmem:[%s5 + $0x10] sm:$0xff]
  %v458 = vld [vmem:[%s5 + $0x18] sm:$0xff]
  %v459 = vld [vmem:[%s5 + $0x20] sm:$0xff]
  %v460 = vld [vmem:[%s5 + $0x28] sm:$0xff]
  %v461 = vld [vmem:[%s5 + $0x30] sm:$0xff]
  %v462 = vld [vmem:[%s5 + $0x38] sm:$0xff]
  %v463 = vld [vmem:[%s5 + $0x40] sm:$0xff]
  %v464 = vld [vmem:[%s5 + $0x48] sm:$0xff]
  %v465 = vld [vmem:[%s5 + $0x50] sm:$0xff]
  %v466 = vld [vmem:[%s5 + $0x58] sm:$0xff]
  %v467 = vld [vmem:[%s5 + $0x60] sm:$0xff]
  %v468 = vld [vmem:[%s5 + $0x68] sm:$0xff]
  %v469 = vld [vmem:[%s5 + $0x70] sm:$0xff]
  %v470 = vld [vmem:[%s5 + $0x78] sm:$0xff]
  %v471 = vld [vmem:[%s6] sm:$0x3]
  %v473 = vperm.slane %v471, 0
  %v474 = vperm.slane %v471, 1
  %v493 = vunpack.c.l.b16 %v455
  %v494 = vunpack.c.h.b16 %v455
  %v495 = vunpack.c.l.b16 %v456
  %v496 = vunpack.c.h.b16 %v456
  %v497 = vunpack.c.l.b16 %v457
  %v498 = vunpack.c.h.b16 %v457
  %v499 = vunpack.c.l.b16 %v458
  %v500 = vunpack.c.h.b16 %v458
  %v501 = vunpack.c.l.b16 %v459
  %v502 = vunpack.c.h.b16 %v459
  %v503 = vunpack.c.l.b16 %v460
  %v504 = vunpack.c.h.b16 %v460
  %v505 = vunpack.c.l.b16 %v461
  %v506 = vunpack.c.h.b16 %v461
  %v507 = vunpack.c.l.b16 %v462
  %v508 = vunpack.c.h.b16 %v462
  %v509 = vunpack.c.l.b16 %v463
  %v510 = vunpack.c.h.b16 %v463
  %v511 = vunpack.c.l.b16 %v464
  %v512 = vunpack.c.h.b16 %v464
  %v513 = vunpack.c.l.b16 %v465
  %v514 = vunpack.c.h.b16 %v465
  %v515 = vunpack.c.l.b16 %v466
  %v516 = vunpack.c.h.b16 %v466
  %v517 = vunpack.c.l.b16 %v467
  %v518 = vunpack.c.h.b16 %v467
  %v519 = vunpack.c.l.b16 %v468
  %v520 = vunpack.c.h.b16 %v468
  %v521 = vunpack.c.l.b16 %v469
  %v522 = vunpack.c.h.b16 %v469
  %v523 = vunpack.c.l.b16 %v470
  %v524 = vunpack.c.h.b16 %v470
  %v525 = vpack.c.b16 %v495, %v493
  %v526 = vpack.c.b16 %v496, %v494
  %v527 = vpack.c.b16 %v499, %v497
  %v528 = vpack.c.b16 %v500, %v498
  %v529 = vpack.c.b16 %v503, %v501
  %v530 = vpack.c.b16 %v504, %v502
  %v531 = vpack.c.b16 %v507, %v505
  %v532 = vpack.c.b16 %v508, %v506
  %v533 = vpack.c.b16 %v511, %v509
  %v534 = vpack.c.b16 %v512, %v510
  %v535 = vpack.c.b16 %v515, %v513
  %v536 = vpack.c.b16 %v516, %v514
  %v537 = vpack.c.b16 %v519, %v517
  %v538 = vpack.c.b16 %v520, %v518
  %v539 = vpack.c.b16 %v523, %v521
  %v540 = vpack.c.b16 %v524, %v522
  %557 = vmatpush.bf16.msra.mxu0 %v539
  %558 = vmatpush.bf16.msra.mxu0 %v537
  %559 = vmatpush.bf16.msra.mxu0 %v535
  %560 = vmatpush.bf16.msra.mxu0 %v533
  %561 = vmatpush.bf16.msra.mxu0 %v531
  %562 = vmatpush.bf16.msra.mxu0 %v529
  %563 = vmatpush.bf16.msra.mxu0 %v527
  %564 = vmatpush.bf16.msra.mxu0 %v525
  %565 = vmatmul.bf16.gmra.mxu0 %v454
  %v566 = vpop.f32.mrf.mxu0
  %v567 = vadd.f32 %v473, %v566
  %v568 = vpop.f32.mrf.mxu0
  %569 = vdwg.mxu0
  %570 = vmatpush.bf16.msra.mxu0 %v540
  %571 = vmatpush.bf16.msra.mxu0 %v538
  %572 = vmatpush.bf16.msra.mxu0 %v536
  %573 = vmatpush.bf16.msra.mxu0 %v534
  %574 = vmatpush.bf16.msra.mxu0 %v532
  %575 = vmatpush.bf16.msra.mxu0 %v530
  %576 = vmatpush.bf16.msra.mxu0 %v528
  %577 = vmatpush.bf16.msra.mxu0 %v526
  %578 = vmatmul.bf16.gmra.mxu0 %v454
  %v579 = vpop.f32.mrf.mxu0
  %v580 = vadd.f32 %v474, %v579
  %v581 = vpop.f32.mrf.mxu0
  %582 = vdwg.mxu0
  %583 = vst [vmem:[%s12] sm:$0xff] %v567
  %584 = vst [vmem:[%s12 + $0x8] sm:$0xff] %v580
  %v585 = vld [vmem:[%s7] sm:$0xff]
  %v586 = vmul.f32 %v580, 0.5
  %v587 = vmul.f32 %v586, 1.442695
  %v588 = vpow.pop %v587
  %v589 = vmul.f32 %v585, %v588
  %v590 = vadd.f32 %v567, %v589
  %v591 = vpack.c.bf16 %v590, %v590
  %v592 = vld [vmem:[%s8] sm:$0xf]
  %v593 = vld [vmem:[%s8 + $0x4] sm:$0xf]
  %v594 = vld [vmem:[%s8 + $0x8] sm:$0xf]
  %v595 = vld [vmem:[%s8 + $0xc] sm:$0xf]
  %v596 = vld [vmem:[%s8 + $0x10] sm:$0xf]
  %v597 = vld [vmem:[%s8 + $0x14] sm:$0xf]
  %v598 = vld [vmem:[%s8 + $0x18] sm:$0xf]
  %v599 = vld [vmem:[%s8 + $0x1c] sm:$0xf]
  %v600 = vld [vmem:[%s8 + $0x20] sm:$0xf]
  %v601 = vld [vmem:[%s8 + $0x24] sm:$0xf]
  %v602 = vld [vmem:[%s8 + $0x28] sm:$0xf]
  %v603 = vld [vmem:[%s8 + $0x2c] sm:$0xf]
  %v604 = vld [vmem:[%s8 + $0x30] sm:$0xf]
  %v605 = vld [vmem:[%s8 + $0x34] sm:$0xf]
  %v606 = vld [vmem:[%s8 + $0x38] sm:$0xf]
  %v607 = vld [vmem:[%s8 + $0x3c] sm:$0xf]
  %v608 = vld [vmem:[%s9] sm:$0x1]
  %v610 = vperm.slane %v608, 0
  %v628 = vunpack.c.l.b16 %v592
  %v629 = vunpack.c.l.b16 %v593
  %v630 = vunpack.c.l.b16 %v594
  %v631 = vunpack.c.l.b16 %v595
  %v632 = vunpack.c.l.b16 %v596
  %v633 = vunpack.c.l.b16 %v597
  %v634 = vunpack.c.l.b16 %v598
  %v635 = vunpack.c.l.b16 %v599
  %v636 = vunpack.c.l.b16 %v600
  %v637 = vunpack.c.l.b16 %v601
  %v638 = vunpack.c.l.b16 %v602
  %v639 = vunpack.c.l.b16 %v603
  %v640 = vunpack.c.l.b16 %v604
  %v641 = vunpack.c.l.b16 %v605
  %v642 = vunpack.c.l.b16 %v606
  %v643 = vunpack.c.l.b16 %v607
  %v644 = vpack.c.b16 %v629, %v628
  %v645 = vpack.c.b16 %v631, %v630
  %v646 = vpack.c.b16 %v633, %v632
  %v647 = vpack.c.b16 %v635, %v634
  %v648 = vpack.c.b16 %v637, %v636
  %v649 = vpack.c.b16 %v639, %v638
  %v650 = vpack.c.b16 %v641, %v640
  %v651 = vpack.c.b16 %v643, %v642
  %660 = vmatpush.bf16.msra.mxu0 %v651
  %661 = vmatpush.bf16.msra.mxu0 %v650
  %662 = vmatpush.bf16.msra.mxu0 %v649
  %663 = vmatpush.bf16.msra.mxu0 %v648
  %664 = vmatpush.bf16.msra.mxu0 %v647
  %665 = vmatpush.bf16.msra.mxu0 %v646
  %666 = vmatpush.bf16.msra.mxu0 %v645
  %667 = vmatpush.bf16.msra.mxu0 %v644
  %668 = vmatmul.bf16.gmra.mxu0 %v591
  %v669 = vpop.f32.mrf.mxu0
  %v670 = vadd.f32 %v610, %v669
  %v671 = vpop.f32.mrf.mxu0
  %672 = vdwg.mxu0
  %v673 = vpack.c.bf16 %v670, %v670
  %v674 = vld [vmem:[%s10] sm:$0xff]
  %v675 = vld [vmem:[%s10 + $0x8] sm:$0xff]
  %v676 = vld [vmem:[%s10 + $0x10] sm:$0xff]
  %v677 = vld [vmem:[%s10 + $0x18] sm:$0xff]
  %v678 = vld [vmem:[%s10 + $0x20] sm:$0xff]
  %v679 = vld [vmem:[%s10 + $0x28] sm:$0xff]
  %v680 = vld [vmem:[%s10 + $0x30] sm:$0xff]
  %v681 = vld [vmem:[%s10 + $0x38] sm:$0xff]
  %v682 = vld [vmem:[%s10 + $0x40] sm:$0xff]
  %v683 = vld [vmem:[%s10 + $0x48] sm:$0xff]
  %v684 = vld [vmem:[%s10 + $0x50] sm:$0xff]
  %v685 = vld [vmem:[%s10 + $0x58] sm:$0xff]
  %v686 = vld [vmem:[%s10 + $0x60] sm:$0xff]
  %v687 = vld [vmem:[%s10 + $0x68] sm:$0xff]
  %v688 = vld [vmem:[%s10 + $0x70] sm:$0xff]
  %v689 = vld [vmem:[%s10 + $0x78] sm:$0xff]
  %v690 = vld [vmem:[%s10 + $0x80] sm:$0xff]
  %v691 = vld [vmem:[%s10 + $0x88] sm:$0xff]
  %v692 = vld [vmem:[%s10 + $0x90] sm:$0xff]
  %v693 = vld [vmem:[%s10 + $0x98] sm:$0xff]
  %v694 = vld [vmem:[%s10 + $0xa0] sm:$0xff]
  %v695 = vld [vmem:[%s10 + $0xa8] sm:$0xff]
  %v696 = vld [vmem:[%s10 + $0xb0] sm:$0xff]
  %v697 = vld [vmem:[%s10 + $0xb8] sm:$0xff]
  %v698 = vld [vmem:[%s10 + $0xc0] sm:$0xff]
  %v699 = vld [vmem:[%s10 + $0xc8] sm:$0xff]
  %v700 = vld [vmem:[%s10 + $0xd0] sm:$0xff]
  %v701 = vld [vmem:[%s10 + $0xd8] sm:$0xff]
  %v702 = vld [vmem:[%s10 + $0xe0] sm:$0xff]
  %v703 = vld [vmem:[%s10 + $0xe8] sm:$0xff]
  %v704 = vld [vmem:[%s10 + $0xf0] sm:$0xff]
  %v705 = vld [vmem:[%s10 + $0xf8] sm:$0xff]
  %v706 = vld [vmem:[%s10 + $0x100] sm:$0xff]
  %v707 = vld [vmem:[%s10 + $0x108] sm:$0xff]
  %v708 = vld [vmem:[%s10 + $0x110] sm:$0xff]
  %v709 = vld [vmem:[%s10 + $0x118] sm:$0xff]
  %v710 = vld [vmem:[%s10 + $0x120] sm:$0xff]
  %v711 = vld [vmem:[%s10 + $0x128] sm:$0xff]
  %v712 = vld [vmem:[%s10 + $0x130] sm:$0xff]
  %v713 = vld [vmem:[%s10 + $0x138] sm:$0xff]
  %v714 = vld [vmem:[%s10 + $0x140] sm:$0xff]
  %v715 = vld [vmem:[%s10 + $0x148] sm:$0xff]
  %v716 = vld [vmem:[%s10 + $0x150] sm:$0xff]
  %v717 = vld [vmem:[%s10 + $0x158] sm:$0xff]
  %v718 = vld [vmem:[%s10 + $0x160] sm:$0xff]
  %v719 = vld [vmem:[%s10 + $0x168] sm:$0xff]
  %v720 = vld [vmem:[%s10 + $0x170] sm:$0xff]
  %v721 = vld [vmem:[%s10 + $0x178] sm:$0xff]
  %v722 = vld [vmem:[%s10 + $0x180] sm:$0xff]
  %v723 = vld [vmem:[%s10 + $0x188] sm:$0xff]
  %v724 = vld [vmem:[%s10 + $0x190] sm:$0xff]
  %v725 = vld [vmem:[%s10 + $0x198] sm:$0xff]
  %v726 = vld [vmem:[%s10 + $0x1a0] sm:$0xff]
  %v727 = vld [vmem:[%s10 + $0x1a8] sm:$0xff]
  %v728 = vld [vmem:[%s10 + $0x1b0] sm:$0xff]
  %v729 = vld [vmem:[%s10 + $0x1b8] sm:$0xff]
  %v730 = vld [vmem:[%s10 + $0x1c0] sm:$0xff]
  %v731 = vld [vmem:[%s10 + $0x1c8] sm:$0xff]
  %v732 = vld [vmem:[%s10 + $0x1d0] sm:$0xff]
  %v733 = vld [vmem:[%s10 + $0x1d8] sm:$0xff]
  %v734 = vld [vmem:[%s10 + $0x1e0] sm:$0xff]
  %v735 = vld [vmem:[%s10 + $0x1e8] sm:$0xff]
  %v736 = vld [vmem:[%s10 + $0x1f0] sm:$0xff]
  %v737 = vld [vmem:[%s10 + $0x1f8] sm:$0xff]
  %v738 = vld [vmem:[%s11] sm:$0xff]
  %v740 = vperm.slane %v738, 0
  %v741 = vperm.slane %v738, 1
  %v742 = vperm.slane %v738, 2
  %v743 = vperm.slane %v738, 3
  %v744 = vperm.slane %v738, 4
  %v745 = vperm.slane %v738, 5
  %v746 = vperm.slane %v738, 6
  %v747 = vperm.slane %v738, 7
  %v820 = vunpack.c.l.b16 %v674
  %v821 = vunpack.c.h.b16 %v674
  %v822 = vunpack.c.l.b16 %v675
  %v823 = vunpack.c.h.b16 %v675
  %v824 = vunpack.c.l.b16 %v676
  %v825 = vunpack.c.h.b16 %v676
  %v826 = vunpack.c.l.b16 %v677
  %v827 = vunpack.c.h.b16 %v677
  %v828 = vunpack.c.l.b16 %v678
  %v829 = vunpack.c.h.b16 %v678
  %v830 = vunpack.c.l.b16 %v679
  %v831 = vunpack.c.h.b16 %v679
  %v832 = vunpack.c.l.b16 %v680
  %v833 = vunpack.c.h.b16 %v680
  %v834 = vunpack.c.l.b16 %v681
  %v835 = vunpack.c.h.b16 %v681
  %v836 = vunpack.c.l.b16 %v682
  %v837 = vunpack.c.h.b16 %v682
  %v838 = vunpack.c.l.b16 %v683
  %v839 = vunpack.c.h.b16 %v683
  %v840 = vunpack.c.l.b16 %v684
  %v841 = vunpack.c.h.b16 %v684
  %v842 = vunpack.c.l.b16 %v685
  %v843 = vunpack.c.h.b16 %v685
  %v844 = vunpack.c.l.b16 %v686
  %v845 = vunpack.c.h.b16 %v686
  %v846 = vunpack.c.l.b16 %v687
  %v847 = vunpack.c.h.b16 %v687
  %v848 = vunpack.c.l.b16 %v688
  %v849 = vunpack.c.h.b16 %v688
  %v850 = vunpack.c.l.b16 %v689
  %v851 = vunpack.c.h.b16 %v689
  %v852 = vunpack.c.l.b16 %v690
  %v853 = vunpack.c.h.b16 %v690
  %v854 = vunpack.c.l.b16 %v691
  %v855 = vunpack.c.h.b16 %v691
  %v856 = vunpack.c.l.b16 %v692
  %v857 = vunpack.c.h.b16 %v692
  %v858 = vunpack.c.l.b16 %v693
  %v859 = vunpack.c.h.b16 %v693
  %v860 = vunpack.c.l.b16 %v694
  %v861 = vunpack.c.h.b16 %v694
  %v862 = vunpack.c.l.b16 %v695
  %v863 = vunpack.c.h.b16 %v695
  %v864 = vunpack.c.l.b16 %v696
  %v865 = vunpack.c.h.b16 %v696
  %v866 = vunpack.c.l.b16 %v697
  %v867 = vunpack.c.h.b16 %v697
  %v868 = vunpack.c.l.b16 %v698
  %v869 = vunpack.c.h.b16 %v698
  %v870 = vunpack.c.l.b16 %v699
  %v871 = vunpack.c.h.b16 %v699
  %v872 = vunpack.c.l.b16 %v700
  %v873 = vunpack.c.h.b16 %v700
  %v874 = vunpack.c.l.b16 %v701
  %v875 = vunpack.c.h.b16 %v701
  %v876 = vunpack.c.l.b16 %v702
  %v877 = vunpack.c.h.b16 %v702
  %v878 = vunpack.c.l.b16 %v703
  %v879 = vunpack.c.h.b16 %v703
  %v880 = vunpack.c.l.b16 %v704
  %v881 = vunpack.c.h.b16 %v704
  %v882 = vunpack.c.l.b16 %v705
  %v883 = vunpack.c.h.b16 %v705
  %v884 = vunpack.c.l.b16 %v706
  %v885 = vunpack.c.h.b16 %v706
  %v886 = vunpack.c.l.b16 %v707
  %v887 = vunpack.c.h.b16 %v707
  %v888 = vunpack.c.l.b16 %v708
  %v889 = vunpack.c.h.b16 %v708
  %v890 = vunpack.c.l.b16 %v709
  %v891 = vunpack.c.h.b16 %v709
  %v892 = vunpack.c.l.b16 %v710
  %v893 = vunpack.c.h.b16 %v710
  %v894 = vunpack.c.l.b16 %v711
  %v895 = vunpack.c.h.b16 %v711
  %v896 = vunpack.c.l.b16 %v712
  %v897 = vunpack.c.h.b16 %v712
  %v898 = vunpack.c.l.b16 %v713
  %v899 = vunpack.c.h.b16 %v713
  %v900 = vunpack.c.l.b16 %v714
  %v901 = vunpack.c.h.b16 %v714
  %v902 = vunpack.c.l.b16 %v715
  %v903 = vunpack.c.h.b16 %v715
  %v904 = vunpack.c.l.b16 %v716
  %v905 = vunpack.c.h.b16 %v716
  %v906 = vunpack.c.l.b16 %v717
  %v907 = vunpack.c.h.b16 %v717
  %v908 = vunpack.c.l.b16 %v718
  %v909 = vunpack.c.h.b16 %v718
  %v910 = vunpack.c.l.b16 %v719
  %v911 = vunpack.c.h.b16 %v719
  %v912 = vunpack.c.l.b16 %v720
  %v913 = vunpack.c.h.b16 %v720
  %v914 = vunpack.c.l.b16 %v721
  %v915 = vunpack.c.h.b16 %v721
  %v916 = vunpack.c.l.b16 %v722
  %v917 = vunpack.c.h.b16 %v722
  %v918 = vunpack.c.l.b16 %v723
  %v919 = vunpack.c.h.b16 %v723
  %v920 = vunpack.c.l.b16 %v724
  %v921 = vunpack.c.h.b16 %v724
  %v922 = vunpack.c.l.b16 %v725
  %v923 = vunpack.c.h.b16 %v725
  %v924 = vunpack.c.l.b16 %v726
  %v925 = vunpack.c.h.b16 %v726
  %v926 = vunpack.c.l.b16 %v727
  %v927 = vunpack.c.h.b16 %v727
  %v928 = vunpack.c.l.b16 %v728
  %v929 = vunpack.c.h.b16 %v728
  %v930 = vunpack.c.l.b16 %v729
  %v931 = vunpack.c.h.b16 %v729
  %v932 = vunpack.c.l.b16 %v730
  %v933 = vunpack.c.h.b16 %v730
  %v934 = vunpack.c.l.b16 %v731
  %v935 = vunpack.c.h.b16 %v731
  %v936 = vunpack.c.l.b16 %v732
  %v937 = vunpack.c.h.b16 %v732
  %v938 = vunpack.c.l.b16 %v733
  %v939 = vunpack.c.h.b16 %v733
  %v940 = vunpack.c.l.b16 %v734
  %v941 = vunpack.c.h.b16 %v734
  %v942 = vunpack.c.l.b16 %v735
  %v943 = vunpack.c.h.b16 %v735
  %v944 = vunpack.c.l.b16 %v736
  %v945 = vunpack.c.h.b16 %v736
  %v946 = vunpack.c.l.b16 %v737
  %v947 = vunpack.c.h.b16 %v737
  %v948 = vpack.c.b16 %v828, %v820
  %v949 = vpack.c.b16 %v829, %v821
  %v950 = vpack.c.b16 %v830, %v822
  %v951 = vpack.c.b16 %v831, %v823
  %v952 = vpack.c.b16 %v832, %v824
  %v953 = vpack.c.b16 %v833, %v825
  %v954 = vpack.c.b16 %v834, %v826
  %v955 = vpack.c.b16 %v835, %v827
  %v956 = vpack.c.b16 %v844, %v836
  %v957 = vpack.c.b16 %v845, %v837
  %v958 = vpack.c.b16 %v846, %v838
  %v959 = vpack.c.b16 %v847, %v839
  %v960 = vpack.c.b16 %v848, %v840
  %v961 = vpack.c.b16 %v849, %v841
  %v962 = vpack.c.b16 %v850, %v842
  %v963 = vpack.c.b16 %v851, %v843
  %v964 = vpack.c.b16 %v860, %v852
  %v965 = vpack.c.b16 %v861, %v853
  %v966 = vpack.c.b16 %v862, %v854
  %v967 = vpack.c.b16 %v863, %v855
  %v968 = vpack.c.b16 %v864, %v856
  %v969 = vpack.c.b16 %v865, %v857
  %v970 = vpack.c.b16 %v866, %v858
  %v971 = vpack.c.b16 %v867, %v859
  %v972 = vpack.c.b16 %v876, %v868
  %v973 = vpack.c.b16 %v877, %v869
  %v974 = vpack.c.b16 %v878, %v870
  %v975 = vpack.c.b16 %v879, %v871
  %v976 = vpack.c.b16 %v880, %v872
  %v977 = vpack.c.b16 %v881, %v873
  %v978 = vpack.c.b16 %v882, %v874
  %v979 = vpack.c.b16 %v883, %v875
  %v980 = vpack.c.b16 %v892, %v884
  %v981 = vpack.c.b16 %v893, %v885
  %v982 = vpack.c.b16 %v894, %v886
  %v983 = vpack.c.b16 %v895, %v887
  %v984 = vpack.c.b16 %v896, %v888
  %v985 = vpack.c.b16 %v897, %v889
  %v986 = vpack.c.b16 %v898, %v890
  %v987 = vpack.c.b16 %v899, %v891
  %v988 = vpack.c.b16 %v908, %v900
  %v989 = vpack.c.b16 %v909, %v901
  %v990 = vpack.c.b16 %v910, %v902
  %v991 = vpack.c.b16 %v911, %v903
  %v992 = vpack.c.b16 %v912, %v904
  %v993 = vpack.c.b16 %v913, %v905
  %v994 = vpack.c.b16 %v914, %v906
  %v995 = vpack.c.b16 %v915, %v907
  %v996 = vpack.c.b16 %v924, %v916
  %v997 = vpack.c.b16 %v925, %v917
  %v998 = vpack.c.b16 %v926, %v918
  %v999 = vpack.c.b16 %v927, %v919
  %v1000 = vpack.c.b16 %v928, %v920
  %v1001 = vpack.c.b16 %v929, %v921
  %v1002 = vpack.c.b16 %v930, %v922
  %v1003 = vpack.c.b16 %v931, %v923
  %v1004 = vpack.c.b16 %v940, %v932
  %v1005 = vpack.c.b16 %v941, %v933
  %v1006 = vpack.c.b16 %v942, %v934
  %v1007 = vpack.c.b16 %v943, %v935
  %v1008 = vpack.c.b16 %v944, %v936
  %v1009 = vpack.c.b16 %v945, %v937
  %v1010 = vpack.c.b16 %v946, %v938
  %v1011 = vpack.c.b16 %v947, %v939
  %1076 = vmatpush.bf16.msra.mxu0 %v1004
  %1077 = vmatpush.bf16.msra.mxu0 %v996
  %1078 = vmatpush.bf16.msra.mxu0 %v988
  %1079 = vmatpush.bf16.msra.mxu0 %v980
  %1080 = vmatpush.bf16.msra.mxu0 %v972
  %1081 = vmatpush.bf16.msra.mxu0 %v964
  %1082 = vmatpush.bf16.msra.mxu0 %v956
  %1083 = vmatpush.bf16.msra.mxu0 %v948
  %1084 = vmatmul.bf16.gmra.mxu0 %v673
  %v1085 = vpop.f32.mrf.mxu0
  %v1086 = vadd.f32 %v740, %v1085
  %v1087 = vpop.f32.mrf.mxu0
  %1088 = vdwg.mxu0
  %1089 = vmatpush.bf16.msra.mxu0 %v1005
  %1090 = vmatpush.bf16.msra.mxu0 %v997
  %1091 = vmatpush.bf16.msra.mxu0 %v989
  %1092 = vmatpush.bf16.msra.mxu0 %v981
  %1093 = vmatpush.bf16.msra.mxu0 %v973
  %1094 = vmatpush.bf16.msra.mxu0 %v965
  %1095 = vmatpush.bf16.msra.mxu0 %v957
  %1096 = vmatpush.bf16.msra.mxu0 %v949
  %1097 = vmatmul.bf16.gmra.mxu0 %v673
  %v1098 = vpop.f32.mrf.mxu0
  %v1099 = vadd.f32 %v741, %v1098
  %v1100 = vpop.f32.mrf.mxu0
  %1101 = vdwg.mxu0
  %1102 = vmatpush.bf16.msra.mxu0 %v1006
  %1103 = vmatpush.bf16.msra.mxu0 %v998
  %1104 = vmatpush.bf16.msra.mxu0 %v990
  %1105 = vmatpush.bf16.msra.mxu0 %v982
  %1106 = vmatpush.bf16.msra.mxu0 %v974
  %1107 = vmatpush.bf16.msra.mxu0 %v966
  %1108 = vmatpush.bf16.msra.mxu0 %v958
  %1109 = vmatpush.bf16.msra.mxu0 %v950
  %1110 = vmatmul.bf16.gmra.mxu0 %v673
  %v1111 = vpop.f32.mrf.mxu0
  %v1112 = vadd.f32 %v742, %v1111
  %v1113 = vpop.f32.mrf.mxu0
  %1114 = vdwg.mxu0
  %1115 = vmatpush.bf16.msra.mxu0 %v1007
  %1116 = vmatpush.bf16.msra.mxu0 %v999
  %1117 = vmatpush.bf16.msra.mxu0 %v991
  %1118 = vmatpush.bf16.msra.mxu0 %v983
  %1119 = vmatpush.bf16.msra.mxu0 %v975
  %1120 = vmatpush.bf16.msra.mxu0 %v967
  %1121 = vmatpush.bf16.msra.mxu0 %v959
  %1122 = vmatpush.bf16.msra.mxu0 %v951
  %1123 = vmatmul.bf16.gmra.mxu0 %v673
  %v1124 = vpop.f32.mrf.mxu0
  %v1125 = vadd.f32 %v743, %v1124
  %v1126 = vpop.f32.mrf.mxu0
  %1127 = vdwg.mxu0
  %1128 = vmatpush.bf16.msra.mxu0 %v1008
  %1129 = vmatpush.bf16.msra.mxu0 %v1000
  %1130 = vmatpush.bf16.msra.mxu0 %v992
  %1131 = vmatpush.bf16.msra.mxu0 %v984
  %1132 = vmatpush.bf16.msra.mxu0 %v976
  %1133 = vmatpush.bf16.msra.mxu0 %v968
  %1134 = vmatpush.bf16.msra.mxu0 %v960
  %1135 = vmatpush.bf16.msra.mxu0 %v952
  %1136 = vmatmul.bf16.gmra.mxu0 %v673
  %v1137 = vpop.f32.mrf.mxu0
  %v1138 = vadd.f32 %v744, %v1137
  %v1139 = vpop.f32.mrf.mxu0
  %1140 = vdwg.mxu0
  %1141 = vmatpush.bf16.msra.mxu0 %v1009
  %1142 = vmatpush.bf16.msra.mxu0 %v1001
  %1143 = vmatpush.bf16.msra.mxu0 %v993
  %1144 = vmatpush.bf16.msra.mxu0 %v985
  %1145 = vmatpush.bf16.msra.mxu0 %v977
  %1146 = vmatpush.bf16.msra.mxu0 %v969
  %1147 = vmatpush.bf16.msra.mxu0 %v961
  %1148 = vmatpush.bf16.msra.mxu0 %v953
  %1149 = vmatmul.bf16.gmra.mxu0 %v673
  %v1150 = vpop.f32.mrf.mxu0
  %v1151 = vadd.f32 %v745, %v1150
  %v1152 = vpop.f32.mrf.mxu0
  %1153 = vdwg.mxu0
  %1154 = vmatpush.bf16.msra.mxu0 %v1010
  %1155 = vmatpush.bf16.msra.mxu0 %v1002
  %1156 = vmatpush.bf16.msra.mxu0 %v994
  %1157 = vmatpush.bf16.msra.mxu0 %v986
  %1158 = vmatpush.bf16.msra.mxu0 %v978
  %1159 = vmatpush.bf16.msra.mxu0 %v970
  %1160 = vmatpush.bf16.msra.mxu0 %v962
  %1161 = vmatpush.bf16.msra.mxu0 %v954
  %1162 = vmatmul.bf16.gmra.mxu0 %v673
  %v1163 = vpop.f32.mrf.mxu0
  %v1164 = vadd.f32 %v746, %v1163
  %v1165 = vpop.f32.mrf.mxu0
  %1166 = vdwg.mxu0
  %1167 = vmatpush.bf16.msra.mxu0 %v1011
  %1168 = vmatpush.bf16.msra.mxu0 %v1003
  %1169 = vmatpush.bf16.msra.mxu0 %v995
  %1170 = vmatpush.bf16.msra.mxu0 %v987
  %1171 = vmatpush.bf16.msra.mxu0 %v979
  %1172 = vmatpush.bf16.msra.mxu0 %v971
  %1173 = vmatpush.bf16.msra.mxu0 %v963
  %1174 = vmatpush.bf16.msra.mxu0 %v955
  %1175 = vmatmul.bf16.gmra.mxu0 %v673
  %v1176 = vpop.f32.mrf.mxu0
  %v1177 = vadd.f32 %v747, %v1176
  %v1178 = vpop.f32.mrf.mxu0
  %1179 = vdwg.mxu0
  %v1180 = vmax.f32 %v1086, 0.0
  %v1181 = vmax.f32 %v1099, 0.0
  %v1182 = vmax.f32 %v1112, 0.0
  %v1183 = vmax.f32 %v1125, 0.0
  %v1184 = vmax.f32 %v1138, 0.0
  %v1185 = vmax.f32 %v1151, 0.0
  %v1186 = vmax.f32 %v1164, 0.0
  %v1187 = vmax.f32 %v1177, 0.0
  %v1188 = vpack.c.bf16 %v1181, %v1180
  %v1189 = vpack.c.bf16 %v1183, %v1182
  %v1190 = vpack.c.bf16 %v1185, %v1184
  %v1191 = vpack.c.bf16 %v1187, %v1186
  %1192 = vst [vmem:[%s13] sm:$0xff] %v1188
  %1193 = vst [vmem:[%s13 + $0x8] sm:$0xff] %v1189
  %1194 = vst [vmem:[%s13 + $0x10] sm:$0xff] %v1190
  %1195 = vst [vmem:[%s13 + $0x18] sm:$0xff] %v1191
  // Predicated region
  $region50: #{vae_forward.10} parent=0 // pred_check
    _
  $region51: #{vae_forward.10} parent=0 // pred_check_branch
    %1197 = sbr.rel (0) target = $region53
  $region52: #{vae_forward.10} parent=0 // pred_region
    _
  $region53: #{vae_forward.10} parent=0 // pred_fallthru
    _
  // Predicated region
  $region54: #{vae_forward.10} parent=0 // pred_check
    _
  $region55: #{vae_forward.10} parent=0 // pred_check_branch
    %1199 = sbr.rel (0) target = $region57
  $region56: #{vae_forward.10} parent=0 // pred_region
    _
  $region57: #{vae_forward.10} parent=0 // pred_fallthru
    _
  // Predicated region
  $region58: #{vae_forward.10} parent=0 // pred_check
    _
  $region59: #{vae_forward.10} parent=0 // pred_check_branch
    %1201 = sbr.rel (0) target = $region61
  $region60: #{vae_forward.10} parent=0 // pred_region
    _
  $region61: #{vae_forward.10} parent=0 // pred_fallthru
    _
  // Predicated region
  $region62: #{vae_forward.10} parent=0 // pred_check
    _
  $region63: #{vae_forward.10} parent=0 // pred_check_branch
    %1203 = sbr.rel (0) target = $region65
  $region64: #{vae_forward.10} parent=0 // pred_region
    _
  $region65: #{vae_forward.10} parent=0 // pred_fallthru
    _

// kernel: vae_forward.11
$region0: #{vae_forward.11}
  #allocation0 [shape = 'u32[]', space=smem, size = 0x4, offset = 0x4, fixed_abs, tag = 'smem constant byte address 0x4 - core index']
  #allocation1 [shape = 'u32[72,128]{1,0:T(1,128)}', space=vmem, size = 0x9000, scoped, tag = 'internal scratch']
  %s0 = inlined_call_operand.vmem [shape: bf16[64,256], index: 0, kind: input, shape index: {}]
  %s1 = inlined_call_operand.vmem [shape: bf16[256,128], index: 1, kind: input, shape index: {}]
  %s2 = inlined_call_operand.vmem [shape: f32[1,128], index: 2, kind: input, shape index: {}]
  %s3 = inlined_call_operand.vmem [shape: bf16[64,128], index: 3, kind: output, shape index: {}]
  %s4 = sld [smem:[#allocation0]]
  $region22: #{vae_forward.11} parent=0
    _
  %s6 = ssub.s32 1, %s4
  %s7 = scalar_select 0, %s6, %s4
  // Predicated region
  $region2: #{vae_forward.11} parent=0 // pred_check
    _
  $region3: #{vae_forward.11} parent=0 // pred_check_branch
    %9 = sbr.rel (0) target = $region5
  $region4: #{vae_forward.11} parent=0 // pred_region
    _
  $region5: #{vae_forward.11} parent=0 // pred_fallthru
    _
  // Predicated region
  $region6: #{vae_forward.11} parent=0 // pred_check
    _
  $region7: #{vae_forward.11} parent=0 // pred_check_branch
    %11 = sbr.rel (0) target = $region9
  $region8: #{vae_forward.11} parent=0 // pred_region
    _
  $region9: #{vae_forward.11} parent=0 // pred_fallthru
    _
  // Predicated region
  $region10: #{vae_forward.11} parent=0 // pred_check
    _
  $region11: #{vae_forward.11} parent=0 // pred_check_branch
    %13 = sbr.rel (0) target = $region13
  $region12: #{vae_forward.11} parent=0 // pred_region
    _
  $region13: #{vae_forward.11} parent=0 // pred_fallthru
    _
  %v14 = vld [vmem:[%s0] sm:$0xff]
  %v15 = vld [vmem:[%s0 + $0x8] sm:$0xff]
  %v16 = vld [vmem:[%s0 + $0x10] sm:$0xff]
  %v17 = vld [vmem:[%s0 + $0x18] sm:$0xff]
  %v18 = vld [vmem:[%s0 + $0x20] sm:$0xff]
  %v19 = vld [vmem:[%s0 + $0x28] sm:$0xff]
  %v20 = vld [vmem:[%s0 + $0x30] sm:$0xff]
  %v21 = vld [vmem:[%s0 + $0x38] sm:$0xff]
  %v22 = vld [vmem:[%s1] sm:$0xf]
  %v23 = vld [vmem:[%s1 + $0x4] sm:$0xf]
  %v24 = vld [vmem:[%s1 + $0x8] sm:$0xf]
  %v25 = vld [vmem:[%s1 + $0xc] sm:$0xf]
  %v26 = vld [vmem:[%s1 + $0x10] sm:$0xf]
  %v27 = vld [vmem:[%s1 + $0x14] sm:$0xf]
  %v28 = vld [vmem:[%s1 + $0x18] sm:$0xf]
  %v29 = vld [vmem:[%s1 + $0x1c] sm:$0xf]
  %v30 = vld [vmem:[%s1 + $0x20] sm:$0xf]
  %v31 = vld [vmem:[%s1 + $0x24] sm:$0xf]
  %v32 = vld [vmem:[%s1 + $0x28] sm:$0xf]
  %v33 = vld [vmem:[%s1 + $0x2c] sm:$0xf]
  %v34 = vld [vmem:[%s1 + $0x30] sm:$0xf]
  %v35 = vld [vmem:[%s1 + $0x34] sm:$0xf]
  %v36 = vld [vmem:[%s1 + $0x38] sm:$0xf]
  %v37 = vld [vmem:[%s1 + $0x3c] sm:$0xf]
  %v38 = vld [vmem:[%s1 + $0x40] sm:$0xf]
  %v39 = vld [vmem:[%s1 + $0x44] sm:$0xf]
  %v40 = vld [vmem:[%s1 + $0x48] sm:$0xf]
  %v41 = vld [vmem:[%s1 + $0x4c] sm:$0xf]
  %v42 = vld [vmem:[%s1 + $0x50] sm:$0xf]
  %v43 = vld [vmem:[%s1 + $0x54] sm:$0xf]
  %v44 = vld [vmem:[%s1 + $0x58] sm:$0xf]
  %v45 = vld [vmem:[%s1 + $0x5c] sm:$0xf]
  %v46 = vld [vmem:[%s1 + $0x60] sm:$0xf]
  %v47 = vld [vmem:[%s1 + $0x64] sm:$0xf]
  %v48 = vld [vmem:[%s1 + $0x68] sm:$0xf]
  %v49 = vld [vmem:[%s1 + $0x6c] sm:$0xf]
  %v50 = vld [vmem:[%s1 + $0x70] sm:$0xf]
  %v51 = vld [vmem:[%s1 + $0x74] sm:$0xf]
  %v52 = vld [vmem:[%s1 + $0x78] sm:$0xf]
  %v53 = vld [vmem:[%s1 + $0x7c] sm:$0xf]
  %v54 = vld [vmem:[%s2] sm:$0x1]
  %v56 = vperm.slane %v54, 0
  %v66 = vunpack.c.l.b16 %v14
  %v67 = vunpack.c.h.b16 %v14
  %v68 = vunpack.c.l.b16 %v15
  %v69 = vunpack.c.h.b16 %v15
  %v70 = vunpack.c.l.b16 %v16
  %v71 = vunpack.c.h.b16 %v16
  %v72 = vunpack.c.l.b16 %v17
  %v73 = vunpack.c.h.b16 %v17
  %v74 = vunpack.c.l.b16 %v18
  %v75 = vunpack.c.h.b16 %v18
  %v76 = vunpack.c.l.b16 %v19
  %v77 = vunpack.c.h.b16 %v19
  %v78 = vunpack.c.l.b16 %v20
  %v79 = vunpack.c.h.b16 %v20
  %v80 = vunpack.c.l.b16 %v21
  %v81 = vunpack.c.h.b16 %v21
  %v82 = vpack.c.b16 %v68, %v66
  %v83 = vpack.c.b16 %v69, %v67
  %v84 = vpack.c.b16 %v72, %v70
  %v85 = vpack.c.b16 %v73, %v71
  %v86 = vpack.c.b16 %v76, %v74
  %v87 = vpack.c.b16 %v77, %v75
  %v88 = vpack.c.b16 %v80, %v78
  %v89 = vpack.c.b16 %v81, %v79
  %v130 = vunpack.c.l.b16 %v22
  %v131 = vunpack.c.l.b16 %v23
  %v132 = vunpack.c.l.b16 %v24
  %v133 = vunpack.c.l.b16 %v25
  %v134 = vunpack.c.l.b16 %v26
  %v135 = vunpack.c.l.b16 %v27
  %v136 = vunpack.c.l.b16 %v28
  %v137 = vunpack.c.l.b16 %v29
  %v138 = vunpack.c.l.b16 %v30
  %v139 = vunpack.c.l.b16 %v31
  %v140 = vunpack.c.l.b16 %v32
  %v141 = vunpack.c.l.b16 %v33
  %v142 = vunpack.c.l.b16 %v34
  %v143 = vunpack.c.l.b16 %v35
  %v144 = vunpack.c.l.b16 %v36
  %v145 = vunpack.c.l.b16 %v37
  %v146 = vunpack.c.l.b16 %v38
  %v147 = vunpack.c.l.b16 %v39
  %v148 = vunpack.c.l.b16 %v40
  %v149 = vunpack.c.l.b16 %v41
  %v150 = vunpack.c.l.b16 %v42
  %v151 = vunpack.c.l.b16 %v43
  %v152 = vunpack.c.l.b16 %v44
  %v153 = vunpack.c.l.b16 %v45
  %v154 = vunpack.c.l.b16 %v46
  %v155 = vunpack.c.l.b16 %v47
  %v156 = vunpack.c.l.b16 %v48
  %v157 = vunpack.c.l.b16 %v49
  %v158 = vunpack.c.l.b16 %v50
  %v159 = vunpack.c.l.b16 %v51
  %v160 = vunpack.c.l.b16 %v52
  %v161 = vunpack.c.l.b16 %v53
  %v162 = vpack.c.b16 %v131, %v130
  %v163 = vpack.c.b16 %v133, %v132
  %v164 = vpack.c.b16 %v135, %v134
  %v165 = vpack.c.b16 %v137, %v136
  %v166 = vpack.c.b16 %v139, %v138
  %v167 = vpack.c.b16 %v141, %v140
  %v168 = vpack.c.b16 %v143, %v142
  %v169 = vpack.c.b16 %v145, %v144
  %v170 = vpack.c.b16 %v147, %v146
  %v171 = vpack.c.b16 %v149, %v148
  %v172 = vpack.c.b16 %v151, %v150
  %v173 = vpack.c.b16 %v153, %v152
  %v174 = vpack.c.b16 %v155, %v154
  %v175 = vpack.c.b16 %v157, %v156
  %v176 = vpack.c.b16 %v159, %v158
  %v177 = vpack.c.b16 %v161, %v160
  %194 = vmatpush.bf16.msra.mxu0 %v169
  %195 = vmatpush.bf16.msra.mxu0 %v168
  %196 = vmatpush.bf16.msra.mxu0 %v167
  %197 = vmatpush.bf16.msra.mxu0 %v166
  %198 = vmatpush.bf16.msra.mxu0 %v165
  %199 = vmatpush.bf16.msra.mxu0 %v164
  %200 = vmatpush.bf16.msra.mxu0 %v163
  %201 = vmatpush.bf16.msra.mxu0 %v162
  %202 = vmatmul.bf16.gmra.mxu0 %v82
  %v203 = vpop.f32.mrf.mxu0
  %v204 = vadd.f32 %v56, %v203
  %v205 = vpop.f32.mrf.mxu0
  %v206 = vadd.f32 %v56, %v205
  %207 = vmatmul.bf16.gmra.mxu0 %v84
  %v208 = vpop.f32.mrf.mxu0
  %v209 = vadd.f32 %v56, %v208
  %v210 = vpop.f32.mrf.mxu0
  %v211 = vadd.f32 %v56, %v210
  %212 = vmatmul.bf16.gmra.mxu0 %v86
  %v213 = vpop.f32.mrf.mxu0
  %v214 = vadd.f32 %v56, %v213
  %v215 = vpop.f32.mrf.mxu0
  %v216 = vadd.f32 %v56, %v215
  %217 = vmatmul.bf16.gmra.mxu0 %v88
  %v218 = vpop.f32.mrf.mxu0
  %v219 = vadd.f32 %v56, %v218
  %v220 = vpop.f32.mrf.mxu0
  %v221 = vadd.f32 %v56, %v220
  %222 = vdwg.mxu0
  %223 = vmatpush.bf16.msra.mxu0 %v177
  %224 = vmatpush.bf16.msra.mxu0 %v176
  %225 = vmatpush.bf16.msra.mxu0 %v175
  %226 = vmatpush.bf16.msra.mxu0 %v174
  %227 = vmatpush.bf16.msra.mxu0 %v173
  %228 = vmatpush.bf16.msra.mxu0 %v172
  %229 = vmatpush.bf16.msra.mxu0 %v171
  %230 = vmatpush.bf16.msra.mxu0 %v170
  %231 = vmatmul.bf16.gmra.mxu0 %v83
  %v232 = vpop.f32.mrf.mxu0
  %v233 = vadd.f32 %v204, %v232
  %v234 = vpop.f32.mrf.mxu0
  %v235 = vadd.f32 %v206, %v234
  %236 = vmatmul.bf16.gmra.mxu0 %v85
  %v237 = vpop.f32.mrf.mxu0
  %v238 = vadd.f32 %v209, %v237
  %v239 = vpop.f32.mrf.mxu0
  %v240 = vadd.f32 %v211, %v239
  %241 = vmatmul.bf16.gmra.mxu0 %v87
  %v242 = vpop.f32.mrf.mxu0
  %v243 = vadd.f32 %v214, %v242
  %v244 = vpop.f32.mrf.mxu0
  %v245 = vadd.f32 %v216, %v244
  %246 = vmatmul.bf16.gmra.mxu0 %v89
  %v247 = vpop.f32.mrf.mxu0
  %v248 = vadd.f32 %v219, %v247
  %v249 = vpop.f32.mrf.mxu0
  %v250 = vadd.f32 %v221, %v249
  %251 = vdwg.mxu0
  %v252 = vmax.f32 %v233, 0.0
  %v253 = vmax.f32 %v235, 0.0
  %v254 = vmax.f32 %v238, 0.0
  %v255 = vmax.f32 %v240, 0.0
  %v256 = vmax.f32 %v243, 0.0
  %v257 = vmax.f32 %v245, 0.0
  %v258 = vmax.f32 %v248, 0.0
  %v259 = vmax.f32 %v250, 0.0
  %v260 = vpack.c.bf16 %v252, %v252
  %v261 = vpack.c.bf16 %v253, %v253
  %v262 = vpack.c.bf16 %v254, %v254
  %v263 = vpack.c.bf16 %v255, %v255
  %v264 = vpack.c.bf16 %v256, %v256
  %v265 = vpack.c.bf16 %v257, %v257
  %v266 = vpack.c.bf16 %v258, %v258
  %v267 = vpack.c.bf16 %v259, %v259
  %268 = vst [vmem:[%s3] sm:$0xf] %v260
  %269 = vst [vmem:[%s3 + $0x4] sm:$0xf] %v261
  %270 = vst [vmem:[%s3 + $0x8] sm:$0xf] %v262
  %271 = vst [vmem:[%s3 + $0xc] sm:$0xf] %v263
  %272 = vst [vmem:[%s3 + $0x10] sm:$0xf] %v264
  %273 = vst [vmem:[%s3 + $0x14] sm:$0xf] %v265
  %274 = vst [vmem:[%s3 + $0x18] sm:$0xf] %v266
  %275 = vst [vmem:[%s3 + $0x1c] sm:$0xf] %v267
  // Predicated region
  $region14: #{vae_forward.11} parent=0 // pred_check
    _
  $region15: #{vae_forward.11} parent=0 // pred_check_branch
    %277 = sbr.rel (0) target = $region17
  $region16: #{vae_forward.11} parent=0 // pred_region
    _
  $region17: #{vae_forward.11} parent=0 // pred_fallthru
    _
  // Predicated region
  $region18: #{vae_forward.11} parent=0 // pred_check
    _
  $region19: #{vae_forward.11} parent=0 // pred_check_branch
    %279 = sbr.rel (0) target = $region21
  $region20: #{vae_forward.11} parent=0 // pred_region
    _
  $region21: #{vae_forward.11} parent=0 // pred_fallthru
    _

// kernel: vae_forward.12
$region0: #{vae_forward.12}
  #allocation0 [shape = 'u32[]', space=smem, size = 0x4, offset = 0x4, fixed_abs, tag = 'smem constant byte address 0x4 - core index']
  #allocation1 [shape = 'u32[72,128]{1,0:T(1,128)}', space=vmem, size = 0x9000, scoped, tag = 'internal scratch']
  %s0 = inlined_call_operand.vmem [shape: bf16[176,128], index: 0, kind: input, shape index: {}]
  %s1 = inlined_call_operand.vmem [shape: bf16[128,128], index: 1, kind: input, shape index: {}]
  %s2 = inlined_call_operand.vmem [shape: f32[1,128], index: 2, kind: input, shape index: {}]
  %s3 = inlined_call_operand.vmem [shape: bf16[176,128], index: 3, kind: output, shape index: {}]
  %s4 = sld [smem:[#allocation0]]
  $region22: #{vae_forward.12} parent=0
    _
  %s6 = ssub.s32 1, %s4
  %s7 = scalar_select 0, %s6, %s4
  // Predicated region
  $region2: #{vae_forward.12} parent=0 // pred_check
    _
  $region3: #{vae_forward.12} parent=0 // pred_check_branch
    %9 = sbr.rel (0) target = $region5
  $region4: #{vae_forward.12} parent=0 // pred_region
    _
  $region5: #{vae_forward.12} parent=0 // pred_fallthru
    _
  // Predicated region
  $region6: #{vae_forward.12} parent=0 // pred_check
    _
  $region7: #{vae_forward.12} parent=0 // pred_check_branch
    %11 = sbr.rel (0) target = $region9
  $region8: #{vae_forward.12} parent=0 // pred_region
    _
  $region9: #{vae_forward.12} parent=0 // pred_fallthru
    _
  // Predicated region
  $region10: #{vae_forward.12} parent=0 // pred_check
    _
  $region11: #{vae_forward.12} parent=0 // pred_check_branch
    %13 = sbr.rel (0) target = $region13
  $region12: #{vae_forward.12} parent=0 // pred_region
    _
  $region13: #{vae_forward.12} parent=0 // pred_fallthru
    _
  %v14 = vld [vmem:[%s0] sm:$0xf]
  %v15 = vld [vmem:[%s0 + $0x4] sm:$0xf]
  %v16 = vld [vmem:[%s0 + $0x8] sm:$0xf]
  %v17 = vld [vmem:[%s0 + $0xc] sm:$0xf]
  %v18 = vld [vmem:[%s0 + $0x10] sm:$0xf]
  %v19 = vld [vmem:[%s0 + $0x14] sm:$0xf]
  %v20 = vld [vmem:[%s0 + $0x18] sm:$0xf]
  %v21 = vld [vmem:[%s0 + $0x1c] sm:$0xf]
  %v22 = vld [vmem:[%s0 + $0x20] sm:$0xf]
  %v23 = vld [vmem:[%s0 + $0x24] sm:$0xf]
  %v24 = vld [vmem:[%s0 + $0x28] sm:$0xf]
  %v25 = vld [vmem:[%s0 + $0x2c] sm:$0xf]
  %v26 = vld [vmem:[%s0 + $0x30] sm:$0xf]
  %v27 = vld [vmem:[%s0 + $0x34] sm:$0xf]
  %v28 = vld [vmem:[%s0 + $0x38] sm:$0xf]
  %v29 = vld [vmem:[%s0 + $0x3c] sm:$0xf]
  %v30 = vld [vmem:[%s0 + $0x40] sm:$0xf]
  %v31 = vld [vmem:[%s0 + $0x44] sm:$0xf]
  %v32 = vld [vmem:[%s0 + $0x48] sm:$0xf]
  %v33 = vld [vmem:[%s0 + $0x4c] sm:$0xf]
  %v34 = vld [vmem:[%s0 + $0x50] sm:$0xf]
  %v35 = vld [vmem:[%s0 + $0x54] sm:$0xf]
  %v36 = vld [vmem:[%s1] sm:$0xf]
  %v37 = vld [vmem:[%s1 + $0x4] sm:$0xf]
  %v38 = vld [vmem:[%s1 + $0x8] sm:$0xf]
  %v39 = vld [vmem:[%s1 + $0xc] sm:$0xf]
  %v40 = vld [vmem:[%s1 + $0x10] sm:$0xf]
  %v41 = vld [vmem:[%s1 + $0x14] sm:$0xf]
  %v42 = vld [vmem:[%s1 + $0x18] sm:$0xf]
  %v43 = vld [vmem:[%s1 + $0x1c] sm:$0xf]
  %v44 = vld [vmem:[%s1 + $0x20] sm:$0xf]
  %v45 = vld [vmem:[%s1 + $0x24] sm:$0xf]
  %v46 = vld [vmem:[%s1 + $0x28] sm:$0xf]
  %v47 = vld [vmem:[%s1 + $0x2c] sm:$0xf]
  %v48 = vld [vmem:[%s1 + $0x30] sm:$0xf]
  %v49 = vld [vmem:[%s1 + $0x34] sm:$0xf]
  %v50 = vld [vmem:[%s1 + $0x38] sm:$0xf]
  %v51 = vld [vmem:[%s1 + $0x3c] sm:$0xf]
  %v52 = vld [vmem:[%s2] sm:$0x1]
  %v54 = vperm.slane %v52, 0
  %v78 = vunpack.c.l.b16 %v14
  %v79 = vunpack.c.l.b16 %v15
  %v80 = vunpack.c.l.b16 %v16
  %v81 = vunpack.c.l.b16 %v17
  %v82 = vunpack.c.l.b16 %v18
  %v83 = vunpack.c.l.b16 %v19
  %v84 = vunpack.c.l.b16 %v20
  %v85 = vunpack.c.l.b16 %v21
  %v86 = vunpack.c.l.b16 %v22
  %v87 = vunpack.c.l.b16 %v23
  %v88 = vunpack.c.l.b16 %v24
  %v89 = vunpack.c.l.b16 %v25
  %v90 = vunpack.c.l.b16 %v26
  %v91 = vunpack.c.l.b16 %v27
  %v92 = vunpack.c.l.b16 %v28
  %v93 = vunpack.c.l.b16 %v29
  %v94 = vunpack.c.l.b16 %v30
  %v95 = vunpack.c.l.b16 %v31
  %v96 = vunpack.c.l.b16 %v32
  %v97 = vunpack.c.l.b16 %v33
  %v98 = vunpack.c.l.b16 %v34
  %v99 = vunpack.c.l.b16 %v35
  %v100 = vpack.c.b16 %v79, %v78
  %v101 = vpack.c.b16 %v81, %v80
  %v102 = vpack.c.b16 %v83, %v82
  %v103 = vpack.c.b16 %v85, %v84
  %v104 = vpack.c.b16 %v87, %v86
  %v105 = vpack.c.b16 %v89, %v88
  %v106 = vpack.c.b16 %v91, %v90
  %v107 = vpack.c.b16 %v93, %v92
  %v108 = vpack.c.b16 %v95, %v94
  %v109 = vpack.c.b16 %v97, %v96
  %v110 = vpack.c.b16 %v99, %v98
  %v138 = vunpack.c.l.b16 %v36
  %v139 = vunpack.c.l.b16 %v37
  %v140 = vunpack.c.l.b16 %v38
  %v141 = vunpack.c.l.b16 %v39
  %v142 = vunpack.c.l.b16 %v40
  %v143 = vunpack.c.l.b16 %v41
  %v144 = vunpack.c.l.b16 %v42
  %v145 = vunpack.c.l.b16 %v43
  %v146 = vunpack.c.l.b16 %v44
  %v147 = vunpack.c.l.b16 %v45
  %v148 = vunpack.c.l.b16 %v46
  %v149 = vunpack.c.l.b16 %v47
  %v150 = vunpack.c.l.b16 %v48
  %v151 = vunpack.c.l.b16 %v49
  %v152 = vunpack.c.l.b16 %v50
  %v153 = vunpack.c.l.b16 %v51
  %v154 = vpack.c.b16 %v139, %v138
  %v155 = vpack.c.b16 %v141, %v140
  %v156 = vpack.c.b16 %v143, %v142
  %v157 = vpack.c.b16 %v145, %v144
  %v158 = vpack.c.b16 %v147, %v146
  %v159 = vpack.c.b16 %v149, %v148
  %v160 = vpack.c.b16 %v151, %v150
  %v161 = vpack.c.b16 %v153, %v152
  %170 = vmatpush.bf16.msra.mxu0 %v161
  %171 = vmatpush.bf16.msra.mxu0 %v160
  %172 = vmatpush.bf16.msra.mxu0 %v159
  %173 = vmatpush.bf16.msra.mxu0 %v158
  %174 = vmatpush.bf16.msra.mxu0 %v157
  %175 = vmatpush.bf16.msra.mxu0 %v156
  %176 = vmatpush.bf16.msra.mxu0 %v155
  %177 = vmatpush.bf16.msra.mxu0 %v154
  %178 = vmatmul.bf16.gmra.mxu0 %v100
  %v179 = vpop.f32.mrf.mxu0
  %v180 = vadd.f32 %v54, %v179
  %v181 = vpop.f32.mrf.mxu0
  %v182 = vadd.f32 %v54, %v181
  %183 = vmatmul.bf16.gmra.mxu0 %v101
  %v184 = vpop.f32.mrf.mxu0
  %v185 = vadd.f32 %v54, %v184
  %v186 = vpop.f32.mrf.mxu0
  %v187 = vadd.f32 %v54, %v186
  %188 = vmatmul.bf16.gmra.mxu0 %v102
  %v189 = vpop.f32.mrf.mxu0
  %v190 = vadd.f32 %v54, %v189
  %v191 = vpop.f32.mrf.mxu0
  %v192 = vadd.f32 %v54, %v191
  %193 = vmatmul.bf16.gmra.mxu0 %v103
  %v194 = vpop.f32.mrf.mxu0
  %v195 = vadd.f32 %v54, %v194
  %v196 = vpop.f32.mrf.mxu0
  %v197 = vadd.f32 %v54, %v196
  %198 = vmatmul.bf16.gmra.mxu0 %v104
  %v199 = vpop.f32.mrf.mxu0
  %v200 = vadd.f32 %v54, %v199
  %v201 = vpop.f32.mrf.mxu0
  %v202 = vadd.f32 %v54, %v201
  %203 = vmatmul.bf16.gmra.mxu0 %v105
  %v204 = vpop.f32.mrf.mxu0
  %v205 = vadd.f32 %v54, %v204
  %v206 = vpop.f32.mrf.mxu0
  %v207 = vadd.f32 %v54, %v206
  %208 = vmatmul.bf16.gmra.mxu0 %v106
  %v209 = vpop.f32.mrf.mxu0
  %v210 = vadd.f32 %v54, %v209
  %v211 = vpop.f32.mrf.mxu0
  %v212 = vadd.f32 %v54, %v211
  %213 = vmatmul.bf16.gmra.mxu0 %v107
  %v214 = vpop.f32.mrf.mxu0
  %v215 = vadd.f32 %v54, %v214
  %v216 = vpop.f32.mrf.mxu0
  %v217 = vadd.f32 %v54, %v216
  %218 = vmatmul.bf16.gmra.mxu0 %v108
  %v219 = vpop.f32.mrf.mxu0
  %v220 = vadd.f32 %v54, %v219
  %v221 = vpop.f32.mrf.mxu0
  %v222 = vadd.f32 %v54, %v221
  %223 = vmatmul.bf16.gmra.mxu0 %v109
  %v224 = vpop.f32.mrf.mxu0
  %v225 = vadd.f32 %v54, %v224
  %v226 = vpop.f32.mrf.mxu0
  %v227 = vadd.f32 %v54, %v226
  %228 = vmatmul.bf16.gmra.mxu0 %v110
  %v229 = vpop.f32.mrf.mxu0
  %v230 = vadd.f32 %v54, %v229
  %v231 = vpop.f32.mrf.mxu0
  %v232 = vadd.f32 %v54, %v231
  %233 = vdwg.mxu0
  %v234 = vmax.f32 %v180, 0.0
  %v235 = vmax.f32 %v182, 0.0
  %v236 = vmax.f32 %v185, 0.0
  %v237 = vmax.f32 %v187, 0.0
  %v238 = vmax.f32 %v190, 0.0
  %v239 = vmax.f32 %v192, 0.0
  %v240 = vmax.f32 %v195, 0.0
  %v241 = vmax.f32 %v197, 0.0
  %v242 = vmax.f32 %v200, 0.0
  %v243 = vmax.f32 %v202, 0.0
  %v244 = vmax.f32 %v205, 0.0
  %v245 = vmax.f32 %v207, 0.0
  %v246 = vmax.f32 %v210, 0.0
  %v247 = vmax.f32 %v212, 0.0
  %v248 = vmax.f32 %v215, 0.0
  %v249 = vmax.f32 %v217, 0.0
  %v250 = vmax.f32 %v220, 0.0
  %v251 = vmax.f32 %v222, 0.0
  %v252 = vmax.f32 %v225, 0.0
  %v253 = vmax.f32 %v227, 0.0
  %v254 = vmax.f32 %v230, 0.0
  %v255 = vmax.f32 %v232, 0.0
  %v256 = vpack.c.bf16 %v234, %v234
  %v257 = vpack.c.bf16 %v235, %v235
  %v258 = vpack.c.bf16 %v236, %v236
  %v259 = vpack.c.bf16 %v237, %v237
  %v260 = vpack.c.bf16 %v238, %v238
  %v261 = vpack.c.bf16 %v239, %v239
  %v262 = vpack.c.bf16 %v240, %v240
  %v263 = vpack.c.bf16 %v241, %v241
  %v264 = vpack.c.bf16 %v242, %v242
  %v265 = vpack.c.bf16 %v243, %v243
  %v266 = vpack.c.bf16 %v244, %v244
  %v267 = vpack.c.bf16 %v245, %v245
  %v268 = vpack.c.bf16 %v246, %v246
  %v269 = vpack.c.bf16 %v247, %v247
  %v270 = vpack.c.bf16 %v248, %v248
  %v271 = vpack.c.bf16 %v249, %v249
  %v272 = vpack.c.bf16 %v250, %v250
  %v273 = vpack.c.bf16 %v251, %v251
  %v274 = vpack.c.bf16 %v252, %v252
  %v275 = vpack.c.bf16 %v253, %v253
  %v276 = vpack.c.bf16 %v254, %v254
  %v277 = vpack.c.bf16 %v255, %v255
  %278 = vst [vmem:[%s3] sm:$0xf] %v256
  %279 = vst [vmem:[%s3 + $0x4] sm:$0xf] %v257
  %280 = vst [vmem:[%s3 + $0x8] sm:$0xf] %v258
  %281 = vst [vmem:[%s3 + $0xc] sm:$0xf] %v259
  %282 = vst [vmem:[%s3 + $0x10] sm:$0xf] %v260
  %283 = vst [vmem:[%s3 + $0x14] sm:$0xf] %v261
  %284 = vst [vmem:[%s3 + $0x18] sm:$0xf] %v262
  %285 = vst [vmem:[%s3 + $0x1c] sm:$0xf] %v263
  %286 = vst [vmem:[%s3 + $0x20] sm:$0xf] %v264
  %287 = vst [vmem:[%s3 + $0x24] sm:$0xf] %v265
  %288 = vst [vmem:[%s3 + $0x28] sm:$0xf] %v266
  %289 = vst [vmem:[%s3 + $0x2c] sm:$0xf] %v267
  %290 = vst [vmem:[%s3 + $0x30] sm:$0xf] %v268
  %291 = vst [vmem:[%s3 + $0x34] sm:$0xf] %v269
  %292 = vst [vmem:[%s3 + $0x38] sm:$0xf] %v270
  %293 = vst [vmem:[%s3 + $0x3c] sm:$0xf] %v271
  %294 = vst [vmem:[%s3 + $0x40] sm:$0xf] %v272
  %295 = vst [vmem:[%s3 + $0x44] sm:$0xf] %v273
  %296 = vst [vmem:[%s3 + $0x48] sm:$0xf] %v274
  %297 = vst [vmem:[%s3 + $0x4c] sm:$0xf] %v275
  %298 = vst [vmem:[%s3 + $0x50] sm:$0xf] %v276
  %299 = vst [vmem:[%s3 + $0x54] sm:$0xf] %v277
  // Predicated region
  $region14: #{vae_forward.12} parent=0 // pred_check
    _
  $region15: #{vae_forward.12} parent=0 // pred_check_branch
    %301 = sbr.rel (0) target = $region17
  $region16: #{vae_forward.12} parent=0 // pred_region
    _
  $region17: #{vae_forward.12} parent=0 // pred_fallthru
    _
  // Predicated region
  $region18: #{vae_forward.12} parent=0 // pred_check
    _
  $region19: #{vae_forward.12} parent=0 // pred_check_branch
    %303 = sbr.rel (0) target = $region21
  $region20: #{vae_forward.12} parent=0 // pred_region
    _
  $region21: #{vae_forward.12} parent=0 // pred_fallthru
    _

// kernel: vae_forward.13
$region0: #{vae_forward.13}
  #allocation0 [shape = 'u32[]', space=smem, size = 0x4, offset = 0x4, fixed_abs, tag = 'smem constant byte address 0x4 - core index']
  #allocation1 [shape = 'u32[72,128]{1,0:T(1,128)}', space=vmem, size = 0x9000, scoped, tag = 'internal scratch']
  %s0 = inlined_call_operand.vmem [shape: bf16[624,128], index: 0, kind: input, shape index: {}]
  %s1 = inlined_call_operand.vmem [shape: bf16[128,128], index: 1, kind: input, shape index: {}]
  %s2 = inlined_call_operand.vmem [shape: f32[1,128], index: 2, kind: input, shape index: {}]
  %s3 = inlined_call_operand.vmem [shape: f32[624,128], index: 3, kind: output, shape index: {}]
  %s4 = sld [smem:[#allocation0]]
  $region45: #{vae_forward.13} parent=0
    _
  %s6 = ssub.s32 1, %s4
  %s7 = scalar_select 0, %s6, %s4
  loop: start=0, step=1, limit=5
  $region2: #{vae_forward.13} parent=0 // loop_pre_header
    _
  $region3: #{vae_forward.13} parent=0 // loop_header
    %s9 = sphi 0, %s13
    %p10 = scmp.ge.s32.totalorder %s9, 5
    %s19 = sphi 0, %s21
    %s22 = sphi 0, %s19
    %s23 = sphi 0, %s22
    %s39 = sphi 0, %s23
    %s43 = sphi 0, %s43
    %s45 = sphi 0, %s43
    %s46 = sphi 0, %s45
    %s60 = sphi 0, %s46
    %s64 = sphi 0, %s64
    %s66 = sphi 0, %s64
    %s67 = sphi 0, %s66
    %s81 = sphi 0, %s67
    %s87 = sphi 0, %s89
    %s90 = sphi 0, %s87
    %s91 = sphi 0, %s90
    %s107 = sphi 0, %s91
  $region4: #{vae_forward.13} parent=0 // loop_header_branch
    %12 = sbr.rel (%p10) target = $region8
  $region5: #{vae_forward.13} parent=0 // loop_body
    %s14 = ssub.s32 %s9, 1
    %s15 = ssub.s32 %s9, 2
    %s16 = sadd.s32 %s9, 1
    %s17 = ssub.s32 %s9, %s16
    %p18 = scmp.eq.s32.totalorder %s17, 0
    %s20 = sadd.s32 %s19, 1
    %s21 = scalar_select %p18, %s19, %s20
    %p24 = pneg %p18
    %p25 = scmp.eq.s32.totalorder %s9, 2
    %p26 = por %p24, %p25
    %p27 = scmp.ne.s32.totalorder %s19, %s22
    %p28 = scmp.eq.s32.totalorder %s9, 0
    %p29 = por %p27, %p28
    %p30 = scmp.ne.s32.totalorder %s19, %s22
    %p31 = scmp.eq.s32.totalorder %s14, 2
    %p32 = por %p30, %p31
    %p33 = scmp.ne.s32.totalorder %s22, %s23
    %p34 = scmp.eq.s32.totalorder %s14, 0
    %p35 = por %p33, %p34
    %p36 = scmp.ne.s32.totalorder %s22, %s23
    %p37 = scmp.eq.s32.totalorder %s15, 2
    %p38 = por %p36, %p37
    %p40 = scmp.ne.s32.totalorder %s23, %s39
    %p41 = scmp.eq.s32.totalorder %s15, 0
    %p42 = por %p40, %p41
    %s44 = sadd.s32 %s43, 1
    %p47 = scmp.eq.s32.totalorder %s9, 2
    %p48 = scmp.ne.s32.totalorder %s43, %s45
    %p49 = scmp.eq.s32.totalorder %s9, 0
    %p50 = por %p48, %p49
    %p51 = scmp.ne.s32.totalorder %s43, %s45
    %p52 = scmp.eq.s32.totalorder %s14, 2
    %p53 = por %p51, %p52
    %p54 = scmp.ne.s32.totalorder %s45, %s46
    %p55 = scmp.eq.s32.totalorder %s14, 0
    %p56 = por %p54, %p55
    %p57 = scmp.ne.s32.totalorder %s45, %s46
    %p58 = scmp.eq.s32.totalorder %s15, 2
    %p59 = por %p57, %p58
    %p61 = scmp.ne.s32.totalorder %s46, %s60
    %p62 = scmp.eq.s32.totalorder %s15, 0
    %p63 = por %p61, %p62
    %s65 = sadd.s32 %s64, 1
    %p68 = scmp.eq.s32.totalorder %s9, 2
    %p69 = scmp.ne.s32.totalorder %s64, %s66
    %p70 = scmp.eq.s32.totalorder %s9, 0
    %p71 = por %p69, %p70
    %p72 = scmp.ne.s32.totalorder %s64, %s66
    %p73 = scmp.eq.s32.totalorder %s14, 2
    %p74 = por %p72, %p73
    %p75 = scmp.ne.s32.totalorder %s66, %s67
    %p76 = scmp.eq.s32.totalorder %s14, 0
    %p77 = por %p75, %p76
    %p78 = scmp.ne.s32.totalorder %s66, %s67
    %p79 = scmp.eq.s32.totalorder %s15, 2
    %p80 = por %p78, %p79
    %p82 = scmp.ne.s32.totalorder %s67, %s81
    %p83 = scmp.eq.s32.totalorder %s15, 0
    %p84 = por %p82, %p83
    %s85 = ssub.s32 %s9, %s16
    %p86 = scmp.eq.s32.totalorder %s85, 0
    %s88 = sadd.s32 %s87, 1
    %s89 = scalar_select %p86, %s87, %s88
    %p92 = pneg %p86
    %p93 = scmp.eq.s32.totalorder %s9, 2
    %p94 = por %p92, %p93
    %p95 = scmp.ne.s32.totalorder %s87, %s90
    %p96 = scmp.eq.s32.totalorder %s9, 0
    %p97 = por %p95, %p96
    %p98 = scmp.ne.s32.totalorder %s87, %s90
    %p99 = scmp.eq.s32.totalorder %s14, 2
    %p100 = por %p98, %p99
    %p101 = scmp.ne.s32.totalorder %s90, %s91
    %p102 = scmp.eq.s32.totalorder %s14, 0
    %p103 = por %p101, %p102
    %p104 = scmp.ne.s32.totalorder %s90, %s91
    %p105 = scmp.eq.s32.totalorder %s15, 2
    %p106 = por %p104, %p105
    %p108 = scmp.ne.s32.totalorder %s91, %s107
    %p109 = scmp.eq.s32.totalorder %s15, 0
    %p110 = por %p108, %p109
    %p111 = scmp.le.s32.totalorder 1, %s9
    %p112 = scmp.lt.s32.totalorder %s9, 4
    %p113 = pnand %p111, %p112
    %p114 = pneg %p113
    // Predicated region
    $region9: #{vae_forward.13} parent=5 // pred_check
      _
    $region10: #{vae_forward.13} parent=5 // pred_check_branch
      %116 = sbr.rel (%p113) target = $region12
    $region11: #{vae_forward.13} parent=5 // pred_region
      %s117 = ssub.s32 %s9, 1
      // Predicated region
      $region13: #{vae_forward.13} parent=11 // pred_check
        %p118 = pneg %p56
      $region14: #{vae_forward.13} parent=11 // pred_check_branch
        %120 = sbr.rel (%p118) target = $region16
      $region15: #{vae_forward.13} parent=11 // pred_region
        _
      $region16: #{vae_forward.13} parent=11 // pred_fallthru
        _
      // Predicated region
      $region17: #{vae_forward.13} parent=11 // pred_check
        %p121 = pneg %p77
      $region18: #{vae_forward.13} parent=11 // pred_check_branch
        %123 = sbr.rel (%p121) target = $region20
      $region19: #{vae_forward.13} parent=11 // pred_region
        _
      $region20: #{vae_forward.13} parent=11 // pred_fallthru
        _
    $region12: #{vae_forward.13} parent=5 // pred_fallthru
      _
    %p124 = scmp.lt.s32.totalorder %s9, 3
    // Predicated region
    $region21: #{vae_forward.13} parent=5 // pred_check
      %p125 = pneg %p124
    $region22: #{vae_forward.13} parent=5 // pred_check_branch
      %127 = sbr.rel (%p125) target = $region24
    $region23: #{vae_forward.13} parent=5 // pred_region
      // Predicated region
      $region25: #{vae_forward.13} parent=23 // pred_check
        %p128 = pneg %p29
      $region26: #{vae_forward.13} parent=23 // pred_check_branch
        %130 = sbr.rel (%p128) target = $region28
      $region27: #{vae_forward.13} parent=23 // pred_region
        %s131 = smul.u32 26, %s9
        %p132 = scmp.lt.s32.totalorder %s131, 77
        %s133 = scalar_select %p132, %s131, 77
        %s134 = smul.addr %s133, 4
        %s135 = scalar_lea.vmem %s0, %s134
        %s136 = smul.u32 26, %s9
      $region28: #{vae_forward.13} parent=23 // pred_fallthru
        _
    $region24: #{vae_forward.13} parent=5 // pred_fallthru
      _
    %p137 = scmp.le.s32.totalorder 1, %s9
    %p138 = scmp.lt.s32.totalorder %s9, 4
    %p139 = pnand %p137, %p138
    %p140 = pneg %p139
    // Predicated region
    $region29: #{vae_forward.13} parent=5 // pred_check
      _
    $region30: #{vae_forward.13} parent=5 // pred_check_branch
      %142 = sbr.rel (%p139) target = $region32
    $region31: #{vae_forward.13} parent=5 // pred_region
      %s143 = ssub.s32 %s9, 1
      %s144 = smul.u32 26, %s14
      %p145 = scmp.lt.s32.totalorder %s144, 77
      %s146 = scalar_select %p145, %s144, 77
      %s147 = smul.addr %s146, 4
      %s148 = scalar_lea.vmem %s0, %s147
      %p149 = pneg %p35
      %p150 = pneg %p32
      %p151 = pneg %p56
      %p152 = pneg %p53
      %p153 = pneg %p77
      %p154 = pneg %p74
      %p155 = pneg %p103
      %p156 = pneg %p100
      %s157 = smul.u32 26, %s14
      %p158 = scmp.lt.s32.totalorder %s157, 77
      %s159 = scalar_select %p158, %s157, 77
      %s160 = smul.addr %s159, 8
      %s161 = scalar_lea.vmem %s3, %s160
      %s162 = smul.u32 26, %s14
      %p163 = scmp.lt.s32.totalorder %s162, 77
      %s164 = scalar_select %p163, %s162, 77
      %s165 = smul.addr %s164, 4
      %s166 = scalar_lea.vmem %s0, %s165
      %s167 = smul.u32 26, %s14
      %s168 = smul.u32 26, %s14
      %p169 = scmp.lt.s32.totalorder %s168, 77
      %s170 = scalar_select %p169, %s168, 77
      %s171 = smul.addr %s170, 8
      %s172 = scalar_lea.vmem %s3, %s171
      %s173 = smul.u32 26, %s14
      %v174 = vld [vmem:[%s166] sm:$0xf]
      %v175 = vld [vmem:[%s166 + $0x4] sm:$0xf]
      %v176 = vld [vmem:[%s166 + $0x8] sm:$0xf]
      %v177 = vld [vmem:[%s166 + $0xc] sm:$0xf]
      %v178 = vld [vmem:[%s166 + $0x10] sm:$0xf]
      %v179 = vld [vmem:[%s166 + $0x14] sm:$0xf]
      %v180 = vld [vmem:[%s166 + $0x18] sm:$0xf]
      %v181 = vld [vmem:[%s166 + $0x1c] sm:$0xf]
      %v182 = vld [vmem:[%s166 + $0x20] sm:$0xf]
      %v183 = vld [vmem:[%s166 + $0x24] sm:$0xf]
      %v184 = vld [vmem:[%s166 + $0x28] sm:$0xf]
      %v185 = vld [vmem:[%s166 + $0x2c] sm:$0xf]
      %v186 = vld [vmem:[%s166 + $0x30] sm:$0xf]
      %v187 = vld [vmem:[%s166 + $0x34] sm:$0xf]
      %v188 = vld [vmem:[%s166 + $0x38] sm:$0xf]
      %v189 = vld [vmem:[%s166 + $0x3c] sm:$0xf]
      %v190 = vld [vmem:[%s166 + $0x40] sm:$0xf]
      %v191 = vld [vmem:[%s166 + $0x44] sm:$0xf]
      %v192 = vld [vmem:[%s166 + $0x48] sm:$0xf]
      %v193 = vld [vmem:[%s166 + $0x4c] sm:$0xf]
      %v194 = vld [vmem:[%s166 + $0x50] sm:$0xf]
      %v195 = vld [vmem:[%s166 + $0x54] sm:$0xf]
      %v196 = vld [vmem:[%s166 + $0x58] sm:$0xf]
      %v197 = vld [vmem:[%s166 + $0x5c] sm:$0xf]
      %v198 = vld [vmem:[%s166 + $0x60] sm:$0xf]
      %v199 = vld [vmem:[%s166 + $0x64] sm:$0xf]
      %v200 = vld [vmem:[%s1] sm:$0xf]
      %v201 = vld [vmem:[%s1 + $0x4] sm:$0xf]
      %v202 = vld [vmem:[%s1 + $0x8] sm:$0xf]
      %v203 = vld [vmem:[%s1 + $0xc] sm:$0xf]
      %v204 = vld [vmem:[%s1 + $0x10] sm:$0xf]
      %v205 = vld [vmem:[%s1 + $0x14] sm:$0xf]
      %v206 = vld [vmem:[%s1 + $0x18] sm:$0xf]
      %v207 = vld [vmem:[%s1 + $0x1c] sm:$0xf]
      %v208 = vld [vmem:[%s1 + $0x20] sm:$0xf]
      %v209 = vld [vmem:[%s1 + $0x24] sm:$0xf]
      %v210 = vld [vmem:[%s1 + $0x28] sm:$0xf]
      %v211 = vld [vmem:[%s1 + $0x2c] sm:$0xf]
      %v212 = vld [vmem:[%s1 + $0x30] sm:$0xf]
      %v213 = vld [vmem:[%s1 + $0x34] sm:$0xf]
      %v214 = vld [vmem:[%s1 + $0x38] sm:$0xf]
      %v215 = vld [vmem:[%s1 + $0x3c] sm:$0xf]
      %v216 = vld [vmem:[%s2] sm:$0x1]
      %v218 = vperm.slane %v216, 0
      %v246 = vunpack.c.l.b16 %v174
      %v247 = vunpack.c.l.b16 %v175
      %v248 = vunpack.c.l.b16 %v176
      %v249 = vunpack.c.l.b16 %v177
      %v250 = vunpack.c.l.b16 %v178
      %v251 = vunpack.c.l.b16 %v179
      %v252 = vunpack.c.l.b16 %v180
      %v253 = vunpack.c.l.b16 %v181
      %v254 = vunpack.c.l.b16 %v182
      %v255 = vunpack.c.l.b16 %v183
      %v256 = vunpack.c.l.b16 %v184
      %v257 = vunpack.c.l.b16 %v185
      %v258 = vunpack.c.l.b16 %v186
      %v259 = vunpack.c.l.b16 %v187
      %v260 = vunpack.c.l.b16 %v188
      %v261 = vunpack.c.l.b16 %v189
      %v262 = vunpack.c.l.b16 %v190
      %v263 = vunpack.c.l.b16 %v191
      %v264 = vunpack.c.l.b16 %v192
      %v265 = vunpack.c.l.b16 %v193
      %v266 = vunpack.c.l.b16 %v194
      %v267 = vunpack.c.l.b16 %v195
      %v268 = vunpack.c.l.b16 %v196
      %v269 = vunpack.c.l.b16 %v197
      %v270 = vunpack.c.l.b16 %v198
      %v271 = vunpack.c.l.b16 %v199
      %v272 = vpack.c.b16 %v247, %v246
      %v273 = vpack.c.b16 %v249, %v248
      %v274 = vpack.c.b16 %v251, %v250
      %v275 = vpack.c.b16 %v253, %v252
      %v276 = vpack.c.b16 %v255, %v254
      %v277 = vpack.c.b16 %v257, %v256
      %v278 = vpack.c.b16 %v259, %v258
      %v279 = vpack.c.b16 %v261, %v260
      %v280 = vpack.c.b16 %v263, %v262
      %v281 = vpack.c.b16 %v265, %v264
      %v282 = vpack.c.b16 %v267, %v266
      %v283 = vpack.c.b16 %v269, %v268
      %v284 = vpack.c.b16 %v271, %v270
      %v314 = vunpack.c.l.b16 %v200
      %v315 = vunpack.c.l.b16 %v201
      %v316 = vunpack.c.l.b16 %v202
      %v317 = vunpack.c.l.b16 %v203
      %v318 = vunpack.c.l.b16 %v204
      %v319 = vunpack.c.l.b16 %v205
      %v320 = vunpack.c.l.b16 %v206
      %v321 = vunpack.c.l.b16 %v207
      %v322 = vunpack.c.l.b16 %v208
      %v323 = vunpack.c.l.b16 %v209
      %v324 = vunpack.c.l.b16 %v210
      %v325 = vunpack.c.l.b16 %v211
      %v326 = vunpack.c.l.b16 %v212
      %v327 = vunpack.c.l.b16 %v213
      %v328 = vunpack.c.l.b16 %v214
      %v329 = vunpack.c.l.b16 %v215
      %v330 = vpack.c.b16 %v315, %v314
      %v331 = vpack.c.b16 %v317, %v316
      %v332 = vpack.c.b16 %v319, %v318
      %v333 = vpack.c.b16 %v321, %v320
      %v334 = vpack.c.b16 %v323, %v322
      %v335 = vpack.c.b16 %v325, %v324
      %v336 = vpack.c.b16 %v327, %v326
      %v337 = vpack.c.b16 %v329, %v328
      %346 = vmatpush.bf16.msra.mxu0 %v337
      %347 = vmatpush.bf16.msra.mxu0 %v336
      %348 = vmatpush.bf16.msra.mxu0 %v335
      %349 = vmatpush.bf16.msra.mxu0 %v334
      %350 = vmatpush.bf16.msra.mxu0 %v333
      %351 = vmatpush.bf16.msra.mxu0 %v332
      %352 = vmatpush.bf16.msra.mxu0 %v331
      %353 = vmatpush.bf16.msra.mxu0 %v330
      %354 = vmatmul.bf16.gmra.mxu0 %v272
      %v355 = vpop.f32.mrf.mxu0
      %v356 = vadd.f32 %v218, %v355
      %v357 = vpop.f32.mrf.mxu0
      %v358 = vadd.f32 %v218, %v357
      %359 = vmatmul.bf16.gmra.mxu0 %v273
      %v360 = vpop.f32.mrf.mxu0
      %v361 = vadd.f32 %v218, %v360
      %v362 = vpop.f32.mrf.mxu0
      %v363 = vadd.f32 %v218, %v362
      %364 = vmatmul.bf16.gmra.mxu0 %v274
      %v365 = vpop.f32.mrf.mxu0
      %v366 = vadd.f32 %v218, %v365
      %v367 = vpop.f32.mrf.mxu0
      %v368 = vadd.f32 %v218, %v367
      %369 = vmatmul.bf16.gmra.mxu0 %v275
      %v370 = vpop.f32.mrf.mxu0
      %v371 = vadd.f32 %v218, %v370
      %v372 = vpop.f32.mrf.mxu0
      %v373 = vadd.f32 %v218, %v372
      %374 = vmatmul.bf16.gmra.mxu0 %v276
      %v375 = vpop.f32.mrf.mxu0
      %v376 = vadd.f32 %v218, %v375
      %v377 = vpop.f32.mrf.mxu0
      %v378 = vadd.f32 %v218, %v377
      %379 = vmatmul.bf16.gmra.mxu0 %v277
      %v380 = vpop.f32.mrf.mxu0
      %v381 = vadd.f32 %v218, %v380
      %v382 = vpop.f32.mrf.mxu0
      %v383 = vadd.f32 %v218, %v382
      %384 = vmatmul.bf16.gmra.mxu0 %v278
      %v385 = vpop.f32.mrf.mxu0
      %v386 = vadd.f32 %v218, %v385
      %v387 = vpop.f32.mrf.mxu0
      %v388 = vadd.f32 %v218, %v387
      %389 = vmatmul.bf16.gmra.mxu0 %v279
      %v390 = vpop.f32.mrf.mxu0
      %v391 = vadd.f32 %v218, %v390
      %v392 = vpop.f32.mrf.mxu0
      %v393 = vadd.f32 %v218, %v392
      %394 = vmatmul.bf16.gmra.mxu0 %v280
      %v395 = vpop.f32.mrf.mxu0
      %v396 = vadd.f32 %v218, %v395
      %v397 = vpop.f32.mrf.mxu0
      %v398 = vadd.f32 %v218, %v397
      %399 = vmatmul.bf16.gmra.mxu0 %v281
      %v400 = vpop.f32.mrf.mxu0
      %v401 = vadd.f32 %v218, %v400
      %v402 = vpop.f32.mrf.mxu0
      %v403 = vadd.f32 %v218, %v402
      %404 = vmatmul.bf16.gmra.mxu0 %v282
      %v405 = vpop.f32.mrf.mxu0
      %v406 = vadd.f32 %v218, %v405
      %v407 = vpop.f32.mrf.mxu0
      %v408 = vadd.f32 %v218, %v407
      %409 = vmatmul.bf16.gmra.mxu0 %v283
      %v410 = vpop.f32.mrf.mxu0
      %v411 = vadd.f32 %v218, %v410
      %v412 = vpop.f32.mrf.mxu0
      %v413 = vadd.f32 %v218, %v412
      %414 = vmatmul.bf16.gmra.mxu0 %v284
      %v415 = vpop.f32.mrf.mxu0
      %v416 = vadd.f32 %v218, %v415
      %v417 = vpop.f32.mrf.mxu0
      %v418 = vadd.f32 %v218, %v417
      %419 = vdwg.mxu0
      %v420 = vxor.u32 %v356, 2147483648
      %v421 = vxor.u32 %v358, 2147483648
      %v422 = vxor.u32 %v361, 2147483648
      %v423 = vxor.u32 %v363, 2147483648
      %v424 = vxor.u32 %v366, 2147483648
      %v425 = vxor.u32 %v368, 2147483648
      %v426 = vxor.u32 %v371, 2147483648
      %v427 = vxor.u32 %v373, 2147483648
      %v428 = vxor.u32 %v376, 2147483648
      %v429 = vxor.u32 %v378, 2147483648
      %v430 = vxor.u32 %v381, 2147483648
      %v431 = vxor.u32 %v383, 2147483648
      %v432 = vxor.u32 %v386, 2147483648
      %v433 = vxor.u32 %v388, 2147483648
      %v434 = vxor.u32 %v391, 2147483648
      %v435 = vxor.u32 %v393, 2147483648
      %v436 = vxor.u32 %v396, 2147483648
      %v437 = vxor.u32 %v398, 2147483648
      %v438 = vxor.u32 %v401, 2147483648
      %v439 = vxor.u32 %v403, 2147483648
      %v440 = vxor.u32 %v406, 2147483648
      %v441 = vxor.u32 %v408, 2147483648
      %v442 = vxor.u32 %v411, 2147483648
      %v443 = vxor.u32 %v413, 2147483648
      %v444 = vxor.u32 %v416, 2147483648
      %v445 = vxor.u32 %v418, 2147483648
      %v446 = vmul.f32 %v420, 1.442695
      %v447 = vpow.pop %v446
      %v448 = vmul.f32 %v421, 1.442695
      %v449 = vpow.pop %v448
      %v450 = vmul.f32 %v422, 1.442695
      %v451 = vpow.pop %v450
      %v452 = vmul.f32 %v423, 1.442695
      %v453 = vpow.pop %v452
      %v454 = vmul.f32 %v424, 1.442695
      %v455 = vpow.pop %v454
      %v456 = vmul.f32 %v425, 1.442695
      %v457 = vpow.pop %v456
      %v458 = vmul.f32 %v426, 1.442695
      %v459 = vpow.pop %v458
      %v460 = vmul.f32 %v427, 1.442695
      %v461 = vpow.pop %v460
      %v462 = vmul.f32 %v428, 1.442695
      %v463 = vpow.pop %v462
      %v464 = vmul.f32 %v429, 1.442695
      %v465 = vpow.pop %v464
      %v466 = vmul.f32 %v430, 1.442695
      %v467 = vpow.pop %v466
      %v468 = vmul.f32 %v431, 1.442695
      %v469 = vpow.pop %v468
      %v470 = vmul.f32 %v432, 1.442695
      %v471 = vpow.pop %v470
      %v472 = vmul.f32 %v433, 1.442695
      %v473 = vpow.pop %v472
      %v474 = vmul.f32 %v434, 1.442695
      %v475 = vpow.pop %v474
      %v476 = vmul.f32 %v435, 1.442695
      %v477 = vpow.pop %v476
      %v478 = vmul.f32 %v436, 1.442695
      %v479 = vpow.pop %v478
      %v480 = vmul.f32 %v437, 1.442695
      %v481 = vpow.pop %v480
      %v482 = vmul.f32 %v438, 1.442695
      %v483 = vpow.pop %v482
      %v484 = vmul.f32 %v439, 1.442695
      %v485 = vpow.pop %v484
      %v486 = vmul.f32 %v440, 1.442695
      %v487 = vpow.pop %v486
      %v488 = vmul.f32 %v441, 1.442695
      %v489 = vpow.pop %v488
      %v490 = vmul.f32 %v442, 1.442695
      %v491 = vpow.pop %v490
      %v492 = vmul.f32 %v443, 1.442695
      %v493 = vpow.pop %v492
      %v494 = vmul.f32 %v444, 1.442695
      %v495 = vpow.pop %v494
      %v496 = vmul.f32 %v445, 1.442695
      %v497 = vpow.pop %v496
      %v498 = vadd.f32 %v447, 1.0
      %v499 = vadd.f32 %v449, 1.0
      %v500 = vadd.f32 %v451, 1.0
      %v501 = vadd.f32 %v453, 1.0
      %v502 = vadd.f32 %v455, 1.0
      %v503 = vadd.f32 %v457, 1.0
      %v504 = vadd.f32 %v459, 1.0
      %v505 = vadd.f32 %v461, 1.0
      %v506 = vadd.f32 %v463, 1.0
      %v507 = vadd.f32 %v465, 1.0
      %v508 = vadd.f32 %v467, 1.0
      %v509 = vadd.f32 %v469, 1.0
      %v510 = vadd.f32 %v471, 1.0
      %v511 = vadd.f32 %v473, 1.0
      %v512 = vadd.f32 %v475, 1.0
      %v513 = vadd.f32 %v477, 1.0
      %v514 = vadd.f32 %v479, 1.0
      %v515 = vadd.f32 %v481, 1.0
      %v516 = vadd.f32 %v483, 1.0
      %v517 = vadd.f32 %v485, 1.0
      %v518 = vadd.f32 %v487, 1.0
      %v519 = vadd.f32 %v489, 1.0
      %v520 = vadd.f32 %v491, 1.0
      %v521 = vadd.f32 %v493, 1.0
      %v522 = vadd.f32 %v495, 1.0
      %v523 = vadd.f32 %v497, 1.0
      %v524 = vrcp.pop %v498
      %v525 = vmul.f32 %v498, %v524
      %v526 = vsub.f32 1.0, %v525
      %v527 = vmul.f32 %v524, %v526
      %v528 = vadd.f32 %v524, %v527
      %vm529 = vweird.f32 %v498
      %vm530 = vweird.f32 %v524
      %vm531 = vmor %vm529, %vm530
      %v532 = vsel %vm531, %v524, %v528
      %v533 = vand.u32 2147483647, %v498
      %vm534 = vcmp.eq.f32.partialorder %v533, 8.507059e+37
      %v535 = vand.u32 %v498, 2147483648
      %v536 = vor.u32 1.1754944e-38, %v535
      %v537 = vsel %vm534, %v536, %v532
      %v538 = vmul.f32 1.0, %v537
      %v539 = vrcp.pop %v499
      %v540 = vmul.f32 %v499, %v539
      %v541 = vsub.f32 1.0, %v540
      %v542 = vmul.f32 %v539, %v541
      %v543 = vadd.f32 %v539, %v542
      %vm544 = vweird.f32 %v499
      %vm545 = vweird.f32 %v539
      %vm546 = vmor %vm544, %vm545
      %v547 = vsel %vm546, %v539, %v543
      %v548 = vand.u32 2147483647, %v499
      %vm549 = vcmp.eq.f32.partialorder %v548, 8.507059e+37
      %v550 = vand.u32 %v499, 2147483648
      %v551 = vor.u32 1.1754944e-38, %v550
      %v552 = vsel %vm549, %v551, %v547
      %v553 = vmul.f32 1.0, %v552
      %v554 = vrcp.pop %v500
      %v555 = vmul.f32 %v500, %v554
      %v556 = vsub.f32 1.0, %v555
      %v557 = vmul.f32 %v554, %v556
      %v558 = vadd.f32 %v554, %v557
      %vm559 = vweird.f32 %v500
      %vm560 = vweird.f32 %v554
      %vm561 = vmor %vm559, %vm560
      %v562 = vsel %vm561, %v554, %v558
      %v563 = vand.u32 2147483647, %v500
      %vm564 = vcmp.eq.f32.partialorder %v563, 8.507059e+37
      %v565 = vand.u32 %v500, 2147483648
      %v566 = vor.u32 1.1754944e-38, %v565
      %v567 = vsel %vm564, %v566, %v562
      %v568 = vmul.f32 1.0, %v567
      %v569 = vrcp.pop %v501
      %v570 = vmul.f32 %v501, %v569
      %v571 = vsub.f32 1.0, %v570
      %v572 = vmul.f32 %v569, %v571
      %v573 = vadd.f32 %v569, %v572
      %vm574 = vweird.f32 %v501
      %vm575 = vweird.f32 %v569
      %vm576 = vmor %vm574, %vm575
      %v577 = vsel %vm576, %v569, %v573
      %v578 = vand.u32 2147483647, %v501
      %vm579 = vcmp.eq.f32.partialorder %v578, 8.507059e+37
      %v580 = vand.u32 %v501, 2147483648
      %v581 = vor.u32 1.1754944e-38, %v580
      %v582 = vsel %vm579, %v581, %v577
      %v583 = vmul.f32 1.0, %v582
      %v584 = vrcp.pop %v502
      %v585 = vmul.f32 %v502, %v584
      %v586 = vsub.f32 1.0, %v585
      %v587 = vmul.f32 %v584, %v586
      %v588 = vadd.f32 %v584, %v587
      %vm589 = vweird.f32 %v502
      %vm590 = vweird.f32 %v584
      %vm591 = vmor %vm589, %vm590
      %v592 = vsel %vm591, %v584, %v588
      %v593 = vand.u32 2147483647, %v502
      %vm594 = vcmp.eq.f32.partialorder %v593, 8.507059e+37
      %v595 = vand.u32 %v502, 2147483648
      %v596 = vor.u32 1.1754944e-38, %v595
      %v597 = vsel %vm594, %v596, %v592
      %v598 = vmul.f32 1.0, %v597
      %v599 = vrcp.pop %v503
      %v600 = vmul.f32 %v503, %v599
      %v601 = vsub.f32 1.0, %v600
      %v602 = vmul.f32 %v599, %v601
      %v603 = vadd.f32 %v599, %v602
      %vm604 = vweird.f32 %v503
      %vm605 = vweird.f32 %v599
      %vm606 = vmor %vm604, %vm605
      %v607 = vsel %vm606, %v599, %v603
      %v608 = vand.u32 2147483647, %v503
      %vm609 = vcmp.eq.f32.partialorder %v608, 8.507059e+37
      %v610 = vand.u32 %v503, 2147483648
      %v611 = vor.u32 1.1754944e-38, %v610
      %v612 = vsel %vm609, %v611, %v607
      %v613 = vmul.f32 1.0, %v612
      %v614 = vrcp.pop %v504
      %v615 = vmul.f32 %v504, %v614
      %v616 = vsub.f32 1.0, %v615
      %v617 = vmul.f32 %v614, %v616
      %v618 = vadd.f32 %v614, %v617
      %vm619 = vweird.f32 %v504
      %vm620 = vweird.f32 %v614
      %vm621 = vmor %vm619, %vm620
      %v622 = vsel %vm621, %v614, %v618
      %v623 = vand.u32 2147483647, %v504
      %vm624 = vcmp.eq.f32.partialorder %v623, 8.507059e+37
      %v625 = vand.u32 %v504, 2147483648
      %v626 = vor.u32 1.1754944e-38, %v625
      %v627 = vsel %vm624, %v626, %v622
      %v628 = vmul.f32 1.0, %v627
      %v629 = vrcp.pop %v505
      %v630 = vmul.f32 %v505, %v629
      %v631 = vsub.f32 1.0, %v630
      %v632 = vmul.f32 %v629, %v631
      %v633 = vadd.f32 %v629, %v632
      %vm634 = vweird.f32 %v505
      %vm635 = vweird.f32 %v629
      %vm636 = vmor %vm634, %vm635
      %v637 = vsel %vm636, %v629, %v633
      %v638 = vand.u32 2147483647, %v505
      %vm639 = vcmp.eq.f32.partialorder %v638, 8.507059e+37
      %v640 = vand.u32 %v505, 2147483648
      %v641 = vor.u32 1.1754944e-38, %v640
      %v642 = vsel %vm639, %v641, %v637
      %v643 = vmul.f32 1.0, %v642
      %v644 = vrcp.pop %v506
      %v645 = vmul.f32 %v506, %v644
      %v646 = vsub.f32 1.0, %v645
      %v647 = vmul.f32 %v644, %v646
      %v648 = vadd.f32 %v644, %v647
      %vm649 = vweird.f32 %v506
      %vm650 = vweird.f32 %v644
      %vm651 = vmor %vm649, %vm650
      %v652 = vsel %vm651, %v644, %v648
      %v653 = vand.u32 2147483647, %v506
      %vm654 = vcmp.eq.f32.partialorder %v653, 8.507059e+37
      %v655 = vand.u32 %v506, 2147483648
      %v656 = vor.u32 1.1754944e-38, %v655
      %v657 = vsel %vm654, %v656, %v652
      %v658 = vmul.f32 1.0, %v657
      %v659 = vrcp.pop %v507
      %v660 = vmul.f32 %v507, %v659
      %v661 = vsub.f32 1.0, %v660
      %v662 = vmul.f32 %v659, %v661
      %v663 = vadd.f32 %v659, %v662
      %vm664 = vweird.f32 %v507
      %vm665 = vweird.f32 %v659
      %vm666 = vmor %vm664, %vm665
      %v667 = vsel %vm666, %v659, %v663
      %v668 = vand.u32 2147483647, %v507
      %vm669 = vcmp.eq.f32.partialorder %v668, 8.507059e+37
      %v670 = vand.u32 %v507, 2147483648
      %v671 = vor.u32 1.1754944e-38, %v670
      %v672 = vsel %vm669, %v671, %v667
      %v673 = vmul.f32 1.0, %v672
      %v674 = vrcp.pop %v508
      %v675 = vmul.f32 %v508, %v674
      %v676 = vsub.f32 1.0, %v675
      %v677 = vmul.f32 %v674, %v676
      %v678 = vadd.f32 %v674, %v677
      %vm679 = vweird.f32 %v508
      %vm680 = vweird.f32 %v674
      %vm681 = vmor %vm679, %vm680
      %v682 = vsel %vm681, %v674, %v678
      %v683 = vand.u32 2147483647, %v508
      %vm684 = vcmp.eq.f32.partialorder %v683, 8.507059e+37
      %v685 = vand.u32 %v508, 2147483648
      %v686 = vor.u32 1.1754944e-38, %v685
      %v687 = vsel %vm684, %v686, %v682
      %v688 = vmul.f32 1.0, %v687
      %v689 = vrcp.pop %v509
      %v690 = vmul.f32 %v509, %v689
      %v691 = vsub.f32 1.0, %v690
      %v692 = vmul.f32 %v689, %v691
      %v693 = vadd.f32 %v689, %v692
      %vm694 = vweird.f32 %v509
      %vm695 = vweird.f32 %v689
      %vm696 = vmor %vm694, %vm695
      %v697 = vsel %vm696, %v689, %v693
      %v698 = vand.u32 2147483647, %v509
      %vm699 = vcmp.eq.f32.partialorder %v698, 8.507059e+37
      %v700 = vand.u32 %v509, 2147483648
      %v701 = vor.u32 1.1754944e-38, %v700
      %v702 = vsel %vm699, %v701, %v697
      %v703 = vmul.f32 1.0, %v702
      %v704 = vrcp.pop %v510
      %v705 = vmul.f32 %v510, %v704
      %v706 = vsub.f32 1.0, %v705
      %v707 = vmul.f32 %v704, %v706
      %v708 = vadd.f32 %v704, %v707
      %vm709 = vweird.f32 %v510
      %vm710 = vweird.f32 %v704
      %vm711 = vmor %vm709, %vm710
      %v712 = vsel %vm711, %v704, %v708
      %v713 = vand.u32 2147483647, %v510
      %vm714 = vcmp.eq.f32.partialorder %v713, 8.507059e+37
      %v715 = vand.u32 %v510, 2147483648
      %v716 = vor.u32 1.1754944e-38, %v715
      %v717 = vsel %vm714, %v716, %v712
      %v718 = vmul.f32 1.0, %v717
      %v719 = vrcp.pop %v511
      %v720 = vmul.f32 %v511, %v719
      %v721 = vsub.f32 1.0, %v720
      %v722 = vmul.f32 %v719, %v721
      %v723 = vadd.f32 %v719, %v722
      %vm724 = vweird.f32 %v511
      %vm725 = vweird.f32 %v719
      %vm726 = vmor %vm724, %vm725
      %v727 = vsel %vm726, %v719, %v723
      %v728 = vand.u32 2147483647, %v511
      %vm729 = vcmp.eq.f32.partialorder %v728, 8.507059e+37
      %v730 = vand.u32 %v511, 2147483648
      %v731 = vor.u32 1.1754944e-38, %v730
      %v732 = vsel %vm729, %v731, %v727
      %v733 = vmul.f32 1.0, %v732
      %v734 = vrcp.pop %v512
      %v735 = vmul.f32 %v512, %v734
      %v736 = vsub.f32 1.0, %v735
      %v737 = vmul.f32 %v734, %v736
      %v738 = vadd.f32 %v734, %v737
      %vm739 = vweird.f32 %v512
      %vm740 = vweird.f32 %v734
      %vm741 = vmor %vm739, %vm740
      %v742 = vsel %vm741, %v734, %v738
      %v743 = vand.u32 2147483647, %v512
      %vm744 = vcmp.eq.f32.partialorder %v743, 8.507059e+37
      %v745 = vand.u32 %v512, 2147483648
      %v746 = vor.u32 1.1754944e-38, %v745
      %v747 = vsel %vm744, %v746, %v742
      %v748 = vmul.f32 1.0, %v747
      %v749 = vrcp.pop %v513
      %v750 = vmul.f32 %v513, %v749
      %v751 = vsub.f32 1.0, %v750
      %v752 = vmul.f32 %v749, %v751
      %v753 = vadd.f32 %v749, %v752
      %vm754 = vweird.f32 %v513
      %vm755 = vweird.f32 %v749
      %vm756 = vmor %vm754, %vm755
      %v757 = vsel %vm756, %v749, %v753
      %v758 = vand.u32 2147483647, %v513
      %vm759 = vcmp.eq.f32.partialorder %v758, 8.507059e+37
      %v760 = vand.u32 %v513, 2147483648
      %v761 = vor.u32 1.1754944e-38, %v760
      %v762 = vsel %vm759, %v761, %v757
      %v763 = vmul.f32 1.0, %v762
      %v764 = vrcp.pop %v514
      %v765 = vmul.f32 %v514, %v764
      %v766 = vsub.f32 1.0, %v765
      %v767 = vmul.f32 %v764, %v766
      %v768 = vadd.f32 %v764, %v767
      %vm769 = vweird.f32 %v514
      %vm770 = vweird.f32 %v764
      %vm771 = vmor %vm769, %vm770
      %v772 = vsel %vm771, %v764, %v768
      %v773 = vand.u32 2147483647, %v514
      %vm774 = vcmp.eq.f32.partialorder %v773, 8.507059e+37
      %v775 = vand.u32 %v514, 2147483648
      %v776 = vor.u32 1.1754944e-38, %v775
      %v777 = vsel %vm774, %v776, %v772
      %v778 = vmul.f32 1.0, %v777
      %v779 = vrcp.pop %v515
      %v780 = vmul.f32 %v515, %v779
      %v781 = vsub.f32 1.0, %v780
      %v782 = vmul.f32 %v779, %v781
      %v783 = vadd.f32 %v779, %v782
      %vm784 = vweird.f32 %v515
      %vm785 = vweird.f32 %v779
      %vm786 = vmor %vm784, %vm785
      %v787 = vsel %vm786, %v779, %v783
      %v788 = vand.u32 2147483647, %v515
      %vm789 = vcmp.eq.f32.partialorder %v788, 8.507059e+37
      %v790 = vand.u32 %v515, 2147483648
      %v791 = vor.u32 1.1754944e-38, %v790
      %v792 = vsel %vm789, %v791, %v787
      %v793 = vmul.f32 1.0, %v792
      %v794 = vrcp.pop %v516
      %v795 = vmul.f32 %v516, %v794
      %v796 = vsub.f32 1.0, %v795
      %v797 = vmul.f32 %v794, %v796
      %v798 = vadd.f32 %v794, %v797
      %vm799 = vweird.f32 %v516
      %vm800 = vweird.f32 %v794
      %vm801 = vmor %vm799, %vm800
      %v802 = vsel %vm801, %v794, %v798
      %v803 = vand.u32 2147483647, %v516
      %vm804 = vcmp.eq.f32.partialorder %v803, 8.507059e+37
      %v805 = vand.u32 %v516, 2147483648
      %v806 = vor.u32 1.1754944e-38, %v805
      %v807 = vsel %vm804, %v806, %v802
      %v808 = vmul.f32 1.0, %v807
      %v809 = vrcp.pop %v517
      %v810 = vmul.f32 %v517, %v809
      %v811 = vsub.f32 1.0, %v810
      %v812 = vmul.f32 %v809, %v811
      %v813 = vadd.f32 %v809, %v812
      %vm814 = vweird.f32 %v517
      %vm815 = vweird.f32 %v809
      %vm816 = vmor %vm814, %vm815
      %v817 = vsel %vm816, %v809, %v813
      %v818 = vand.u32 2147483647, %v517
      %vm819 = vcmp.eq.f32.partialorder %v818, 8.507059e+37
      %v820 = vand.u32 %v517, 2147483648
      %v821 = vor.u32 1.1754944e-38, %v820
      %v822 = vsel %vm819, %v821, %v817
      %v823 = vmul.f32 1.0, %v822
      %v824 = vrcp.pop %v518
      %v825 = vmul.f32 %v518, %v824
      %v826 = vsub.f32 1.0, %v825
      %v827 = vmul.f32 %v824, %v826
      %v828 = vadd.f32 %v824, %v827
      %vm829 = vweird.f32 %v518
      %vm830 = vweird.f32 %v824
      %vm831 = vmor %vm829, %vm830
      %v832 = vsel %vm831, %v824, %v828
      %v833 = vand.u32 2147483647, %v518
      %vm834 = vcmp.eq.f32.partialorder %v833, 8.507059e+37
      %v835 = vand.u32 %v518, 2147483648
      %v836 = vor.u32 1.1754944e-38, %v835
      %v837 = vsel %vm834, %v836, %v832
      %v838 = vmul.f32 1.0, %v837
      %v839 = vrcp.pop %v519
      %v840 = vmul.f32 %v519, %v839
      %v841 = vsub.f32 1.0, %v840
      %v842 = vmul.f32 %v839, %v841
      %v843 = vadd.f32 %v839, %v842
      %vm844 = vweird.f32 %v519
      %vm845 = vweird.f32 %v839
      %vm846 = vmor %vm844, %vm845
      %v847 = vsel %vm846, %v839, %v843
      %v848 = vand.u32 2147483647, %v519
      %vm849 = vcmp.eq.f32.partialorder %v848, 8.507059e+37
      %v850 = vand.u32 %v519, 2147483648
      %v851 = vor.u32 1.1754944e-38, %v850
      %v852 = vsel %vm849, %v851, %v847
      %v853 = vmul.f32 1.0, %v852
      %v854 = vrcp.pop %v520
      %v855 = vmul.f32 %v520, %v854
      %v856 = vsub.f32 1.0, %v855
      %v857 = vmul.f32 %v854, %v856
      %v858 = vadd.f32 %v854, %v857
      %vm859 = vweird.f32 %v520
      %vm860 = vweird.f32 %v854
      %vm861 = vmor %vm859, %vm860
      %v862 = vsel %vm861, %v854, %v858
      %v863 = vand.u32 2147483647, %v520
      %vm864 = vcmp.eq.f32.partialorder %v863, 8.507059e+37
      %v865 = vand.u32 %v520, 2147483648
      %v866 = vor.u32 1.1754944e-38, %v865
      %v867 = vsel %vm864, %v866, %v862
      %v868 = vmul.f32 1.0, %v867
      %v869 = vrcp.pop %v521
      %v870 = vmul.f32 %v521, %v869
      %v871 = vsub.f32 1.0, %v870
      %v872 = vmul.f32 %v869, %v871
      %v873 = vadd.f32 %v869, %v872
      %vm874 = vweird.f32 %v521
      %vm875 = vweird.f32 %v869
      %vm876 = vmor %vm874, %vm875
      %v877 = vsel %vm876, %v869, %v873
      %v878 = vand.u32 2147483647, %v521
      %vm879 = vcmp.eq.f32.partialorder %v878, 8.507059e+37
      %v880 = vand.u32 %v521, 2147483648
      %v881 = vor.u32 1.1754944e-38, %v880
      %v882 = vsel %vm879, %v881, %v877
      %v883 = vmul.f32 1.0, %v882
      %v884 = vrcp.pop %v522
      %v885 = vmul.f32 %v522, %v884
      %v886 = vsub.f32 1.0, %v885
      %v887 = vmul.f32 %v884, %v886
      %v888 = vadd.f32 %v884, %v887
      %vm889 = vweird.f32 %v522
      %vm890 = vweird.f32 %v884
      %vm891 = vmor %vm889, %vm890
      %v892 = vsel %vm891, %v884, %v888
      %v893 = vand.u32 2147483647, %v522
      %vm894 = vcmp.eq.f32.partialorder %v893, 8.507059e+37
      %v895 = vand.u32 %v522, 2147483648
      %v896 = vor.u32 1.1754944e-38, %v895
      %v897 = vsel %vm894, %v896, %v892
      %v898 = vmul.f32 1.0, %v897
      %v899 = vrcp.pop %v523
      %v900 = vmul.f32 %v523, %v899
      %v901 = vsub.f32 1.0, %v900
      %v902 = vmul.f32 %v899, %v901
      %v903 = vadd.f32 %v899, %v902
      %vm904 = vweird.f32 %v523
      %vm905 = vweird.f32 %v899
      %vm906 = vmor %vm904, %vm905
      %v907 = vsel %vm906, %v899, %v903
      %v908 = vand.u32 2147483647, %v523
      %vm909 = vcmp.eq.f32.partialorder %v908, 8.507059e+37
      %v910 = vand.u32 %v523, 2147483648
      %v911 = vor.u32 1.1754944e-38, %v910
      %v912 = vsel %vm909, %v911, %v907
      %v913 = vmul.f32 1.0, %v912
      %914 = vst [vmem:[%s172] sm:$0xff] %v538
      %915 = vst [vmem:[%s172 + $0x8] sm:$0xff] %v553
      %916 = vst [vmem:[%s172 + $0x10] sm:$0xff] %v568
      %917 = vst [vmem:[%s172 + $0x18] sm:$0xff] %v583
      %918 = vst [vmem:[%s172 + $0x20] sm:$0xff] %v598
      %919 = vst [vmem:[%s172 + $0x28] sm:$0xff] %v613
      %920 = vst [vmem:[%s172 + $0x30] sm:$0xff] %v628
      %921 = vst [vmem:[%s172 + $0x38] sm:$0xff] %v643
      %922 = vst [vmem:[%s172 + $0x40] sm:$0xff] %v658
      %923 = vst [vmem:[%s172 + $0x48] sm:$0xff] %v673
      %924 = vst [vmem:[%s172 + $0x50] sm:$0xff] %v688
      %925 = vst [vmem:[%s172 + $0x58] sm:$0xff] %v703
      %926 = vst [vmem:[%s172 + $0x60] sm:$0xff] %v718
      %927 = vst [vmem:[%s172 + $0x68] sm:$0xff] %v733
      %928 = vst [vmem:[%s172 + $0x70] sm:$0xff] %v748
      %929 = vst [vmem:[%s172 + $0x78] sm:$0xff] %v763
      %930 = vst [vmem:[%s172 + $0x80] sm:$0xff] %v778
      %931 = vst [vmem:[%s172 + $0x88] sm:$0xff] %v793
      %932 = vst [vmem:[%s172 + $0x90] sm:$0xff] %v808
      %933 = vst [vmem:[%s172 + $0x98] sm:$0xff] %v823
      %934 = vst [vmem:[%s172 + $0xa0] sm:$0xff] %v838
      %935 = vst [vmem:[%s172 + $0xa8] sm:$0xff] %v853
      %936 = vst [vmem:[%s172 + $0xb0] sm:$0xff] %v868
      %937 = vst [vmem:[%s172 + $0xb8] sm:$0xff] %v883
      %938 = vst [vmem:[%s172 + $0xc0] sm:$0xff] %v898
      %939 = vst [vmem:[%s172 + $0xc8] sm:$0xff] %v913
      %s940 = smul.u32 26, %s14
      %p941 = scmp.lt.s32.totalorder %s940, 77
      %s942 = scalar_select %p941, %s940, 77
      %s943 = smul.addr %s942, 8
      %s944 = scalar_lea.vmem %s3, %s943
      // Predicated region
      $region33: #{vae_forward.13} parent=31 // pred_check
        %p945 = pneg %p100
      $region34: #{vae_forward.13} parent=31 // pred_check_branch
        %947 = sbr.rel (%p945) target = $region36
      $region35: #{vae_forward.13} parent=31 // pred_region
        %s948 = smul.u32 26, %s14
      $region36: #{vae_forward.13} parent=31 // pred_fallthru
        _
    $region32: #{vae_forward.13} parent=5 // pred_fallthru
      _
    %p949 = scmp.le.s32.totalorder 2, %s9
    // Predicated region
    $region37: #{vae_forward.13} parent=5 // pred_check
      %p950 = pneg %p949
    $region38: #{vae_forward.13} parent=5 // pred_check_branch
      %952 = sbr.rel (%p950) target = $region40
    $region39: #{vae_forward.13} parent=5 // pred_region
      %s953 = ssub.s32 %s9, 2
      // Predicated region
      $region41: #{vae_forward.13} parent=39 // pred_check
        %p954 = pneg %p106
      $region42: #{vae_forward.13} parent=39 // pred_check_branch
        %956 = sbr.rel (%p954) target = $region44
      $region43: #{vae_forward.13} parent=39 // pred_region
        %s957 = smul.u32 26, %s15
        %p958 = scmp.lt.s32.totalorder %s957, 77
        %s959 = scalar_select %p958, %s957, 77
        %s960 = smul.addr %s959, 8
        %s961 = scalar_lea.vmem %s3, %s960
      $region44: #{vae_forward.13} parent=39 // pred_fallthru
        _
    $region40: #{vae_forward.13} parent=5 // pred_fallthru
      _
  $region6: #{vae_forward.13} parent=0 // loop_footer
    %s13 = sadd.s32 1, %s9
  $region7: #{vae_forward.13} parent=0 // loop_footer_branch
    %8 = sbr.rel target = $region3
  $region8: #{vae_forward.13} parent=0 // loop_exit
    _

</llo_original>
